<compile_context>
chip_gen: v5e
topology: v5e:2x2
jax: 0.10.0
libtpu: 0.0.40
codegen_flags: <defaults>
</compile_context>

<pallas_src>
import functools

import jax
import jax.numpy as jnp
from jax.experimental import pallas as pl
from jax.experimental.pallas import tpu as pltpu


def _round_up(x, m):
    return (x + m - 1) // m * m


# ----------------------------------------------------------------------------
# Fixed geometry implied by the PyTorch module (input 4 x 64 x 80 -> fc1 in 1536).
# ----------------------------------------------------------------------------
_H_IN, _W_IN, _C_IN = 64, 80, 4
_K1, _S1, _C1 = 8, 4, 32           # conv1: 4 -> 32, k=8, s=4
_K2, _S2, _C2 = 4, 2, 64           # conv2: 32 -> 64, k=4, s=2
_K3, _S3, _C3 = 3, 1, 64           # conv3: 64 -> 64, k=3, s=1
_HU, _WU = 14, 18                  # conv1 output positions actually used by conv2
_HH, _WW = 7, 9                    # per parity-quadrant grid (_HU/2, _WU/2)
_H2, _W2 = 6, 8                    # conv2 output grid
_H3, _W3 = 4, 6                    # conv3 output grid
_P3 = _H3 * _W3                    # 24 spatial positions feeding fc1
_FC1_IN, _FC1_OUT = _C3 * _P3, 32  # 1536 -> 32
_PATCH_K = _K1 * _K1 * _C_IN       # 256 conv1 patch width
_QROWS = _HH * _WW                 # 63 rows per quadrant per sample
_NPOS1 = 4 * _QROWS                # 252 de-duplicated conv1 rows per sample


# ----------------------------------------------------------------------------
# Single fused kernel: conv1+conv2+conv3+fc1+fc2, all intermediates in VMEM.
# ----------------------------------------------------------------------------
def _dqn_fused_kernel(p_ref, w1_ref, b1_ref, w2_ref, b2_ref, w3_ref, b3_ref,
                      wf1_ref, bf1_ref, wf2_ref, bf2_ref, o_ref,
                      y1_ref, x2_ref, y2_ref, x3_ref, y3_ref, f1_ref, *, batch):
    n = batch

    # conv1: ONE (252n, 256) x (256, 32) matmul over the de-duplicated patches.
    y1 = jnp.dot(p_ref[...], w1_ref[...], preferred_element_type=jnp.float32)
    y1_ref[...] = jnp.maximum(y1 + b1_ref[...], 0.0)

    # conv2: pack the 16 taps lane-wise into a (48n, 512) slab with contiguous
    # VMEM slice copies, then ONE deep matmul (K=512).
    for ki2 in range(_K2):
        for kj2 in range(_K2):
            t2 = ki2 * _K2 + kj2
            q = (ki2 % 2) * 2 + (kj2 % 2)          # parity quadrant of this tap
            oh, ow = ki2 // 2, kj2 // 2            # window offset in quadrant
            for h2 in range(_H2):
                src = (q * _QROWS + (oh + h2) * _WW + ow) * n
                dst = h2 * _W2 * n
                x2_ref[dst:dst + _W2 * n, _C1 * t2:_C1 * (t2 + 1)] = (
                    y1_ref[src:src + _W2 * n, :])
    y2 = jnp.dot(x2_ref[...].astype(jnp.bfloat16), w2_ref[...],
                 preferred_element_type=jnp.float32)
    y2_ref[...] = jnp.maximum(y2 + b2_ref[...], 0.0)     # rows (h2, w2, n)

    # conv3: pack the 9 taps into a (24n, 576) slab, ONE deep matmul (K=576).
    for ki3 in range(_K3):
        for kj3 in range(_K3):
            t3 = ki3 * _K3 + kj3
            for h3 in range(_H3):
                src = ((h3 + ki3) * _W2 + kj3) * n
                dst = h3 * _W3 * n
                x3_ref[dst:dst + _W3 * n, _C2 * t3:_C2 * (t3 + 1)] = (
                    y2_ref[src:src + _W3 * n, :])
    y3 = jnp.dot(x3_ref[...].astype(jnp.bfloat16), w3_ref[...],
                 preferred_element_type=jnp.float32)
    y3_ref[...] = jnp.maximum(y3 + b3_ref[...], 0.0)     # rows (h3, w3, n)

    # fc1: regroup y3 into an (n, 1536) slab (column block per spatial position,
    # matching the pre-regrouped wf1) and contract in ONE K=1536 matmul.
    for p in range(_P3):
        f1_ref[:, _C3 * p:_C3 * (p + 1)] = y3_ref[p * n:(p + 1) * n, :]
    h = jnp.maximum(
        jnp.dot(f1_ref[...], wf1_ref[...], preferred_element_type=jnp.float32)
        + bf1_ref[...], 0.0)

    # fc2 -> single lane-dense store of the full output block.
    qv = jnp.dot(h, wf2_ref[...], preferred_element_type=jnp.float32) + bf2_ref[...]
    o_ref[...] = qv


# ----------------------------------------------------------------------------
# Wrapper-side preprocessing: de-duplicated conv1 im2col in parity-quadrant
# row order (q, hh, ww, n).  ~129 KB/sample bf16 -- no 12x expansion in HBM.
# ----------------------------------------------------------------------------
def _build_patches(x_nhwc):
    n = x_nhwc.shape[0]
    cols = []
    for kh in range(_K1):
        for kw in range(_K1):
            cols.append(x_nhwc[:, kh:kh + _S1 * (_HU - 1) + 1:_S1,
                               kw:kw + _S1 * (_WU - 1) + 1:_S1, :])
    pnat = jnp.concatenate(cols, axis=-1)                 # (N, 14, 18, 256)
    blocks = [pnat[:, a::2, b::2, :] for a in range(2) for b in range(2)]
    e = jnp.stack(blocks, axis=0)                         # (4, N, 7, 9, 256)
    e = jnp.transpose(e, (0, 2, 3, 1, 4))                 # (4, 7, 9, N, 256)
    return e.reshape(_NPOS1 * n, _PATCH_K)


# ----------------------------------------------------------------------------
# One-time (init) weight re-layout: PyTorch layout -> kernel layout.
# ----------------------------------------------------------------------------
def prepare_params(raw):
    na = raw["wf2"].shape[0]
    na_pad = _round_up(max(na, 1), 128)

    w1 = jnp.transpose(raw["w1"], (2, 3, 1, 0)).reshape(_PATCH_K, _C1)
    w2 = jnp.transpose(raw["w2"], (2, 3, 1, 0)).reshape(_K2 * _K2 * _C1, _C2)
    w3 = jnp.transpose(raw["w3"], (2, 3, 1, 0)).reshape(_K3 * _K3 * _C2, _C3)
    # fc1: PyTorch flattens conv3 output in (c, h, w) order; regroup columns
    # to per-position (p, c) blocks to match the kernel's (h3, w3, c) flatten.
    wf1 = jnp.transpose(raw["wf1"].reshape(_FC1_OUT, _C3, _P3), (2, 1, 0))
    wf1 = wf1.reshape(_P3 * _C3, _FC1_OUT)
    wf2 = jnp.zeros((_FC1_OUT, na_pad), jnp.float32).at[:, :na].set(
        raw["wf2"].T.astype(jnp.float32))
    bf2 = jnp.zeros((1, na_pad), jnp.float32).at[0, :na].set(
        raw["bf2"].astype(jnp.float32))

    return {
        "w1": w1.astype(jnp.bfloat16),
        "b1": raw["b1"].reshape(1, _C1).astype(jnp.float32),
        "w2": w2.astype(jnp.bfloat16),
        "b2": raw["b2"].reshape(1, _C2).astype(jnp.float32),
        "w3": w3.astype(jnp.bfloat16),
        "b3": raw["b3"].reshape(1, _C3).astype(jnp.float32),
        "wf1": wf1.astype(jnp.float32),
        "bf1": raw["bf1"].reshape(1, _FC1_OUT).astype(jnp.float32),
        "wf2": wf2,
        "bf2": bf2,
    }


# ----------------------------------------------------------------------------
# Forward pass: one pallas_call for the entire network.
# ----------------------------------------------------------------------------
@functools.partial(jax.jit, static_argnames=("n_actions",))
def dqn_forward(x_nchw, params, *, n_actions=4):
    n, c, hh, ww = x_nchw.shape
    if (c, hh, ww) != (_C_IN, _H_IN, _W_IN):
        raise ValueError(
            f"dqn_forward expects input (N, {_C_IN}, {_H_IN}, {_W_IN}); "
            f"got {x_nchw.shape}")
    x = jnp.transpose(x_nchw, (0, 2, 3, 1)).astype(jnp.bfloat16)   # NCHW -> NHWC
    patches = _build_patches(x)                                    # (252*N, 256) bf16
    na_pad = params["wf2"].shape[1]

    args = (patches, params["w1"], params["b1"], params["w2"], params["b2"],
            params["w3"], params["b3"], params["wf1"], params["bf1"],
            params["wf2"], params["bf2"])

    zero2 = lambda i: (0, 0)
    in_specs = [pl.BlockSpec(a.shape, zero2) for a in args]

    flops = 2 * (_NPOS1 * n * _PATCH_K * _C1          # conv1 (once, dedup'd)
                 + _H2 * _W2 * n * (_K2 * _K2 * _C1) * _C2   # conv2 fused
                 + _P3 * n * (_K3 * _K3 * _C2) * _C3         # conv3 fused
                 + n * _FC1_IN * _FC1_OUT                    # fc1
                 + n * _FC1_OUT * na_pad)                    # fc2
    bytes_accessed = (sum(int(a.size) * a.dtype.itemsize for a in args)
                      + n * na_pad * 4)

    out = pl.pallas_call(
        functools.partial(_dqn_fused_kernel, batch=n),
        out_shape=jax.ShapeDtypeStruct((n, na_pad), jnp.float32),
        grid=(1,),
        in_specs=in_specs,
        out_specs=pl.BlockSpec((n, na_pad), zero2),
        scratch_shapes=[
            pltpu.VMEM((_NPOS1 * n, _C1), jnp.float32),           # y1 (relu conv1)
            pltpu.VMEM((_H2 * _W2 * n, _K2 * _K2 * _C1), jnp.float32),  # X2 packed
            pltpu.VMEM((_H2 * _W2 * n, _C2), jnp.float32),        # y2 (relu conv2)
            pltpu.VMEM((_P3 * n, _K3 * _K3 * _C2), jnp.float32),  # X3 packed
            pltpu.VMEM((_P3 * n, _C3), jnp.float32),              # y3 (relu conv3)
            pltpu.VMEM((n, _FC1_IN), jnp.float32),                # fc1 input slab
        ],
        compiler_params=pltpu.CompilerParams(
            dimension_semantics=("arbitrary",),
            vmem_limit_bytes=32 * 1024 * 1024),
        cost_estimate=pl.CostEstimate(flops=int(flops), transcendentals=0,
                                      bytes_accessed=int(bytes_accessed)),
    )(*args)
    return out[:, :n_actions]


# ----------------------------------------------------------------------------
# Deterministic PyTorch-default-style parameter init (PyTorch layouts).
# ----------------------------------------------------------------------------
def init_dqn_params(key, n_actions=4):
    def uniform(key, shape, fan_in):
        bound = 1.0 / jnp.sqrt(jnp.float32(fan_in))
        return jax.random.uniform(key, shape, jnp.float32, -bound, bound)

    keys = jax.random.split(key, 10)
    p = {}
    p["w1"] = uniform(keys[0], (32, 4, 8, 8), 4 * 8 * 8)
    p["b1"] = uniform(keys[1], (32,), 4 * 8 * 8)
    p["w2"] = uniform(keys[2], (64, 32, 4, 4), 32 * 4 * 4)
    p["b2"] = uniform(keys[3], (64,), 32 * 4 * 4)
    p["w3"] = uniform(keys[4], (64, 64, 3, 3), 64 * 3 * 3)
    p["b3"] = uniform(keys[5], (64,), 64 * 3 * 3)
    p["wf1"] = uniform(keys[6], (32, 1536), 1536)    # PyTorch (out, in)
    p["bf1"] = uniform(keys[7], (32,), 1536)
    p["wf2"] = uniform(keys[8], (n_actions, 32), 32)
    p["bf2"] = uniform(keys[9], (n_actions,), 32)
    return p


# Pure-JAX reference (PyTorch semantics) for validation only.
def _reference_forward(x_nchw, raw):
    dn = ("NCHW", "OIHW", "NCHW")
    y = jax.lax.conv_general_dilated(x_nchw, raw["w1"], (4, 4), "VALID",
                                     dimension_numbers=dn)
    y = jax.nn.relu(y + raw["b1"][None, :, None, None])
    y = jax.lax.conv_general_dilated(y, raw["w2"], (2, 2), "VALID",
                                     dimension_numbers=dn)
    y = jax.nn.relu(y + raw["b2"][None, :, None, None])
    y = jax.lax.conv_general_dilated(y, raw["w3"], (1, 1), "VALID",
                                     dimension_numbers=dn)
    y = jax.nn.relu(y + raw["b3"][None, :, None, None])
    v = y.reshape(y.shape[0], -1)                     # NCHW flatten, like torch
    h = jax.nn.relu(v @ raw["wf1"].T + raw["bf1"])
    return h @ raw["wf2"].T + raw["bf2"]


if __name__ == "__main__":
    key = jax.random.PRNGKey(0)
    pkey, xkey = jax.random.split(key)

    raw_params = init_dqn_params(pkey, n_actions=4)
    params = prepare_params(raw_params)               # one-time weight repack

    # batch=2, 4 stacked frames, 64x80 spatial -> flattened conv feature = 1536.
    x = jax.random.normal(xkey, (2, 4, 64, 80), dtype=jnp.float32)

    q_values = dqn_forward(x, params, n_actions=4)
    jax.block_until_ready(q_values)

    assert q_values.shape == (2, 4), q_values.shape
    assert q_values.dtype == jnp.float32

    # Validate against the pure-JAX reference (bf16 conv matmuls -> loose tol).
    q_ref = _reference_forward(x, raw_params)
    err = float(jnp.max(jnp.abs(q_values - q_ref)))
    assert err < 5e-2, f"max abs error vs reference too large: {err}"

    print("KERNEL_OK")
</pallas_src>

<mosaic_0001>
module attributes {stable_mosaic.version = 11 : i64} {
  func.func @_dqn_fused_kernel(%arg0: i32, %arg1: memref<504x256xbf16, #tpu.memory_space<vmem>>, %arg2: memref<256x32xbf16, #tpu.memory_space<vmem>>, %arg3: memref<1x32xf32, #tpu.memory_space<vmem>>, %arg4: memref<512x64xbf16, #tpu.memory_space<vmem>>, %arg5: memref<1x64xf32, #tpu.memory_space<vmem>>, %arg6: memref<576x64xbf16, #tpu.memory_space<vmem>>, %arg7: memref<1x64xf32, #tpu.memory_space<vmem>>, %arg8: memref<1536x32xf32, #tpu.memory_space<vmem>>, %arg9: memref<1x32xf32, #tpu.memory_space<vmem>>, %arg10: memref<32x128xf32, #tpu.memory_space<vmem>>, %arg11: memref<1x128xf32, #tpu.memory_space<vmem>>, %arg12: memref<2x128xf32, #tpu.memory_space<vmem>>, %arg13: memref<504x32xf32, #tpu.memory_space<vmem>>, %arg14: memref<96x512xf32, #tpu.memory_space<vmem>>, %arg15: memref<96x64xf32, #tpu.memory_space<vmem>>, %arg16: memref<48x576xf32, #tpu.memory_space<vmem>>, %arg17: memref<48x64xf32, #tpu.memory_space<vmem>>, %arg18: memref<2x1536xf32, #tpu.memory_space<vmem>>) attributes {dimension_semantics = [#tpu.dimension_semantics<arbitrary>], iteration_bounds = array<i64: 1>, scalar_prefetch = 0 : i64, scratch_operands = 6 : i64, tpu.core_type = #tpu.core_type<tc>, window_params = [{pipeline_mode = #tpu.pipeline_mode<synchronous>, transform_indices = @transform_0, window_bounds = array<i64: 504, 256>}, {pipeline_mode = #tpu.pipeline_mode<synchronous>, transform_indices = @transform_1, window_bounds = array<i64: 256, 32>}, {pipeline_mode = #tpu.pipeline_mode<synchronous>, transform_indices = @transform_2, window_bounds = array<i64: 1, 32>}, {pipeline_mode = #tpu.pipeline_mode<synchronous>, transform_indices = @transform_3, window_bounds = array<i64: 512, 64>}, {pipeline_mode = #tpu.pipeline_mode<synchronous>, transform_indices = @transform_4, window_bounds = array<i64: 1, 64>}, {pipeline_mode = #tpu.pipeline_mode<synchronous>, transform_indices = @transform_5, window_bounds = array<i64: 576, 64>}, {pipeline_mode = #tpu.pipeline_mode<synchronous>, transform_indices = @transform_6, window_bounds = array<i64: 1, 64>}, {pipeline_mode = #tpu.pipeline_mode<synchronous>, transform_indices = @transform_7, window_bounds = array<i64: 1536, 32>}, {pipeline_mode = #tpu.pipeline_mode<synchronous>, transform_indices = @transform_8, window_bounds = array<i64: 1, 32>}, {pipeline_mode = #tpu.pipeline_mode<synchronous>, transform_indices = @transform_9, window_bounds = array<i64: 32, 128>}, {pipeline_mode = #tpu.pipeline_mode<synchronous>, transform_indices = @transform_10, window_bounds = array<i64: 1, 128>}, {pipeline_mode = #tpu.pipeline_mode<synchronous>, transform_indices = @transform_11, window_bounds = array<i64: 2, 128>}]} {
    %c0 = arith.constant 0 : index
    %c0_0 = arith.constant 0 : index
    %0 = vector.load %arg1[%c0, %c0_0] : memref<504x256xbf16, #tpu.memory_space<vmem>>, vector<504x256xbf16>
    %c0_1 = arith.constant 0 : index
    %c0_2 = arith.constant 0 : index
    %1 = vector.load %arg2[%c0_1, %c0_2] : memref<256x32xbf16, #tpu.memory_space<vmem>>, vector<256x32xbf16>
    %cst = arith.constant dense<0.000000e+00> : vector<504x32xf32>
    %2 = tpu.matmul %0, %1, %cst {dimension_numbers = #tpu.dot_dimension_numbers<[1], [0], [0], [1], [0, 0, 1, 1], [], []>} : vector<504x256xbf16>, vector<256x32xbf16>, vector<504x32xf32> -> vector<504x32xf32>
    %c0_3 = arith.constant 0 : index
    %c0_4 = arith.constant 0 : index
    %3 = vector.load %arg3[%c0_3, %c0_4] : memref<1x32xf32, #tpu.memory_space<vmem>>, vector<1x32xf32>
    %4 = vector.broadcast %3 : vector<1x32xf32> to vector<504x32xf32>
    %5 = arith.addf %2, %4 : vector<504x32xf32>
    %cst_5 = arith.constant 0.000000e+00 : f32
    %6 = vector.broadcast %cst_5 : f32 to vector<504x32xf32>
    %7 = arith.maximumf %5, %6 : vector<504x32xf32>
    %c0_6 = arith.constant 0 : index
    %c0_7 = arith.constant 0 : index
    %8 = vector.load %arg13[%c0_6, %c0_7] : memref<504x32xf32, #tpu.memory_space<vmem>>, vector<504x32xf32>
    tpu.vector_store %arg13[%c0_6, %c0_7], %7 {strides = array<i32>} : memref<504x32xf32, #tpu.memory_space<vmem>>, vector<504x32xf32>,
    %c0_8 = arith.constant 0 : index
    %c0_9 = arith.constant 0 : index
    %9 = vector.load %arg13[%c0_8, %c0_9] : memref<504x32xf32, #tpu.memory_space<vmem>>, vector<16x32xf32>
    %c0_10 = arith.constant 0 : index
    %c0_11 = arith.constant 0 : index
    %10 = vector.load %arg14[%c0_10, %c0_11] : memref<96x512xf32, #tpu.memory_space<vmem>>, vector<16x32xf32>
    tpu.vector_store %arg14[%c0_10, %c0_11], %9 {strides = array<i32>} : memref<96x512xf32, #tpu.memory_space<vmem>>, vector<16x32xf32>,
    %c18 = arith.constant 18 : index
    %c0_12 = arith.constant 0 : index
    %11 = vector.load %arg13[%c18, %c0_12] : memref<504x32xf32, #tpu.memory_space<vmem>>, vector<16x32xf32>
    %c16 = arith.constant 16 : index
    %c0_13 = arith.constant 0 : index
    %12 = vector.load %arg14[%c16, %c0_13] : memref<96x512xf32, #tpu.memory_space<vmem>>, vector<16x32xf32>
    tpu.vector_store %arg14[%c16, %c0_13], %11 {strides = array<i32>} : memref<96x512xf32, #tpu.memory_space<vmem>>, vector<16x32xf32>,
    %c36 = arith.constant 36 : index
    %c0_14 = arith.constant 0 : index
    %13 = vector.load %arg13[%c36, %c0_14] : memref<504x32xf32, #tpu.memory_space<vmem>>, vector<16x32xf32>
    %c32 = arith.constant 32 : index
    %c0_15 = arith.constant 0 : index
    %14 = vector.load %arg14[%c32, %c0_15] : memref<96x512xf32, #tpu.memory_space<vmem>>, vector<16x32xf32>
    tpu.vector_store %arg14[%c32, %c0_15], %13 {strides = array<i32>} : memref<96x512xf32, #tpu.memory_space<vmem>>, vector<16x32xf32>,
    %c54 = arith.constant 54 : index
    %c0_16 = arith.constant 0 : index
    %15 = vector.load %arg13[%c54, %c0_16] : memref<504x32xf32, #tpu.memory_space<vmem>>, vector<16x32xf32>
    %c48 = arith.constant 48 : index
    %c0_17 = arith.constant 0 : index
    %16 = vector.load %arg14[%c48, %c0_17] : memref<96x512xf32, #tpu.memory_space<vmem>>, vector<16x32xf32>
    tpu.vector_store %arg14[%c48, %c0_17], %15 {strides = array<i32>} : memref<96x512xf32, #tpu.memory_space<vmem>>, vector<16x32xf32>,
    %c72 = arith.constant 72 : index
    %c0_18 = arith.constant 0 : index
    %17 = vector.load %arg13[%c72, %c0_18] : memref<504x32xf32, #tpu.memory_space<vmem>>, vector<16x32xf32>
    %c64 = arith.constant 64 : index
    %c0_19 = arith.constant 0 : index
    %18 = vector.load %arg14[%c64, %c0_19] : memref<96x512xf32, #tpu.memory_space<vmem>>, vector<16x32xf32>
    tpu.vector_store %arg14[%c64, %c0_19], %17 {strides = array<i32>} : memref<96x512xf32, #tpu.memory_space<vmem>>, vector<16x32xf32>,
    %c90 = arith.constant 90 : index
    %c0_20 = arith.constant 0 : index
    %19 = vector.load %arg13[%c90, %c0_20] : memref<504x32xf32, #tpu.memory_space<vmem>>, vector<16x32xf32>
    %c80 = arith.constant 80 : index
    %c0_21 = arith.constant 0 : index
    %20 = vector.load %arg14[%c80, %c0_21] : memref<96x512xf32, #tpu.memory_space<vmem>>, vector<16x32xf32>
    tpu.vector_store %arg14[%c80, %c0_21], %19 {strides = array<i32>} : memref<96x512xf32, #tpu.memory_space<vmem>>, vector<16x32xf32>,
    %c126 = arith.constant 126 : index
    %c0_22 = arith.constant 0 : index
    %21 = vector.load %arg13[%c126, %c0_22] : memref<504x32xf32, #tpu.memory_space<vmem>>, vector<16x32xf32>
    %c0_23 = arith.constant 0 : index
    %c32_24 = arith.constant 32 : index
    %22 = vector.load %arg14[%c0_23, %c32_24] : memref<96x512xf32, #tpu.memory_space<vmem>>, vector<16x32xf32>
    tpu.vector_store %arg14[%c0_23, %c32_24], %21 {strides = array<i32>} : memref<96x512xf32, #tpu.memory_space<vmem>>, vector<16x32xf32>,
    %c144 = arith.constant 144 : index
    %c0_25 = arith.constant 0 : index
    %23 = vector.load %arg13[%c144, %c0_25] : memref<504x32xf32, #tpu.memory_space<vmem>>, vector<16x32xf32>
    %c16_26 = arith.constant 16 : index
    %c32_27 = arith.constant 32 : index
    %24 = vector.load %arg14[%c16_26, %c32_27] : memref<96x512xf32, #tpu.memory_space<vmem>>, vector<16x32xf32>
    tpu.vector_store %arg14[%c16_26, %c32_27], %23 {strides = array<i32>} : memref<96x512xf32, #tpu.memory_space<vmem>>, vector<16x32xf32>,
    %c162 = arith.constant 162 : index
    %c0_28 = arith.constant 0 : index
    %25 = vector.load %arg13[%c162, %c0_28] : memref<504x32xf32, #tpu.memory_space<vmem>>, vector<16x32xf32>
    %c32_29 = arith.constant 32 : index
    %c32_30 = arith.constant 32 : index
    %26 = vector.load %arg14[%c32_29, %c32_30] : memref<96x512xf32, #tpu.memory_space<vmem>>, vector<16x32xf32>
    tpu.vector_store %arg14[%c32_29, %c32_30], %25 {strides = array<i32>} : memref<96x512xf32, #tpu.memory_space<vmem>>, vector<16x32xf32>,
    %c180 = arith.constant 180 : index
    %c0_31 = arith.constant 0 : index
    %27 = vector.load %arg13[%c180, %c0_31] : memref<504x32xf32, #tpu.memory_space<vmem>>, vector<16x32xf32>
    %c48_32 = arith.constant 48 : index
    %c32_33 = arith.constant 32 : index
    %28 = vector.load %arg14[%c48_32, %c32_33] : memref<96x512xf32, #tpu.memory_space<vmem>>, vector<16x32xf32>
    tpu.vector_store %arg14[%c48_32, %c32_33], %27 {strides = array<i32>} : memref<96x512xf32, #tpu.memory_space<vmem>>, vector<16x32xf32>,
    %c198 = arith.constant 198 : index
    %c0_34 = arith.constant 0 : index
    %29 = vector.load %arg13[%c198, %c0_34] : memref<504x32xf32, #tpu.memory_space<vmem>>, vector<16x32xf32>
    %c64_35 = arith.constant 64 : index
    %c32_36 = arith.constant 32 : index
    %30 = vector.load %arg14[%c64_35, %c32_36] : memref<96x512xf32, #tpu.memory_space<vmem>>, vector<16x32xf32>
    tpu.vector_store %arg14[%c64_35, %c32_36], %29 {strides = array<i32>} : memref<96x512xf32, #tpu.memory_space<vmem>>, vector<16x32xf32>,
    %c216 = arith.constant 216 : index
    %c0_37 = arith.constant 0 : index
    %31 = vector.load %arg13[%c216, %c0_37] : memref<504x32xf32, #tpu.memory_space<vmem>>, vector<16x32xf32>
    %c80_38 = arith.constant 80 : index
    %c32_39 = arith.constant 32 : index
    %32 = vector.load %arg14[%c80_38, %c32_39] : memref<96x512xf32, #tpu.memory_space<vmem>>, vector<16x32xf32>
    tpu.vector_store %arg14[%c80_38, %c32_39], %31 {strides = array<i32>} : memref<96x512xf32, #tpu.memory_space<vmem>>, vector<16x32xf32>,
    %c2 = arith.constant 2 : index
    %c0_40 = arith.constant 0 : index
    %33 = vector.load %arg13[%c2, %c0_40] : memref<504x32xf32, #tpu.memory_space<vmem>>, vector<16x32xf32>
    %c0_41 = arith.constant 0 : index
    %c64_42 = arith.constant 64 : index
    %34 = vector.load %arg14[%c0_41, %c64_42] : memref<96x512xf32, #tpu.memory_space<vmem>>, vector<16x32xf32>
    tpu.vector_store %arg14[%c0_41, %c64_42], %33 {strides = array<i32>} : memref<96x512xf32, #tpu.memory_space<vmem>>, vector<16x32xf32>,
    %c20 = arith.constant 20 : index
    %c0_43 = arith.constant 0 : index
    %35 = vector.load %arg13[%c20, %c0_43] : memref<504x32xf32, #tpu.memory_space<vmem>>, vector<16x32xf32>
    %c16_44 = arith.constant 16 : index
    %c64_45 = arith.constant 64 : index
    %36 = vector.load %arg14[%c16_44, %c64_45] : memref<96x512xf32, #tpu.memory_space<vmem>>, vector<16x32xf32>
    tpu.vector_store %arg14[%c16_44, %c64_45], %35 {strides = array<i32>} : memref<96x512xf32, #tpu.memory_space<vmem>>, vector<16x32xf32>,
    %c38 = arith.constant 38 : index
    %c0_46 = arith.constant 0 : index
    %37 = vector.load %arg13[%c38, %c0_46] : memref<504x32xf32, #tpu.memory_space<vmem>>, vector<16x32xf32>
    %c32_47 = arith.constant 32 : index
    %c64_48 = arith.constant 64 : index
    %38 = vector.load %arg14[%c32_47, %c64_48] : memref<96x512xf32, #tpu.memory_space<vmem>>, vector<16x32xf32>
    tpu.vector_store %arg14[%c32_47, %c64_48], %37 {strides = array<i32>} : memref<96x512xf32, #tpu.memory_space<vmem>>, vector<16x32xf32>,
    %c56 = arith.constant 56 : index
    %c0_49 = arith.constant 0 : index
    %39 = vector.load %arg13[%c56, %c0_49] : memref<504x32xf32, #tpu.memory_space<vmem>>, vector<16x32xf32>
    %c48_50 = arith.constant 48 : index
    %c64_51 = arith.constant 64 : index
    %40 = vector.load %arg14[%c48_50, %c64_51] : memref<96x512xf32, #tpu.memory_space<vmem>>, vector<16x32xf32>
    tpu.vector_store %arg14[%c48_50, %c64_51], %39 {strides = array<i32>} : memref<96x512xf32, #tpu.memory_space<vmem>>, vector<16x32xf32>,
    %c74 = arith.constant 74 : index
    %c0_52 = arith.constant 0 : index
    %41 = vector.load %arg13[%c74, %c0_52] : memref<504x32xf32, #tpu.memory_space<vmem>>, vector<16x32xf32>
    %c64_53 = arith.constant 64 : index
    %c64_54 = arith.constant 64 : index
    %42 = vector.load %arg14[%c64_53, %c64_54] : memref<96x512xf32, #tpu.memory_space<vmem>>, vector<16x32xf32>
    tpu.vector_store %arg14[%c64_53, %c64_54], %41 {strides = array<i32>} : memref<96x512xf32, #tpu.memory_space<vmem>>, vector<16x32xf32>,
    %c92 = arith.constant 92 : index
    %c0_55 = arith.constant 0 : index
    %43 = vector.load %arg13[%c92, %c0_55] : memref<504x32xf32, #tpu.memory_space<vmem>>, vector<16x32xf32>
    %c80_56 = arith.constant 80 : index
    %c64_57 = arith.constant 64 : index
    %44 = vector.load %arg14[%c80_56, %c64_57] : memref<96x512xf32, #tpu.memory_space<vmem>>, vector<16x32xf32>
    tpu.vector_store %arg14[%c80_56, %c64_57], %43 {strides = array<i32>} : memref<96x512xf32, #tpu.memory_space<vmem>>, vector<16x32xf32>,
    %c128 = arith.constant 128 : index
    %c0_58 = arith.constant 0 : index
    %45 = vector.load %arg13[%c128, %c0_58] : memref<504x32xf32, #tpu.memory_space<vmem>>, vector<16x32xf32>
    %c0_59 = arith.constant 0 : index
    %c96 = arith.constant 96 : index
    %46 = vector.load %arg14[%c0_59, %c96] : memref<96x512xf32, #tpu.memory_space<vmem>>, vector<16x32xf32>
    tpu.vector_store %arg14[%c0_59, %c96], %45 {strides = array<i32>} : memref<96x512xf32, #tpu.memory_space<vmem>>, vector<16x32xf32>,
    %c146 = arith.constant 146 : index
    %c0_60 = arith.constant 0 : index
    %47 = vector.load %arg13[%c146, %c0_60] : memref<504x32xf32, #tpu.memory_space<vmem>>, vector<16x32xf32>
    %c16_61 = arith.constant 16 : index
    %c96_62 = arith.constant 96 : index
    %48 = vector.load %arg14[%c16_61, %c96_62] : memref<96x512xf32, #tpu.memory_space<vmem>>, vector<16x32xf32>
    tpu.vector_store %arg14[%c16_61, %c96_62], %47 {strides = array<i32>} : memref<96x512xf32, #tpu.memory_space<vmem>>, vector<16x32xf32>,
    %c164 = arith.constant 164 : index
    %c0_63 = arith.constant 0 : index
    %49 = vector.load %arg13[%c164, %c0_63] : memref<504x32xf32, #tpu.memory_space<vmem>>, vector<16x32xf32>
    %c32_64 = arith.constant 32 : index
    %c96_65 = arith.constant 96 : index
    %50 = vector.load %arg14[%c32_64, %c96_65] : memref<96x512xf32, #tpu.memory_space<vmem>>, vector<16x32xf32>
    tpu.vector_store %arg14[%c32_64, %c96_65], %49 {strides = array<i32>} : memref<96x512xf32, #tpu.memory_space<vmem>>, vector<16x32xf32>,
    %c182 = arith.constant 182 : index
    %c0_66 = arith.constant 0 : index
    %51 = vector.load %arg13[%c182, %c0_66] : memref<504x32xf32, #tpu.memory_space<vmem>>, vector<16x32xf32>
    %c48_67 = arith.constant 48 : index
    %c96_68 = arith.constant 96 : index
    %52 = vector.load %arg14[%c48_67, %c96_68] : memref<96x512xf32, #tpu.memory_space<vmem>>, vector<16x32xf32>
    tpu.vector_store %arg14[%c48_67, %c96_68], %51 {strides = array<i32>} : memref<96x512xf32, #tpu.memory_space<vmem>>, vector<16x32xf32>,
    %c200 = arith.constant 200 : index
    %c0_69 = arith.constant 0 : index
    %53 = vector.load %arg13[%c200, %c0_69] : memref<504x32xf32, #tpu.memory_space<vmem>>, vector<16x32xf32>
    %c64_70 = arith.constant 64 : index
    %c96_71 = arith.constant 96 : index
    %54 = vector.load %arg14[%c64_70, %c96_71] : memref<96x512xf32, #tpu.memory_space<vmem>>, vector<16x32xf32>
    tpu.vector_store %arg14[%c64_70, %c96_71], %53 {strides = array<i32>} : memref<96x512xf32, #tpu.memory_space<vmem>>, vector<16x32xf32>,
    %c218 = arith.constant 218 : index
    %c0_72 = arith.constant 0 : index
    %55 = vector.load %arg13[%c218, %c0_72] : memref<504x32xf32, #tpu.memory_space<vmem>>, vector<16x32xf32>
    %c80_73 = arith.constant 80 : index
    %c96_74 = arith.constant 96 : index
    %56 = vector.load %arg14[%c80_73, %c96_74] : memref<96x512xf32, #tpu.memory_space<vmem>>, vector<16x32xf32>
    tpu.vector_store %arg14[%c80_73, %c96_74], %55 {strides = array<i32>} : memref<96x512xf32, #tpu.memory_space<vmem>>, vector<16x32xf32>,
    %c252 = arith.constant 252 : index
    %c0_75 = arith.constant 0 : index
    %57 = vector.load %arg13[%c252, %c0_75] : memref<504x32xf32, #tpu.memory_space<vmem>>, vector<16x32xf32>
    %c0_76 = arith.constant 0 : index
    %c128_77 = arith.constant 128 : index
    %58 = vector.load %arg14[%c0_76, %c128_77] : memref<96x512xf32, #tpu.memory_space<vmem>>, vector<16x32xf32>
    tpu.vector_store %arg14[%c0_76, %c128_77], %57 {strides = array<i32>} : memref<96x512xf32, #tpu.memory_space<vmem>>, vector<16x32xf32>,
    %c270 = arith.constant 270 : index
    %c0_78 = arith.constant 0 : index
    %59 = vector.load %arg13[%c270, %c0_78] : memref<504x32xf32, #tpu.memory_space<vmem>>, vector<16x32xf32>
    %c16_79 = arith.constant 16 : index
    %c128_80 = arith.constant 128 : index
    %60 = vector.load %arg14[%c16_79, %c128_80] : memref<96x512xf32, #tpu.memory_space<vmem>>, vector<16x32xf32>
    tpu.vector_store %arg14[%c16_79, %c128_80], %59 {strides = array<i32>} : memref<96x512xf32, #tpu.memory_space<vmem>>, vector<16x32xf32>,
    %c288 = arith.constant 288 : index
    %c0_81 = arith.constant 0 : index
    %61 = vector.load %arg13[%c288, %c0_81] : memref<504x32xf32, #tpu.memory_space<vmem>>, vector<16x32xf32>
    %c32_82 = arith.constant 32 : index
    %c128_83 = arith.constant 128 : index
    %62 = vector.load %arg14[%c32_82, %c128_83] : memref<96x512xf32, #tpu.memory_space<vmem>>, vector<16x32xf32>
    tpu.vector_store %arg14[%c32_82, %c128_83], %61 {strides = array<i32>} : memref<96x512xf32, #tpu.memory_space<vmem>>, vector<16x32xf32>,
    %c306 = arith.constant 306 : index
    %c0_84 = arith.constant 0 : index
    %63 = vector.load %arg13[%c306, %c0_84] : memref<504x32xf32, #tpu.memory_space<vmem>>, vector<16x32xf32>
    %c48_85 = arith.constant 48 : index
    %c128_86 = arith.constant 128 : index
    %64 = vector.load %arg14[%c48_85, %c128_86] : memref<96x512xf32, #tpu.memory_space<vmem>>, vector<16x32xf32>
    tpu.vector_store %arg14[%c48_85, %c128_86], %63 {strides = array<i32>} : memref<96x512xf32, #tpu.memory_space<vmem>>, vector<16x32xf32>,
    %c324 = arith.constant 324 : index
    %c0_87 = arith.constant 0 : index
    %65 = vector.load %arg13[%c324, %c0_87] : memref<504x32xf32, #tpu.memory_space<vmem>>, vector<16x32xf32>
    %c64_88 = arith.constant 64 : index
    %c128_89 = arith.constant 128 : index
    %66 = vector.load %arg14[%c64_88, %c128_89] : memref<96x512xf32, #tpu.memory_space<vmem>>, vector<16x32xf32>
    tpu.vector_store %arg14[%c64_88, %c128_89], %65 {strides = array<i32>} : memref<96x512xf32, #tpu.memory_space<vmem>>, vector<16x32xf32>,
    %c342 = arith.constant 342 : index
    %c0_90 = arith.constant 0 : index
    %67 = vector.load %arg13[%c342, %c0_90] : memref<504x32xf32, #tpu.memory_space<vmem>>, vector<16x32xf32>
    %c80_91 = arith.constant 80 : index
    %c128_92 = arith.constant 128 : index
    %68 = vector.load %arg14[%c80_91, %c128_92] : memref<96x512xf32, #tpu.memory_space<vmem>>, vector<16x32xf32>
    tpu.vector_store %arg14[%c80_91, %c128_92], %67 {strides = array<i32>} : memref<96x512xf32, #tpu.memory_space<vmem>>, vector<16x32xf32>,
    %c378 = arith.constant 378 : index
    %c0_93 = arith.constant 0 : index
    %69 = vector.load %arg13[%c378, %c0_93] : memref<504x32xf32, #tpu.memory_space<vmem>>, vector<16x32xf32>
    %c0_94 = arith.constant 0 : index
    %c160 = arith.constant 160 : index
    %70 = vector.load %arg14[%c0_94, %c160] : memref<96x512xf32, #tpu.memory_space<vmem>>, vector<16x32xf32>
    tpu.vector_store %arg14[%c0_94, %c160], %69 {strides = array<i32>} : memref<96x512xf32, #tpu.memory_space<vmem>>, vector<16x32xf32>,
    %c396 = arith.constant 396 : index
    %c0_95 = arith.constant 0 : index
    %71 = vector.load %arg13[%c396, %c0_95] : memref<504x32xf32, #tpu.memory_space<vmem>>, vector<16x32xf32>
    %c16_96 = arith.constant 16 : index
    %c160_97 = arith.constant 160 : index
    %72 = vector.load %arg14[%c16_96, %c160_97] : memref<96x512xf32, #tpu.memory_space<vmem>>, vector<16x32xf32>
    tpu.vector_store %arg14[%c16_96, %c160_97], %71 {strides = array<i32>} : memref<96x512xf32, #tpu.memory_space<vmem>>, vector<16x32xf32>,
    %c414 = arith.constant 414 : index
    %c0_98 = arith.constant 0 : index
    %73 = vector.load %arg13[%c414, %c0_98] : memref<504x32xf32, #tpu.memory_space<vmem>>, vector<16x32xf32>
    %c32_99 = arith.constant 32 : index
    %c160_100 = arith.constant 160 : index
    %74 = vector.load %arg14[%c32_99, %c160_100] : memref<96x512xf32, #tpu.memory_space<vmem>>, vector<16x32xf32>
    tpu.vector_store %arg14[%c32_99, %c160_100], %73 {strides = array<i32>} : memref<96x512xf32, #tpu.memory_space<vmem>>, vector<16x32xf32>,
    %c432 = arith.constant 432 : index
    %c0_101 = arith.constant 0 : index
    %75 = vector.load %arg13[%c432, %c0_101] : memref<504x32xf32, #tpu.memory_space<vmem>>, vector<16x32xf32>
    %c48_102 = arith.constant 48 : index
    %c160_103 = arith.constant 160 : index
    %76 = vector.load %arg14[%c48_102, %c160_103] : memref<96x512xf32, #tpu.memory_space<vmem>>, vector<16x32xf32>
    tpu.vector_store %arg14[%c48_102, %c160_103], %75 {strides = array<i32>} : memref<96x512xf32, #tpu.memory_space<vmem>>, vector<16x32xf32>,
    %c450 = arith.constant 450 : index
    %c0_104 = arith.constant 0 : index
    %77 = vector.load %arg13[%c450, %c0_104] : memref<504x32xf32, #tpu.memory_space<vmem>>, vector<16x32xf32>
    %c64_105 = arith.constant 64 : index
    %c160_106 = arith.constant 160 : index
    %78 = vector.load %arg14[%c64_105, %c160_106] : memref<96x512xf32, #tpu.memory_space<vmem>>, vector<16x32xf32>
    tpu.vector_store %arg14[%c64_105, %c160_106], %77 {strides = array<i32>} : memref<96x512xf32, #tpu.memory_space<vmem>>, vector<16x32xf32>,
    %c468 = arith.constant 468 : index
    %c0_107 = arith.constant 0 : index
    %79 = vector.load %arg13[%c468, %c0_107] : memref<504x32xf32, #tpu.memory_space<vmem>>, vector<16x32xf32>
    %c80_108 = arith.constant 80 : index
    %c160_109 = arith.constant 160 : index
    %80 = vector.load %arg14[%c80_108, %c160_109] : memref<96x512xf32, #tpu.memory_space<vmem>>, vector<16x32xf32>
    tpu.vector_store %arg14[%c80_108, %c160_109], %79 {strides = array<i32>} : memref<96x512xf32, #tpu.memory_space<vmem>>, vector<16x32xf32>,
    %c254 = arith.constant 254 : index
    %c0_110 = arith.constant 0 : index
    %81 = vector.load %arg13[%c254, %c0_110] : memref<504x32xf32, #tpu.memory_space<vmem>>, vector<16x32xf32>
    %c0_111 = arith.constant 0 : index
    %c192 = arith.constant 192 : index
    %82 = vector.load %arg14[%c0_111, %c192] : memref<96x512xf32, #tpu.memory_space<vmem>>, vector<16x32xf32>
    tpu.vector_store %arg14[%c0_111, %c192], %81 {strides = array<i32>} : memref<96x512xf32, #tpu.memory_space<vmem>>, vector<16x32xf32>,
    %c272 = arith.constant 272 : index
    %c0_112 = arith.constant 0 : index
    %83 = vector.load %arg13[%c272, %c0_112] : memref<504x32xf32, #tpu.memory_space<vmem>>, vector<16x32xf32>
    %c16_113 = arith.constant 16 : index
    %c192_114 = arith.constant 192 : index
    %84 = vector.load %arg14[%c16_113, %c192_114] : memref<96x512xf32, #tpu.memory_space<vmem>>, vector<16x32xf32>
    tpu.vector_store %arg14[%c16_113, %c192_114], %83 {strides = array<i32>} : memref<96x512xf32, #tpu.memory_space<vmem>>, vector<16x32xf32>,
    %c290 = arith.constant 290 : index
    %c0_115 = arith.constant 0 : index
    %85 = vector.load %arg13[%c290, %c0_115] : memref<504x32xf32, #tpu.memory_space<vmem>>, vector<16x32xf32>
    %c32_116 = arith.constant 32 : index
    %c192_117 = arith.constant 192 : index
    %86 = vector.load %arg14[%c32_116, %c192_117] : memref<96x512xf32, #tpu.memory_space<vmem>>, vector<16x32xf32>
    tpu.vector_store %arg14[%c32_116, %c192_117], %85 {strides = array<i32>} : memref<96x512xf32, #tpu.memory_space<vmem>>, vector<16x32xf32>,
    %c308 = arith.constant 308 : index
    %c0_118 = arith.constant 0 : index
    %87 = vector.load %arg13[%c308, %c0_118] : memref<504x32xf32, #tpu.memory_space<vmem>>, vector<16x32xf32>
    %c48_119 = arith.constant 48 : index
    %c192_120 = arith.constant 192 : index
    %88 = vector.load %arg14[%c48_119, %c192_120] : memref<96x512xf32, #tpu.memory_space<vmem>>, vector<16x32xf32>
    tpu.vector_store %arg14[%c48_119, %c192_120], %87 {strides = array<i32>} : memref<96x512xf32, #tpu.memory_space<vmem>>, vector<16x32xf32>,
    %c326 = arith.constant 326 : index
    %c0_121 = arith.constant 0 : index
    %89 = vector.load %arg13[%c326, %c0_121] : memref<504x32xf32, #tpu.memory_space<vmem>>, vector<16x32xf32>
    %c64_122 = arith.constant 64 : index
    %c192_123 = arith.constant 192 : index
    %90 = vector.load %arg14[%c64_122, %c192_123] : memref<96x512xf32, #tpu.memory_space<vmem>>, vector<16x32xf32>
    tpu.vector_store %arg14[%c64_122, %c192_123], %89 {strides = array<i32>} : memref<96x512xf32, #tpu.memory_space<vmem>>, vector<16x32xf32>,
    %c344 = arith.constant 344 : index
    %c0_124 = arith.constant 0 : index
    %91 = vector.load %arg13[%c344, %c0_124] : memref<504x32xf32, #tpu.memory_space<vmem>>, vector<16x32xf32>
    %c80_125 = arith.constant 80 : index
    %c192_126 = arith.constant 192 : index
    %92 = vector.load %arg14[%c80_125, %c192_126] : memref<96x512xf32, #tpu.memory_space<vmem>>, vector<16x32xf32>
    tpu.vector_store %arg14[%c80_125, %c192_126], %91 {strides = array<i32>} : memref<96x512xf32, #tpu.memory_space<vmem>>, vector<16x32xf32>,
    %c380 = arith.constant 380 : index
    %c0_127 = arith.constant 0 : index
    %93 = vector.load %arg13[%c380, %c0_127] : memref<504x32xf32, #tpu.memory_space<vmem>>, vector<16x32xf32>
    %c0_128 = arith.constant 0 : index
    %c224 = arith.constant 224 : index
    %94 = vector.load %arg14[%c0_128, %c224] : memref<96x512xf32, #tpu.memory_space<vmem>>, vector<16x32xf32>
    tpu.vector_store %arg14[%c0_128, %c224], %93 {strides = array<i32>} : memref<96x512xf32, #tpu.memory_space<vmem>>, vector<16x32xf32>,
    %c398 = arith.constant 398 : index
    %c0_129 = arith.constant 0 : index
    %95 = vector.load %arg13[%c398, %c0_129] : memref<504x32xf32, #tpu.memory_space<vmem>>, vector<16x32xf32>
    %c16_130 = arith.constant 16 : index
    %c224_131 = arith.constant 224 : index
    %96 = vector.load %arg14[%c16_130, %c224_131] : memref<96x512xf32, #tpu.memory_space<vmem>>, vector<16x32xf32>
    tpu.vector_store %arg14[%c16_130, %c224_131], %95 {strides = array<i32>} : memref<96x512xf32, #tpu.memory_space<vmem>>, vector<16x32xf32>,
    %c416 = arith.constant 416 : index
    %c0_132 = arith.constant 0 : index
    %97 = vector.load %arg13[%c416, %c0_132] : memref<504x32xf32, #tpu.memory_space<vmem>>, vector<16x32xf32>
    %c32_133 = arith.constant 32 : index
    %c224_134 = arith.constant 224 : index
    %98 = vector.load %arg14[%c32_133, %c224_134] : memref<96x512xf32, #tpu.memory_space<vmem>>, vector<16x32xf32>
    tpu.vector_store %arg14[%c32_133, %c224_134], %97 {strides = array<i32>} : memref<96x512xf32, #tpu.memory_space<vmem>>, vector<16x32xf32>,
    %c434 = arith.constant 434 : index
    %c0_135 = arith.constant 0 : index
    %99 = vector.load %arg13[%c434, %c0_135] : memref<504x32xf32, #tpu.memory_space<vmem>>, vector<16x32xf32>
    %c48_136 = arith.constant 48 : index
    %c224_137 = arith.constant 224 : index
    %100 = vector.load %arg14[%c48_136, %c224_137] : memref<96x512xf32, #tpu.memory_space<vmem>>, vector<16x32xf32>
    tpu.vector_store %arg14[%c48_136, %c224_137], %99 {strides = array<i32>} : memref<96x512xf32, #tpu.memory_space<vmem>>, vector<16x32xf32>,
    %c452 = arith.constant 452 : index
    %c0_138 = arith.constant 0 : index
    %101 = vector.load %arg13[%c452, %c0_138] : memref<504x32xf32, #tpu.memory_space<vmem>>, vector<16x32xf32>
    %c64_139 = arith.constant 64 : index
    %c224_140 = arith.constant 224 : index
    %102 = vector.load %arg14[%c64_139, %c224_140] : memref<96x512xf32, #tpu.memory_space<vmem>>, vector<16x32xf32>
    tpu.vector_store %arg14[%c64_139, %c224_140], %101 {strides = array<i32>} : memref<96x512xf32, #tpu.memory_space<vmem>>, vector<16x32xf32>,
    %c470 = arith.constant 470 : index
    %c0_141 = arith.constant 0 : index
    %103 = vector.load %arg13[%c470, %c0_141] : memref<504x32xf32, #tpu.memory_space<vmem>>, vector<16x32xf32>
    %c80_142 = arith.constant 80 : index
    %c224_143 = arith.constant 224 : index
    %104 = vector.load %arg14[%c80_142, %c224_143] : memref<96x512xf32, #tpu.memory_space<vmem>>, vector<16x32xf32>
    tpu.vector_store %arg14[%c80_142, %c224_143], %103 {strides = array<i32>} : memref<96x512xf32, #tpu.memory_space<vmem>>, vector<16x32xf32>,
    %c18_144 = arith.constant 18 : index
    %c0_145 = arith.constant 0 : index
    %105 = vector.load %arg13[%c18_144, %c0_145] : memref<504x32xf32, #tpu.memory_space<vmem>>, vector<16x32xf32>
    %c0_146 = arith.constant 0 : index
    %c256 = arith.constant 256 : index
    %106 = vector.load %arg14[%c0_146, %c256] : memref<96x512xf32, #tpu.memory_space<vmem>>, vector<16x32xf32>
    tpu.vector_store %arg14[%c0_146, %c256], %105 {strides = array<i32>} : memref<96x512xf32, #tpu.memory_space<vmem>>, vector<16x32xf32>,
    %c36_147 = arith.constant 36 : index
    %c0_148 = arith.constant 0 : index
    %107 = vector.load %arg13[%c36_147, %c0_148] : memref<504x32xf32, #tpu.memory_space<vmem>>, vector<16x32xf32>
    %c16_149 = arith.constant 16 : index
    %c256_150 = arith.constant 256 : index
    %108 = vector.load %arg14[%c16_149, %c256_150] : memref<96x512xf32, #tpu.memory_space<vmem>>, vector<16x32xf32>
    tpu.vector_store %arg14[%c16_149, %c256_150], %107 {strides = array<i32>} : memref<96x512xf32, #tpu.memory_space<vmem>>, vector<16x32xf32>,
    %c54_151 = arith.constant 54 : index
    %c0_152 = arith.constant 0 : index
    %109 = vector.load %arg13[%c54_151, %c0_152] : memref<504x32xf32, #tpu.memory_space<vmem>>, vector<16x32xf32>
    %c32_153 = arith.constant 32 : index
    %c256_154 = arith.constant 256 : index
    %110 = vector.load %arg14[%c32_153, %c256_154] : memref<96x512xf32, #tpu.memory_space<vmem>>, vector<16x32xf32>
    tpu.vector_store %arg14[%c32_153, %c256_154], %109 {strides = array<i32>} : memref<96x512xf32, #tpu.memory_space<vmem>>, vector<16x32xf32>,
    %c72_155 = arith.constant 72 : index
    %c0_156 = arith.constant 0 : index
    %111 = vector.load %arg13[%c72_155, %c0_156] : memref<504x32xf32, #tpu.memory_space<vmem>>, vector<16x32xf32>
    %c48_157 = arith.constant 48 : index
    %c256_158 = arith.constant 256 : index
    %112 = vector.load %arg14[%c48_157, %c256_158] : memref<96x512xf32, #tpu.memory_space<vmem>>, vector<16x32xf32>
    tpu.vector_store %arg14[%c48_157, %c256_158], %111 {strides = array<i32>} : memref<96x512xf32, #tpu.memory_space<vmem>>, vector<16x32xf32>,
    %c90_159 = arith.constant 90 : index
    %c0_160 = arith.constant 0 : index
    %113 = vector.load %arg13[%c90_159, %c0_160] : memref<504x32xf32, #tpu.memory_space<vmem>>, vector<16x32xf32>
    %c64_161 = arith.constant 64 : index
    %c256_162 = arith.constant 256 : index
    %114 = vector.load %arg14[%c64_161, %c256_162] : memref<96x512xf32, #tpu.memory_space<vmem>>, vector<16x32xf32>
    tpu.vector_store %arg14[%c64_161, %c256_162], %113 {strides = array<i32>} : memref<96x512xf32, #tpu.memory_space<vmem>>, vector<16x32xf32>,
    %c108 = arith.constant 108 : index
    %c0_163 = arith.constant 0 : index
    %115 = vector.load %arg13[%c108, %c0_163] : memref<504x32xf32, #tpu.memory_space<vmem>>, vector<16x32xf32>
    %c80_164 = arith.constant 80 : index
    %c256_165 = arith.constant 256 : index
    %116 = vector.load %arg14[%c80_164, %c256_165] : memref<96x512xf32, #tpu.memory_space<vmem>>, vector<16x32xf32>
    tpu.vector_store %arg14[%c80_164, %c256_165], %115 {strides = array<i32>} : memref<96x512xf32, #tpu.memory_space<vmem>>, vector<16x32xf32>,
    %c144_166 = arith.constant 144 : index
    %c0_167 = arith.constant 0 : index
    %117 = vector.load %arg13[%c144_166, %c0_167] : memref<504x32xf32, #tpu.memory_space<vmem>>, vector<16x32xf32>
    %c0_168 = arith.constant 0 : index
    %c288_169 = arith.constant 288 : index
    %118 = vector.load %arg14[%c0_168, %c288_169] : memref<96x512xf32, #tpu.memory_space<vmem>>, vector<16x32xf32>
    tpu.vector_store %arg14[%c0_168, %c288_169], %117 {strides = array<i32>} : memref<96x512xf32, #tpu.memory_space<vmem>>, vector<16x32xf32>,
    %c162_170 = arith.constant 162 : index
    %c0_171 = arith.constant 0 : index
    %119 = vector.load %arg13[%c162_170, %c0_171] : memref<504x32xf32, #tpu.memory_space<vmem>>, vector<16x32xf32>
    %c16_172 = arith.constant 16 : index
    %c288_173 = arith.constant 288 : index
    %120 = vector.load %arg14[%c16_172, %c288_173] : memref<96x512xf32, #tpu.memory_space<vmem>>, vector<16x32xf32>
    tpu.vector_store %arg14[%c16_172, %c288_173], %119 {strides = array<i32>} : memref<96x512xf32, #tpu.memory_space<vmem>>, vector<16x32xf32>,
    %c180_174 = arith.constant 180 : index
    %c0_175 = arith.constant 0 : index
    %121 = vector.load %arg13[%c180_174, %c0_175] : memref<504x32xf32, #tpu.memory_space<vmem>>, vector<16x32xf32>
    %c32_176 = arith.constant 32 : index
    %c288_177 = arith.constant 288 : index
    %122 = vector.load %arg14[%c32_176, %c288_177] : memref<96x512xf32, #tpu.memory_space<vmem>>, vector<16x32xf32>
    tpu.vector_store %arg14[%c32_176, %c288_177], %121 {strides = array<i32>} : memref<96x512xf32, #tpu.memory_space<vmem>>, vector<16x32xf32>,
    %c198_178 = arith.constant 198 : index
    %c0_179 = arith.constant 0 : index
    %123 = vector.load %arg13[%c198_178, %c0_179] : memref<504x32xf32, #tpu.memory_space<vmem>>, vector<16x32xf32>
    %c48_180 = arith.constant 48 : index
    %c288_181 = arith.constant 288 : index
    %124 = vector.load %arg14[%c48_180, %c288_181] : memref<96x512xf32, #tpu.memory_space<vmem>>, vector<16x32xf32>
    tpu.vector_store %arg14[%c48_180, %c288_181], %123 {strides = array<i32>} : memref<96x512xf32, #tpu.memory_space<vmem>>, vector<16x32xf32>,
    %c216_182 = arith.constant 216 : index
    %c0_183 = arith.constant 0 : index
    %125 = vector.load %arg13[%c216_182, %c0_183] : memref<504x32xf32, #tpu.memory_space<vmem>>, vector<16x32xf32>
    %c64_184 = arith.constant 64 : index
    %c288_185 = arith.constant 288 : index
    %126 = vector.load %arg14[%c64_184, %c288_185] : memref<96x512xf32, #tpu.memory_space<vmem>>, vector<16x32xf32>
    tpu.vector_store %arg14[%c64_184, %c288_185], %125 {strides = array<i32>} : memref<96x512xf32, #tpu.memory_space<vmem>>, vector<16x32xf32>,
    %c234 = arith.constant 234 : index
    %c0_186 = arith.constant 0 : index
    %127 = vector.load %arg13[%c234, %c0_186] : memref<504x32xf32, #tpu.memory_space<vmem>>, vector<16x32xf32>
    %c80_187 = arith.constant 80 : index
    %c288_188 = arith.constant 288 : index
    %128 = vector.load %arg14[%c80_187, %c288_188] : memref<96x512xf32, #tpu.memory_space<vmem>>, vector<16x32xf32>
    tpu.vector_store %arg14[%c80_187, %c288_188], %127 {strides = array<i32>} : memref<96x512xf32, #tpu.memory_space<vmem>>, vector<16x32xf32>,
    %c20_189 = arith.constant 20 : index
    %c0_190 = arith.constant 0 : index
    %129 = vector.load %arg13[%c20_189, %c0_190] : memref<504x32xf32, #tpu.memory_space<vmem>>, vector<16x32xf32>
    %c0_191 = arith.constant 0 : index
    %c320 = arith.constant 320 : index
    %130 = vector.load %arg14[%c0_191, %c320] : memref<96x512xf32, #tpu.memory_space<vmem>>, vector<16x32xf32>
    tpu.vector_store %arg14[%c0_191, %c320], %129 {strides = array<i32>} : memref<96x512xf32, #tpu.memory_space<vmem>>, vector<16x32xf32>,
    %c38_192 = arith.constant 38 : index
    %c0_193 = arith.constant 0 : index
    %131 = vector.load %arg13[%c38_192, %c0_193] : memref<504x32xf32, #tpu.memory_space<vmem>>, vector<16x32xf32>
    %c16_194 = arith.constant 16 : index
    %c320_195 = arith.constant 320 : index
    %132 = vector.load %arg14[%c16_194, %c320_195] : memref<96x512xf32, #tpu.memory_space<vmem>>, vector<16x32xf32>
    tpu.vector_store %arg14[%c16_194, %c320_195], %131 {strides = array<i32>} : memref<96x512xf32, #tpu.memory_space<vmem>>, vector<16x32xf32>,
    %c56_196 = arith.constant 56 : index
    %c0_197 = arith.constant 0 : index
    %133 = vector.load %arg13[%c56_196, %c0_197] : memref<504x32xf32, #tpu.memory_space<vmem>>, vector<16x32xf32>
    %c32_198 = arith.constant 32 : index
    %c320_199 = arith.constant 320 : index
    %134 = vector.load %arg14[%c32_198, %c320_199] : memref<96x512xf32, #tpu.memory_space<vmem>>, vector<16x32xf32>
    tpu.vector_store %arg14[%c32_198, %c320_199], %133 {strides = array<i32>} : memref<96x512xf32, #tpu.memory_space<vmem>>, vector<16x32xf32>,
    %c74_200 = arith.constant 74 : index
    %c0_201 = arith.constant 0 : index
    %135 = vector.load %arg13[%c74_200, %c0_201] : memref<504x32xf32, #tpu.memory_space<vmem>>, vector<16x32xf32>
    %c48_202 = arith.constant 48 : index
    %c320_203 = arith.constant 320 : index
    %136 = vector.load %arg14[%c48_202, %c320_203] : memref<96x512xf32, #tpu.memory_space<vmem>>, vector<16x32xf32>
    tpu.vector_store %arg14[%c48_202, %c320_203], %135 {strides = array<i32>} : memref<96x512xf32, #tpu.memory_space<vmem>>, vector<16x32xf32>,
    %c92_204 = arith.constant 92 : index
    %c0_205 = arith.constant 0 : index
    %137 = vector.load %arg13[%c92_204, %c0_205] : memref<504x32xf32, #tpu.memory_space<vmem>>, vector<16x32xf32>
    %c64_206 = arith.constant 64 : index
    %c320_207 = arith.constant 320 : index
    %138 = vector.load %arg14[%c64_206, %c320_207] : memref<96x512xf32, #tpu.memory_space<vmem>>, vector<16x32xf32>
    tpu.vector_store %arg14[%c64_206, %c320_207], %137 {strides = array<i32>} : memref<96x512xf32, #tpu.memory_space<vmem>>, vector<16x32xf32>,
    %c110 = arith.constant 110 : index
    %c0_208 = arith.constant 0 : index
    %139 = vector.load %arg13[%c110, %c0_208] : memref<504x32xf32, #tpu.memory_space<vmem>>, vector<16x32xf32>
    %c80_209 = arith.constant 80 : index
    %c320_210 = arith.constant 320 : index
    %140 = vector.load %arg14[%c80_209, %c320_210] : memref<96x512xf32, #tpu.memory_space<vmem>>, vector<16x32xf32>
    tpu.vector_store %arg14[%c80_209, %c320_210], %139 {strides = array<i32>} : memref<96x512xf32, #tpu.memory_space<vmem>>, vector<16x32xf32>,
    %c146_211 = arith.constant 146 : index
    %c0_212 = arith.constant 0 : index
    %141 = vector.load %arg13[%c146_211, %c0_212] : memref<504x32xf32, #tpu.memory_space<vmem>>, vector<16x32xf32>
    %c0_213 = arith.constant 0 : index
    %c352 = arith.constant 352 : index
    %142 = vector.load %arg14[%c0_213, %c352] : memref<96x512xf32, #tpu.memory_space<vmem>>, vector<16x32xf32>
    tpu.vector_store %arg14[%c0_213, %c352], %141 {strides = array<i32>} : memref<96x512xf32, #tpu.memory_space<vmem>>, vector<16x32xf32>,
    %c164_214 = arith.constant 164 : index
    %c0_215 = arith.constant 0 : index
    %143 = vector.load %arg13[%c164_214, %c0_215] : memref<504x32xf32, #tpu.memory_space<vmem>>, vector<16x32xf32>
    %c16_216 = arith.constant 16 : index
    %c352_217 = arith.constant 352 : index
    %144 = vector.load %arg14[%c16_216, %c352_217] : memref<96x512xf32, #tpu.memory_space<vmem>>, vector<16x32xf32>
    tpu.vector_store %arg14[%c16_216, %c352_217], %143 {strides = array<i32>} : memref<96x512xf32, #tpu.memory_space<vmem>>, vector<16x32xf32>,
    %c182_218 = arith.constant 182 : index
    %c0_219 = arith.constant 0 : index
    %145 = vector.load %arg13[%c182_218, %c0_219] : memref<504x32xf32, #tpu.memory_space<vmem>>, vector<16x32xf32>
    %c32_220 = arith.constant 32 : index
    %c352_221 = arith.constant 352 : index
    %146 = vector.load %arg14[%c32_220, %c352_221] : memref<96x512xf32, #tpu.memory_space<vmem>>, vector<16x32xf32>
    tpu.vector_store %arg14[%c32_220, %c352_221], %145 {strides = array<i32>} : memref<96x512xf32, #tpu.memory_space<vmem>>, vector<16x32xf32>,
    %c200_222 = arith.constant 200 : index
    %c0_223 = arith.constant 0 : index
    %147 = vector.load %arg13[%c200_222, %c0_223] : memref<504x32xf32, #tpu.memory_space<vmem>>, vector<16x32xf32>
    %c48_224 = arith.constant 48 : index
    %c352_225 = arith.constant 352 : index
    %148 = vector.load %arg14[%c48_224, %c352_225] : memref<96x512xf32, #tpu.memory_space<vmem>>, vector<16x32xf32>
    tpu.vector_store %arg14[%c48_224, %c352_225], %147 {strides = array<i32>} : memref<96x512xf32, #tpu.memory_space<vmem>>, vector<16x32xf32>,
    %c218_226 = arith.constant 218 : index
    %c0_227 = arith.constant 0 : index
    %149 = vector.load %arg13[%c218_226, %c0_227] : memref<504x32xf32, #tpu.memory_space<vmem>>, vector<16x32xf32>
    %c64_228 = arith.constant 64 : index
    %c352_229 = arith.constant 352 : index
    %150 = vector.load %arg14[%c64_228, %c352_229] : memref<96x512xf32, #tpu.memory_space<vmem>>, vector<16x32xf32>
    tpu.vector_store %arg14[%c64_228, %c352_229], %149 {strides = array<i32>} : memref<96x512xf32, #tpu.memory_space<vmem>>, vector<16x32xf32>,
    %c236 = arith.constant 236 : index
    %c0_230 = arith.constant 0 : index
    %151 = vector.load %arg13[%c236, %c0_230] : memref<504x32xf32, #tpu.memory_space<vmem>>, vector<16x32xf32>
    %c80_231 = arith.constant 80 : index
    %c352_232 = arith.constant 352 : index
    %152 = vector.load %arg14[%c80_231, %c352_232] : memref<96x512xf32, #tpu.memory_space<vmem>>, vector<16x32xf32>
    tpu.vector_store %arg14[%c80_231, %c352_232], %151 {strides = array<i32>} : memref<96x512xf32, #tpu.memory_space<vmem>>, vector<16x32xf32>,
    %c270_233 = arith.constant 270 : index
    %c0_234 = arith.constant 0 : index
    %153 = vector.load %arg13[%c270_233, %c0_234] : memref<504x32xf32, #tpu.memory_space<vmem>>, vector<16x32xf32>
    %c0_235 = arith.constant 0 : index
    %c384 = arith.constant 384 : index
    %154 = vector.load %arg14[%c0_235, %c384] : memref<96x512xf32, #tpu.memory_space<vmem>>, vector<16x32xf32>
    tpu.vector_store %arg14[%c0_235, %c384], %153 {strides = array<i32>} : memref<96x512xf32, #tpu.memory_space<vmem>>, vector<16x32xf32>,
    %c288_236 = arith.constant 288 : index
    %c0_237 = arith.constant 0 : index
    %155 = vector.load %arg13[%c288_236, %c0_237] : memref<504x32xf32, #tpu.memory_space<vmem>>, vector<16x32xf32>
    %c16_238 = arith.constant 16 : index
    %c384_239 = arith.constant 384 : index
    %156 = vector.load %arg14[%c16_238, %c384_239] : memref<96x512xf32, #tpu.memory_space<vmem>>, vector<16x32xf32>
    tpu.vector_store %arg14[%c16_238, %c384_239], %155 {strides = array<i32>} : memref<96x512xf32, #tpu.memory_space<vmem>>, vector<16x32xf32>,
    %c306_240 = arith.constant 306 : index
    %c0_241 = arith.constant 0 : index
    %157 = vector.load %arg13[%c306_240, %c0_241] : memref<504x32xf32, #tpu.memory_space<vmem>>, vector<16x32xf32>
    %c32_242 = arith.constant 32 : index
    %c384_243 = arith.constant 384 : index
    %158 = vector.load %arg14[%c32_242, %c384_243] : memref<96x512xf32, #tpu.memory_space<vmem>>, vector<16x32xf32>
    tpu.vector_store %arg14[%c32_242, %c384_243], %157 {strides = array<i32>} : memref<96x512xf32, #tpu.memory_space<vmem>>, vector<16x32xf32>,
    %c324_244 = arith.constant 324 : index
    %c0_245 = arith.constant 0 : index
    %159 = vector.load %arg13[%c324_244, %c0_245] : memref<504x32xf32, #tpu.memory_space<vmem>>, vector<16x32xf32>
    %c48_246 = arith.constant 48 : index
    %c384_247 = arith.constant 384 : index
    %160 = vector.load %arg14[%c48_246, %c384_247] : memref<96x512xf32, #tpu.memory_space<vmem>>, vector<16x32xf32>
    tpu.vector_store %arg14[%c48_246, %c384_247], %159 {strides = array<i32>} : memref<96x512xf32, #tpu.memory_space<vmem>>, vector<16x32xf32>,
    %c342_248 = arith.constant 342 : index
    %c0_249 = arith.constant 0 : index
    %161 = vector.load %arg13[%c342_248, %c0_249] : memref<504x32xf32, #tpu.memory_space<vmem>>, vector<16x32xf32>
    %c64_250 = arith.constant 64 : index
    %c384_251 = arith.constant 384 : index
    %162 = vector.load %arg14[%c64_250, %c384_251] : memref<96x512xf32, #tpu.memory_space<vmem>>, vector<16x32xf32>
    tpu.vector_store %arg14[%c64_250, %c384_251], %161 {strides = array<i32>} : memref<96x512xf32, #tpu.memory_space<vmem>>, vector<16x32xf32>,
    %c360 = arith.constant 360 : index
    %c0_252 = arith.constant 0 : index
    %163 = vector.load %arg13[%c360, %c0_252] : memref<504x32xf32, #tpu.memory_space<vmem>>, vector<16x32xf32>
    %c80_253 = arith.constant 80 : index
    %c384_254 = arith.constant 384 : index
    %164 = vector.load %arg14[%c80_253, %c384_254] : memref<96x512xf32, #tpu.memory_space<vmem>>, vector<16x32xf32>
    tpu.vector_store %arg14[%c80_253, %c384_254], %163 {strides = array<i32>} : memref<96x512xf32, #tpu.memory_space<vmem>>, vector<16x32xf32>,
    %c396_255 = arith.constant 396 : index
    %c0_256 = arith.constant 0 : index
    %165 = vector.load %arg13[%c396_255, %c0_256] : memref<504x32xf32, #tpu.memory_space<vmem>>, vector<16x32xf32>
    %c0_257 = arith.constant 0 : index
    %c416_258 = arith.constant 416 : index
    %166 = vector.load %arg14[%c0_257, %c416_258] : memref<96x512xf32, #tpu.memory_space<vmem>>, vector<16x32xf32>
    tpu.vector_store %arg14[%c0_257, %c416_258], %165 {strides = array<i32>} : memref<96x512xf32, #tpu.memory_space<vmem>>, vector<16x32xf32>,
    %c414_259 = arith.constant 414 : index
    %c0_260 = arith.constant 0 : index
    %167 = vector.load %arg13[%c414_259, %c0_260] : memref<504x32xf32, #tpu.memory_space<vmem>>, vector<16x32xf32>
    %c16_261 = arith.constant 16 : index
    %c416_262 = arith.constant 416 : index
    %168 = vector.load %arg14[%c16_261, %c416_262] : memref<96x512xf32, #tpu.memory_space<vmem>>, vector<16x32xf32>
    tpu.vector_store %arg14[%c16_261, %c416_262], %167 {strides = array<i32>} : memref<96x512xf32, #tpu.memory_space<vmem>>, vector<16x32xf32>,
    %c432_263 = arith.constant 432 : index
    %c0_264 = arith.constant 0 : index
    %169 = vector.load %arg13[%c432_263, %c0_264] : memref<504x32xf32, #tpu.memory_space<vmem>>, vector<16x32xf32>
    %c32_265 = arith.constant 32 : index
    %c416_266 = arith.constant 416 : index
    %170 = vector.load %arg14[%c32_265, %c416_266] : memref<96x512xf32, #tpu.memory_space<vmem>>, vector<16x32xf32>
    tpu.vector_store %arg14[%c32_265, %c416_266], %169 {strides = array<i32>} : memref<96x512xf32, #tpu.memory_space<vmem>>, vector<16x32xf32>,
    %c450_267 = arith.constant 450 : index
    %c0_268 = arith.constant 0 : index
    %171 = vector.load %arg13[%c450_267, %c0_268] : memref<504x32xf32, #tpu.memory_space<vmem>>, vector<16x32xf32>
    %c48_269 = arith.constant 48 : index
    %c416_270 = arith.constant 416 : index
    %172 = vector.load %arg14[%c48_269, %c416_270] : memref<96x512xf32, #tpu.memory_space<vmem>>, vector<16x32xf32>
    tpu.vector_store %arg14[%c48_269, %c416_270], %171 {strides = array<i32>} : memref<96x512xf32, #tpu.memory_space<vmem>>, vector<16x32xf32>,
    %c468_271 = arith.constant 468 : index
    %c0_272 = arith.constant 0 : index
    %173 = vector.load %arg13[%c468_271, %c0_272] : memref<504x32xf32, #tpu.memory_space<vmem>>, vector<16x32xf32>
    %c64_273 = arith.constant 64 : index
    %c416_274 = arith.constant 416 : index
    %174 = vector.load %arg14[%c64_273, %c416_274] : memref<96x512xf32, #tpu.memory_space<vmem>>, vector<16x32xf32>
    tpu.vector_store %arg14[%c64_273, %c416_274], %173 {strides = array<i32>} : memref<96x512xf32, #tpu.memory_space<vmem>>, vector<16x32xf32>,
    %c486 = arith.constant 486 : index
    %c0_275 = arith.constant 0 : index
    %175 = vector.load %arg13[%c486, %c0_275] : memref<504x32xf32, #tpu.memory_space<vmem>>, vector<16x32xf32>
    %c80_276 = arith.constant 80 : index
    %c416_277 = arith.constant 416 : index
    %176 = vector.load %arg14[%c80_276, %c416_277] : memref<96x512xf32, #tpu.memory_space<vmem>>, vector<16x32xf32>
    tpu.vector_store %arg14[%c80_276, %c416_277], %175 {strides = array<i32>} : memref<96x512xf32, #tpu.memory_space<vmem>>, vector<16x32xf32>,
    %c272_278 = arith.constant 272 : index
    %c0_279 = arith.constant 0 : index
    %177 = vector.load %arg13[%c272_278, %c0_279] : memref<504x32xf32, #tpu.memory_space<vmem>>, vector<16x32xf32>
    %c0_280 = arith.constant 0 : index
    %c448 = arith.constant 448 : index
    %178 = vector.load %arg14[%c0_280, %c448] : memref<96x512xf32, #tpu.memory_space<vmem>>, vector<16x32xf32>
    tpu.vector_store %arg14[%c0_280, %c448], %177 {strides = array<i32>} : memref<96x512xf32, #tpu.memory_space<vmem>>, vector<16x32xf32>,
    %c290_281 = arith.constant 290 : index
    %c0_282 = arith.constant 0 : index
    %179 = vector.load %arg13[%c290_281, %c0_282] : memref<504x32xf32, #tpu.memory_space<vmem>>, vector<16x32xf32>
    %c16_283 = arith.constant 16 : index
    %c448_284 = arith.constant 448 : index
    %180 = vector.load %arg14[%c16_283, %c448_284] : memref<96x512xf32, #tpu.memory_space<vmem>>, vector<16x32xf32>
    tpu.vector_store %arg14[%c16_283, %c448_284], %179 {strides = array<i32>} : memref<96x512xf32, #tpu.memory_space<vmem>>, vector<16x32xf32>,
    %c308_285 = arith.constant 308 : index
    %c0_286 = arith.constant 0 : index
    %181 = vector.load %arg13[%c308_285, %c0_286] : memref<504x32xf32, #tpu.memory_space<vmem>>, vector<16x32xf32>
    %c32_287 = arith.constant 32 : index
    %c448_288 = arith.constant 448 : index
    %182 = vector.load %arg14[%c32_287, %c448_288] : memref<96x512xf32, #tpu.memory_space<vmem>>, vector<16x32xf32>
    tpu.vector_store %arg14[%c32_287, %c448_288], %181 {strides = array<i32>} : memref<96x512xf32, #tpu.memory_space<vmem>>, vector<16x32xf32>,
    %c326_289 = arith.constant 326 : index
    %c0_290 = arith.constant 0 : index
    %183 = vector.load %arg13[%c326_289, %c0_290] : memref<504x32xf32, #tpu.memory_space<vmem>>, vector<16x32xf32>
    %c48_291 = arith.constant 48 : index
    %c448_292 = arith.constant 448 : index
    %184 = vector.load %arg14[%c48_291, %c448_292] : memref<96x512xf32, #tpu.memory_space<vmem>>, vector<16x32xf32>
    tpu.vector_store %arg14[%c48_291, %c448_292], %183 {strides = array<i32>} : memref<96x512xf32, #tpu.memory_space<vmem>>, vector<16x32xf32>,
    %c344_293 = arith.constant 344 : index
    %c0_294 = arith.constant 0 : index
    %185 = vector.load %arg13[%c344_293, %c0_294] : memref<504x32xf32, #tpu.memory_space<vmem>>, vector<16x32xf32>
    %c64_295 = arith.constant 64 : index
    %c448_296 = arith.constant 448 : index
    %186 = vector.load %arg14[%c64_295, %c448_296] : memref<96x512xf32, #tpu.memory_space<vmem>>, vector<16x32xf32>
    tpu.vector_store %arg14[%c64_295, %c448_296], %185 {strides = array<i32>} : memref<96x512xf32, #tpu.memory_space<vmem>>, vector<16x32xf32>,
    %c362 = arith.constant 362 : index
    %c0_297 = arith.constant 0 : index
    %187 = vector.load %arg13[%c362, %c0_297] : memref<504x32xf32, #tpu.memory_space<vmem>>, vector<16x32xf32>
    %c80_298 = arith.constant 80 : index
    %c448_299 = arith.constant 448 : index
    %188 = vector.load %arg14[%c80_298, %c448_299] : memref<96x512xf32, #tpu.memory_space<vmem>>, vector<16x32xf32>
    tpu.vector_store %arg14[%c80_298, %c448_299], %187 {strides = array<i32>} : memref<96x512xf32, #tpu.memory_space<vmem>>, vector<16x32xf32>,
    %c398_300 = arith.constant 398 : index
    %c0_301 = arith.constant 0 : index
    %189 = vector.load %arg13[%c398_300, %c0_301] : memref<504x32xf32, #tpu.memory_space<vmem>>, vector<16x32xf32>
    %c0_302 = arith.constant 0 : index
    %c480 = arith.constant 480 : index
    %190 = vector.load %arg14[%c0_302, %c480] : memref<96x512xf32, #tpu.memory_space<vmem>>, vector<16x32xf32>
    tpu.vector_store %arg14[%c0_302, %c480], %189 {strides = array<i32>} : memref<96x512xf32, #tpu.memory_space<vmem>>, vector<16x32xf32>,
    %c416_303 = arith.constant 416 : index
    %c0_304 = arith.constant 0 : index
    %191 = vector.load %arg13[%c416_303, %c0_304] : memref<504x32xf32, #tpu.memory_space<vmem>>, vector<16x32xf32>
    %c16_305 = arith.constant 16 : index
    %c480_306 = arith.constant 480 : index
    %192 = vector.load %arg14[%c16_305, %c480_306] : memref<96x512xf32, #tpu.memory_space<vmem>>, vector<16x32xf32>
    tpu.vector_store %arg14[%c16_305, %c480_306], %191 {strides = array<i32>} : memref<96x512xf32, #tpu.memory_space<vmem>>, vector<16x32xf32>,
    %c434_307 = arith.constant 434 : index
    %c0_308 = arith.constant 0 : index
    %193 = vector.load %arg13[%c434_307, %c0_308] : memref<504x32xf32, #tpu.memory_space<vmem>>, vector<16x32xf32>
    %c32_309 = arith.constant 32 : index
    %c480_310 = arith.constant 480 : index
    %194 = vector.load %arg14[%c32_309, %c480_310] : memref<96x512xf32, #tpu.memory_space<vmem>>, vector<16x32xf32>
    tpu.vector_store %arg14[%c32_309, %c480_310], %193 {strides = array<i32>} : memref<96x512xf32, #tpu.memory_space<vmem>>, vector<16x32xf32>,
    %c452_311 = arith.constant 452 : index
    %c0_312 = arith.constant 0 : index
    %195 = vector.load %arg13[%c452_311, %c0_312] : memref<504x32xf32, #tpu.memory_space<vmem>>, vector<16x32xf32>
    %c48_313 = arith.constant 48 : index
    %c480_314 = arith.constant 480 : index
    %196 = vector.load %arg14[%c48_313, %c480_314] : memref<96x512xf32, #tpu.memory_space<vmem>>, vector<16x32xf32>
    tpu.vector_store %arg14[%c48_313, %c480_314], %195 {strides = array<i32>} : memref<96x512xf32, #tpu.memory_space<vmem>>, vector<16x32xf32>,
    %c470_315 = arith.constant 470 : index
    %c0_316 = arith.constant 0 : index
    %197 = vector.load %arg13[%c470_315, %c0_316] : memref<504x32xf32, #tpu.memory_space<vmem>>, vector<16x32xf32>
    %c64_317 = arith.constant 64 : index
    %c480_318 = arith.constant 480 : index
    %198 = vector.load %arg14[%c64_317, %c480_318] : memref<96x512xf32, #tpu.memory_space<vmem>>, vector<16x32xf32>
    tpu.vector_store %arg14[%c64_317, %c480_318], %197 {strides = array<i32>} : memref<96x512xf32, #tpu.memory_space<vmem>>, vector<16x32xf32>,
    %c488 = arith.constant 488 : index
    %c0_319 = arith.constant 0 : index
    %199 = vector.load %arg13[%c488, %c0_319] : memref<504x32xf32, #tpu.memory_space<vmem>>, vector<16x32xf32>
    %c80_320 = arith.constant 80 : index
    %c480_321 = arith.constant 480 : index
    %200 = vector.load %arg14[%c80_320, %c480_321] : memref<96x512xf32, #tpu.memory_space<vmem>>, vector<16x32xf32>
    tpu.vector_store %arg14[%c80_320, %c480_321], %199 {strides = array<i32>} : memref<96x512xf32, #tpu.memory_space<vmem>>, vector<16x32xf32>,
    %c0_322 = arith.constant 0 : index
    %c0_323 = arith.constant 0 : index
    %201 = vector.load %arg14[%c0_322, %c0_323] : memref<96x512xf32, #tpu.memory_space<vmem>>, vector<96x512xf32>
    %202 = arith.truncf %201 : vector<96x512xf32> to vector<96x512xbf16>
    %c0_324 = arith.constant 0 : index
    %c0_325 = arith.constant 0 : index
    %203 = vector.load %arg4[%c0_324, %c0_325] : memref<512x64xbf16, #tpu.memory_space<vmem>>, vector<512x64xbf16>
    %cst_326 = arith.constant dense<0.000000e+00> : vector<96x64xf32>
    %204 = tpu.matmul %202, %203, %cst_326 {dimension_numbers = #tpu.dot_dimension_numbers<[1], [0], [0], [1], [0, 0, 1, 1], [], []>} : vector<96x512xbf16>, vector<512x64xbf16>, vector<96x64xf32> -> vector<96x64xf32>
    %c0_327 = arith.constant 0 : index
    %c0_328 = arith.constant 0 : index
    %205 = vector.load %arg5[%c0_327, %c0_328] : memref<1x64xf32, #tpu.memory_space<vmem>>, vector<1x64xf32>
    %206 = vector.broadcast %205 : vector<1x64xf32> to vector<96x64xf32>
    %207 = arith.addf %204, %206 : vector<96x64xf32>
    %cst_329 = arith.constant 0.000000e+00 : f32
    %208 = vector.broadcast %cst_329 : f32 to vector<96x64xf32>
    %209 = arith.maximumf %207, %208 : vector<96x64xf32>
    %c0_330 = arith.constant 0 : index
    %c0_331 = arith.constant 0 : index
    %210 = vector.load %arg15[%c0_330, %c0_331] : memref<96x64xf32, #tpu.memory_space<vmem>>, vector<96x64xf32>
    tpu.vector_store %arg15[%c0_330, %c0_331], %209 {strides = array<i32>} : memref<96x64xf32, #tpu.memory_space<vmem>>, vector<96x64xf32>,
    %c0_332 = arith.constant 0 : index
    %c0_333 = arith.constant 0 : index
    %211 = vector.load %arg15[%c0_332, %c0_333] : memref<96x64xf32, #tpu.memory_space<vmem>>, vector<12x64xf32>
    %c0_334 = arith.constant 0 : index
    %c0_335 = arith.constant 0 : index
    %212 = vector.load %arg16[%c0_334, %c0_335] : memref<48x576xf32, #tpu.memory_space<vmem>>, vector<12x64xf32>
    tpu.vector_store %arg16[%c0_334, %c0_335], %211 {strides = array<i32>} : memref<48x576xf32, #tpu.memory_space<vmem>>, vector<12x64xf32>,
    %c16_336 = arith.constant 16 : index
    %c0_337 = arith.constant 0 : index
    %213 = vector.load %arg15[%c16_336, %c0_337] : memref<96x64xf32, #tpu.memory_space<vmem>>, vector<12x64xf32>
    %c12 = arith.constant 12 : index
    %c0_338 = arith.constant 0 : index
    %214 = vector.load %arg16[%c12, %c0_338] : memref<48x576xf32, #tpu.memory_space<vmem>>, vector<12x64xf32>
    tpu.vector_store %arg16[%c12, %c0_338], %213 {strides = array<i32>} : memref<48x576xf32, #tpu.memory_space<vmem>>, vector<12x64xf32>,
    %c32_339 = arith.constant 32 : index
    %c0_340 = arith.constant 0 : index
    %215 = vector.load %arg15[%c32_339, %c0_340] : memref<96x64xf32, #tpu.memory_space<vmem>>, vector<12x64xf32>
    %c24 = arith.constant 24 : index
    %c0_341 = arith.constant 0 : index
    %216 = vector.load %arg16[%c24, %c0_341] : memref<48x576xf32, #tpu.memory_space<vmem>>, vector<12x64xf32>
    tpu.vector_store %arg16[%c24, %c0_341], %215 {strides = array<i32>} : memref<48x576xf32, #tpu.memory_space<vmem>>, vector<12x64xf32>,
    %c48_342 = arith.constant 48 : index
    %c0_343 = arith.constant 0 : index
    %217 = vector.load %arg15[%c48_342, %c0_343] : memref<96x64xf32, #tpu.memory_space<vmem>>, vector<12x64xf32>
    %c36_344 = arith.constant 36 : index
    %c0_345 = arith.constant 0 : index
    %218 = vector.load %arg16[%c36_344, %c0_345] : memref<48x576xf32, #tpu.memory_space<vmem>>, vector<12x64xf32>
    tpu.vector_store %arg16[%c36_344, %c0_345], %217 {strides = array<i32>} : memref<48x576xf32, #tpu.memory_space<vmem>>, vector<12x64xf32>,
    %c2_346 = arith.constant 2 : index
    %c0_347 = arith.constant 0 : index
    %219 = vector.load %arg15[%c2_346, %c0_347] : memref<96x64xf32, #tpu.memory_space<vmem>>, vector<12x64xf32>
    %c0_348 = arith.constant 0 : index
    %c64_349 = arith.constant 64 : index
    %220 = vector.load %arg16[%c0_348, %c64_349] : memref<48x576xf32, #tpu.memory_space<vmem>>, vector<12x64xf32>
    tpu.vector_store %arg16[%c0_348, %c64_349], %219 {strides = array<i32>} : memref<48x576xf32, #tpu.memory_space<vmem>>, vector<12x64xf32>,
    %c18_350 = arith.constant 18 : index
    %c0_351 = arith.constant 0 : index
    %221 = vector.load %arg15[%c18_350, %c0_351] : memref<96x64xf32, #tpu.memory_space<vmem>>, vector<12x64xf32>
    %c12_352 = arith.constant 12 : index
    %c64_353 = arith.constant 64 : index
    %222 = vector.load %arg16[%c12_352, %c64_353] : memref<48x576xf32, #tpu.memory_space<vmem>>, vector<12x64xf32>
    tpu.vector_store %arg16[%c12_352, %c64_353], %221 {strides = array<i32>} : memref<48x576xf32, #tpu.memory_space<vmem>>, vector<12x64xf32>,
    %c34 = arith.constant 34 : index
    %c0_354 = arith.constant 0 : index
    %223 = vector.load %arg15[%c34, %c0_354] : memref<96x64xf32, #tpu.memory_space<vmem>>, vector<12x64xf32>
    %c24_355 = arith.constant 24 : index
    %c64_356 = arith.constant 64 : index
    %224 = vector.load %arg16[%c24_355, %c64_356] : memref<48x576xf32, #tpu.memory_space<vmem>>, vector<12x64xf32>
    tpu.vector_store %arg16[%c24_355, %c64_356], %223 {strides = array<i32>} : memref<48x576xf32, #tpu.memory_space<vmem>>, vector<12x64xf32>,
    %c50 = arith.constant 50 : index
    %c0_357 = arith.constant 0 : index
    %225 = vector.load %arg15[%c50, %c0_357] : memref<96x64xf32, #tpu.memory_space<vmem>>, vector<12x64xf32>
    %c36_358 = arith.constant 36 : index
    %c64_359 = arith.constant 64 : index
    %226 = vector.load %arg16[%c36_358, %c64_359] : memref<48x576xf32, #tpu.memory_space<vmem>>, vector<12x64xf32>
    tpu.vector_store %arg16[%c36_358, %c64_359], %225 {strides = array<i32>} : memref<48x576xf32, #tpu.memory_space<vmem>>, vector<12x64xf32>,
    %c4 = arith.constant 4 : index
    %c0_360 = arith.constant 0 : index
    %227 = vector.load %arg15[%c4, %c0_360] : memref<96x64xf32, #tpu.memory_space<vmem>>, vector<12x64xf32>
    %c0_361 = arith.constant 0 : index
    %c128_362 = arith.constant 128 : index
    %228 = vector.load %arg16[%c0_361, %c128_362] : memref<48x576xf32, #tpu.memory_space<vmem>>, vector<12x64xf32>
    tpu.vector_store %arg16[%c0_361, %c128_362], %227 {strides = array<i32>} : memref<48x576xf32, #tpu.memory_space<vmem>>, vector<12x64xf32>,
    %c20_363 = arith.constant 20 : index
    %c0_364 = arith.constant 0 : index
    %229 = vector.load %arg15[%c20_363, %c0_364] : memref<96x64xf32, #tpu.memory_space<vmem>>, vector<12x64xf32>
    %c12_365 = arith.constant 12 : index
    %c128_366 = arith.constant 128 : index
    %230 = vector.load %arg16[%c12_365, %c128_366] : memref<48x576xf32, #tpu.memory_space<vmem>>, vector<12x64xf32>
    tpu.vector_store %arg16[%c12_365, %c128_366], %229 {strides = array<i32>} : memref<48x576xf32, #tpu.memory_space<vmem>>, vector<12x64xf32>,
    %c36_367 = arith.constant 36 : index
    %c0_368 = arith.constant 0 : index
    %231 = vector.load %arg15[%c36_367, %c0_368] : memref<96x64xf32, #tpu.memory_space<vmem>>, vector<12x64xf32>
    %c24_369 = arith.constant 24 : index
    %c128_370 = arith.constant 128 : index
    %232 = vector.load %arg16[%c24_369, %c128_370] : memref<48x576xf32, #tpu.memory_space<vmem>>, vector<12x64xf32>
    tpu.vector_store %arg16[%c24_369, %c128_370], %231 {strides = array<i32>} : memref<48x576xf32, #tpu.memory_space<vmem>>, vector<12x64xf32>,
    %c52 = arith.constant 52 : index
    %c0_371 = arith.constant 0 : index
    %233 = vector.load %arg15[%c52, %c0_371] : memref<96x64xf32, #tpu.memory_space<vmem>>, vector<12x64xf32>
    %c36_372 = arith.constant 36 : index
    %c128_373 = arith.constant 128 : index
    %234 = vector.load %arg16[%c36_372, %c128_373] : memref<48x576xf32, #tpu.memory_space<vmem>>, vector<12x64xf32>
    tpu.vector_store %arg16[%c36_372, %c128_373], %233 {strides = array<i32>} : memref<48x576xf32, #tpu.memory_space<vmem>>, vector<12x64xf32>,
    %c16_374 = arith.constant 16 : index
    %c0_375 = arith.constant 0 : index
    %235 = vector.load %arg15[%c16_374, %c0_375] : memref<96x64xf32, #tpu.memory_space<vmem>>, vector<12x64xf32>
    %c0_376 = arith.constant 0 : index
    %c192_377 = arith.constant 192 : index
    %236 = vector.load %arg16[%c0_376, %c192_377] : memref<48x576xf32, #tpu.memory_space<vmem>>, vector<12x64xf32>
    tpu.vector_store %arg16[%c0_376, %c192_377], %235 {strides = array<i32>} : memref<48x576xf32, #tpu.memory_space<vmem>>, vector<12x64xf32>,
    %c32_378 = arith.constant 32 : index
    %c0_379 = arith.constant 0 : index
    %237 = vector.load %arg15[%c32_378, %c0_379] : memref<96x64xf32, #tpu.memory_space<vmem>>, vector<12x64xf32>
    %c12_380 = arith.constant 12 : index
    %c192_381 = arith.constant 192 : index
    %238 = vector.load %arg16[%c12_380, %c192_381] : memref<48x576xf32, #tpu.memory_space<vmem>>, vector<12x64xf32>
    tpu.vector_store %arg16[%c12_380, %c192_381], %237 {strides = array<i32>} : memref<48x576xf32, #tpu.memory_space<vmem>>, vector<12x64xf32>,
    %c48_382 = arith.constant 48 : index
    %c0_383 = arith.constant 0 : index
    %239 = vector.load %arg15[%c48_382, %c0_383] : memref<96x64xf32, #tpu.memory_space<vmem>>, vector<12x64xf32>
    %c24_384 = arith.constant 24 : index
    %c192_385 = arith.constant 192 : index
    %240 = vector.load %arg16[%c24_384, %c192_385] : memref<48x576xf32, #tpu.memory_space<vmem>>, vector<12x64xf32>
    tpu.vector_store %arg16[%c24_384, %c192_385], %239 {strides = array<i32>} : memref<48x576xf32, #tpu.memory_space<vmem>>, vector<12x64xf32>,
    %c64_386 = arith.constant 64 : index
    %c0_387 = arith.constant 0 : index
    %241 = vector.load %arg15[%c64_386, %c0_387] : memref<96x64xf32, #tpu.memory_space<vmem>>, vector<12x64xf32>
    %c36_388 = arith.constant 36 : index
    %c192_389 = arith.constant 192 : index
    %242 = vector.load %arg16[%c36_388, %c192_389] : memref<48x576xf32, #tpu.memory_space<vmem>>, vector<12x64xf32>
    tpu.vector_store %arg16[%c36_388, %c192_389], %241 {strides = array<i32>} : memref<48x576xf32, #tpu.memory_space<vmem>>, vector<12x64xf32>,
    %c18_390 = arith.constant 18 : index
    %c0_391 = arith.constant 0 : index
    %243 = vector.load %arg15[%c18_390, %c0_391] : memref<96x64xf32, #tpu.memory_space<vmem>>, vector<12x64xf32>
    %c0_392 = arith.constant 0 : index
    %c256_393 = arith.constant 256 : index
    %244 = vector.load %arg16[%c0_392, %c256_393] : memref<48x576xf32, #tpu.memory_space<vmem>>, vector<12x64xf32>
    tpu.vector_store %arg16[%c0_392, %c256_393], %243 {strides = array<i32>} : memref<48x576xf32, #tpu.memory_space<vmem>>, vector<12x64xf32>,
    %c34_394 = arith.constant 34 : index
    %c0_395 = arith.constant 0 : index
    %245 = vector.load %arg15[%c34_394, %c0_395] : memref<96x64xf32, #tpu.memory_space<vmem>>, vector<12x64xf32>
    %c12_396 = arith.constant 12 : index
    %c256_397 = arith.constant 256 : index
    %246 = vector.load %arg16[%c12_396, %c256_397] : memref<48x576xf32, #tpu.memory_space<vmem>>, vector<12x64xf32>
    tpu.vector_store %arg16[%c12_396, %c256_397], %245 {strides = array<i32>} : memref<48x576xf32, #tpu.memory_space<vmem>>, vector<12x64xf32>,
    %c50_398 = arith.constant 50 : index
    %c0_399 = arith.constant 0 : index
    %247 = vector.load %arg15[%c50_398, %c0_399] : memref<96x64xf32, #tpu.memory_space<vmem>>, vector<12x64xf32>
    %c24_400 = arith.constant 24 : index
    %c256_401 = arith.constant 256 : index
    %248 = vector.load %arg16[%c24_400, %c256_401] : memref<48x576xf32, #tpu.memory_space<vmem>>, vector<12x64xf32>
    tpu.vector_store %arg16[%c24_400, %c256_401], %247 {strides = array<i32>} : memref<48x576xf32, #tpu.memory_space<vmem>>, vector<12x64xf32>,
    %c66 = arith.constant 66 : index
    %c0_402 = arith.constant 0 : index
    %249 = vector.load %arg15[%c66, %c0_402] : memref<96x64xf32, #tpu.memory_space<vmem>>, vector<12x64xf32>
    %c36_403 = arith.constant 36 : index
    %c256_404 = arith.constant 256 : index
    %250 = vector.load %arg16[%c36_403, %c256_404] : memref<48x576xf32, #tpu.memory_space<vmem>>, vector<12x64xf32>
    tpu.vector_store %arg16[%c36_403, %c256_404], %249 {strides = array<i32>} : memref<48x576xf32, #tpu.memory_space<vmem>>, vector<12x64xf32>,
    %c20_405 = arith.constant 20 : index
    %c0_406 = arith.constant 0 : index
    %251 = vector.load %arg15[%c20_405, %c0_406] : memref<96x64xf32, #tpu.memory_space<vmem>>, vector<12x64xf32>
    %c0_407 = arith.constant 0 : index
    %c320_408 = arith.constant 320 : index
    %252 = vector.load %arg16[%c0_407, %c320_408] : memref<48x576xf32, #tpu.memory_space<vmem>>, vector<12x64xf32>
    tpu.vector_store %arg16[%c0_407, %c320_408], %251 {strides = array<i32>} : memref<48x576xf32, #tpu.memory_space<vmem>>, vector<12x64xf32>,
    %c36_409 = arith.constant 36 : index
    %c0_410 = arith.constant 0 : index
    %253 = vector.load %arg15[%c36_409, %c0_410] : memref<96x64xf32, #tpu.memory_space<vmem>>, vector<12x64xf32>
    %c12_411 = arith.constant 12 : index
    %c320_412 = arith.constant 320 : index
    %254 = vector.load %arg16[%c12_411, %c320_412] : memref<48x576xf32, #tpu.memory_space<vmem>>, vector<12x64xf32>
    tpu.vector_store %arg16[%c12_411, %c320_412], %253 {strides = array<i32>} : memref<48x576xf32, #tpu.memory_space<vmem>>, vector<12x64xf32>,
    %c52_413 = arith.constant 52 : index
    %c0_414 = arith.constant 0 : index
    %255 = vector.load %arg15[%c52_413, %c0_414] : memref<96x64xf32, #tpu.memory_space<vmem>>, vector<12x64xf32>
    %c24_415 = arith.constant 24 : index
    %c320_416 = arith.constant 320 : index
    %256 = vector.load %arg16[%c24_415, %c320_416] : memref<48x576xf32, #tpu.memory_space<vmem>>, vector<12x64xf32>
    tpu.vector_store %arg16[%c24_415, %c320_416], %255 {strides = array<i32>} : memref<48x576xf32, #tpu.memory_space<vmem>>, vector<12x64xf32>,
    %c68 = arith.constant 68 : index
    %c0_417 = arith.constant 0 : index
    %257 = vector.load %arg15[%c68, %c0_417] : memref<96x64xf32, #tpu.memory_space<vmem>>, vector<12x64xf32>
    %c36_418 = arith.constant 36 : index
    %c320_419 = arith.constant 320 : index
    %258 = vector.load %arg16[%c36_418, %c320_419] : memref<48x576xf32, #tpu.memory_space<vmem>>, vector<12x64xf32>
    tpu.vector_store %arg16[%c36_418, %c320_419], %257 {strides = array<i32>} : memref<48x576xf32, #tpu.memory_space<vmem>>, vector<12x64xf32>,
    %c32_420 = arith.constant 32 : index
    %c0_421 = arith.constant 0 : index
    %259 = vector.load %arg15[%c32_420, %c0_421] : memref<96x64xf32, #tpu.memory_space<vmem>>, vector<12x64xf32>
    %c0_422 = arith.constant 0 : index
    %c384_423 = arith.constant 384 : index
    %260 = vector.load %arg16[%c0_422, %c384_423] : memref<48x576xf32, #tpu.memory_space<vmem>>, vector<12x64xf32>
    tpu.vector_store %arg16[%c0_422, %c384_423], %259 {strides = array<i32>} : memref<48x576xf32, #tpu.memory_space<vmem>>, vector<12x64xf32>,
    %c48_424 = arith.constant 48 : index
    %c0_425 = arith.constant 0 : index
    %261 = vector.load %arg15[%c48_424, %c0_425] : memref<96x64xf32, #tpu.memory_space<vmem>>, vector<12x64xf32>
    %c12_426 = arith.constant 12 : index
    %c384_427 = arith.constant 384 : index
    %262 = vector.load %arg16[%c12_426, %c384_427] : memref<48x576xf32, #tpu.memory_space<vmem>>, vector<12x64xf32>
    tpu.vector_store %arg16[%c12_426, %c384_427], %261 {strides = array<i32>} : memref<48x576xf32, #tpu.memory_space<vmem>>, vector<12x64xf32>,
    %c64_428 = arith.constant 64 : index
    %c0_429 = arith.constant 0 : index
    %263 = vector.load %arg15[%c64_428, %c0_429] : memref<96x64xf32, #tpu.memory_space<vmem>>, vector<12x64xf32>
    %c24_430 = arith.constant 24 : index
    %c384_431 = arith.constant 384 : index
    %264 = vector.load %arg16[%c24_430, %c384_431] : memref<48x576xf32, #tpu.memory_space<vmem>>, vector<12x64xf32>
    tpu.vector_store %arg16[%c24_430, %c384_431], %263 {strides = array<i32>} : memref<48x576xf32, #tpu.memory_space<vmem>>, vector<12x64xf32>,
    %c80_432 = arith.constant 80 : index
    %c0_433 = arith.constant 0 : index
    %265 = vector.load %arg15[%c80_432, %c0_433] : memref<96x64xf32, #tpu.memory_space<vmem>>, vector<12x64xf32>
    %c36_434 = arith.constant 36 : index
    %c384_435 = arith.constant 384 : index
    %266 = vector.load %arg16[%c36_434, %c384_435] : memref<48x576xf32, #tpu.memory_space<vmem>>, vector<12x64xf32>
    tpu.vector_store %arg16[%c36_434, %c384_435], %265 {strides = array<i32>} : memref<48x576xf32, #tpu.memory_space<vmem>>, vector<12x64xf32>,
    %c34_436 = arith.constant 34 : index
    %c0_437 = arith.constant 0 : index
    %267 = vector.load %arg15[%c34_436, %c0_437] : memref<96x64xf32, #tpu.memory_space<vmem>>, vector<12x64xf32>
    %c0_438 = arith.constant 0 : index
    %c448_439 = arith.constant 448 : index
    %268 = vector.load %arg16[%c0_438, %c448_439] : memref<48x576xf32, #tpu.memory_space<vmem>>, vector<12x64xf32>
    tpu.vector_store %arg16[%c0_438, %c448_439], %267 {strides = array<i32>} : memref<48x576xf32, #tpu.memory_space<vmem>>, vector<12x64xf32>,
    %c50_440 = arith.constant 50 : index
    %c0_441 = arith.constant 0 : index
    %269 = vector.load %arg15[%c50_440, %c0_441] : memref<96x64xf32, #tpu.memory_space<vmem>>, vector<12x64xf32>
    %c12_442 = arith.constant 12 : index
    %c448_443 = arith.constant 448 : index
    %270 = vector.load %arg16[%c12_442, %c448_443] : memref<48x576xf32, #tpu.memory_space<vmem>>, vector<12x64xf32>
    tpu.vector_store %arg16[%c12_442, %c448_443], %269 {strides = array<i32>} : memref<48x576xf32, #tpu.memory_space<vmem>>, vector<12x64xf32>,
    %c66_444 = arith.constant 66 : index
    %c0_445 = arith.constant 0 : index
    %271 = vector.load %arg15[%c66_444, %c0_445] : memref<96x64xf32, #tpu.memory_space<vmem>>, vector<12x64xf32>
    %c24_446 = arith.constant 24 : index
    %c448_447 = arith.constant 448 : index
    %272 = vector.load %arg16[%c24_446, %c448_447] : memref<48x576xf32, #tpu.memory_space<vmem>>, vector<12x64xf32>
    tpu.vector_store %arg16[%c24_446, %c448_447], %271 {strides = array<i32>} : memref<48x576xf32, #tpu.memory_space<vmem>>, vector<12x64xf32>,
    %c82 = arith.constant 82 : index
    %c0_448 = arith.constant 0 : index
    %273 = vector.load %arg15[%c82, %c0_448] : memref<96x64xf32, #tpu.memory_space<vmem>>, vector<12x64xf32>
    %c36_449 = arith.constant 36 : index
    %c448_450 = arith.constant 448 : index
    %274 = vector.load %arg16[%c36_449, %c448_450] : memref<48x576xf32, #tpu.memory_space<vmem>>, vector<12x64xf32>
    tpu.vector_store %arg16[%c36_449, %c448_450], %273 {strides = array<i32>} : memref<48x576xf32, #tpu.memory_space<vmem>>, vector<12x64xf32>,
    %c36_451 = arith.constant 36 : index
    %c0_452 = arith.constant 0 : index
    %275 = vector.load %arg15[%c36_451, %c0_452] : memref<96x64xf32, #tpu.memory_space<vmem>>, vector<12x64xf32>
    %c0_453 = arith.constant 0 : index
    %c512 = arith.constant 512 : index
    %276 = vector.load %arg16[%c0_453, %c512] : memref<48x576xf32, #tpu.memory_space<vmem>>, vector<12x64xf32>
    tpu.vector_store %arg16[%c0_453, %c512], %275 {strides = array<i32>} : memref<48x576xf32, #tpu.memory_space<vmem>>, vector<12x64xf32>,
    %c52_454 = arith.constant 52 : index
    %c0_455 = arith.constant 0 : index
    %277 = vector.load %arg15[%c52_454, %c0_455] : memref<96x64xf32, #tpu.memory_space<vmem>>, vector<12x64xf32>
    %c12_456 = arith.constant 12 : index
    %c512_457 = arith.constant 512 : index
    %278 = vector.load %arg16[%c12_456, %c512_457] : memref<48x576xf32, #tpu.memory_space<vmem>>, vector<12x64xf32>
    tpu.vector_store %arg16[%c12_456, %c512_457], %277 {strides = array<i32>} : memref<48x576xf32, #tpu.memory_space<vmem>>, vector<12x64xf32>,
    %c68_458 = arith.constant 68 : index
    %c0_459 = arith.constant 0 : index
    %279 = vector.load %arg15[%c68_458, %c0_459] : memref<96x64xf32, #tpu.memory_space<vmem>>, vector<12x64xf32>
    %c24_460 = arith.constant 24 : index
    %c512_461 = arith.constant 512 : index
    %280 = vector.load %arg16[%c24_460, %c512_461] : memref<48x576xf32, #tpu.memory_space<vmem>>, vector<12x64xf32>
    tpu.vector_store %arg16[%c24_460, %c512_461], %279 {strides = array<i32>} : memref<48x576xf32, #tpu.memory_space<vmem>>, vector<12x64xf32>,
    %c84 = arith.constant 84 : index
    %c0_462 = arith.constant 0 : index
    %281 = vector.load %arg15[%c84, %c0_462] : memref<96x64xf32, #tpu.memory_space<vmem>>, vector<12x64xf32>
    %c36_463 = arith.constant 36 : index
    %c512_464 = arith.constant 512 : index
    %282 = vector.load %arg16[%c36_463, %c512_464] : memref<48x576xf32, #tpu.memory_space<vmem>>, vector<12x64xf32>
    tpu.vector_store %arg16[%c36_463, %c512_464], %281 {strides = array<i32>} : memref<48x576xf32, #tpu.memory_space<vmem>>, vector<12x64xf32>,
    %c0_465 = arith.constant 0 : index
    %c0_466 = arith.constant 0 : index
    %283 = vector.load %arg16[%c0_465, %c0_466] : memref<48x576xf32, #tpu.memory_space<vmem>>, vector<48x576xf32>
    %284 = arith.truncf %283 : vector<48x576xf32> to vector<48x576xbf16>
    %c0_467 = arith.constant 0 : index
    %c0_468 = arith.constant 0 : index
    %285 = vector.load %arg6[%c0_467, %c0_468] : memref<576x64xbf16, #tpu.memory_space<vmem>>, vector<576x64xbf16>
    %cst_469 = arith.constant dense<0.000000e+00> : vector<48x64xf32>
    %286 = tpu.matmul %284, %285, %cst_469 {dimension_numbers = #tpu.dot_dimension_numbers<[1], [0], [0], [1], [0, 0, 1, 1], [], []>} : vector<48x576xbf16>, vector<576x64xbf16>, vector<48x64xf32> -> vector<48x64xf32>
    %c0_470 = arith.constant 0 : index
    %c0_471 = arith.constant 0 : index
    %287 = vector.load %arg7[%c0_470, %c0_471] : memref<1x64xf32, #tpu.memory_space<vmem>>, vector<1x64xf32>
    %288 = vector.broadcast %287 : vector<1x64xf32> to vector<48x64xf32>
    %289 = arith.addf %286, %288 : vector<48x64xf32>
    %cst_472 = arith.constant 0.000000e+00 : f32
    %290 = vector.broadcast %cst_472 : f32 to vector<48x64xf32>
    %291 = arith.maximumf %289, %290 : vector<48x64xf32>
    %c0_473 = arith.constant 0 : index
    %c0_474 = arith.constant 0 : index
    %292 = vector.load %arg17[%c0_473, %c0_474] : memref<48x64xf32, #tpu.memory_space<vmem>>, vector<48x64xf32>
    tpu.vector_store %arg17[%c0_473, %c0_474], %291 {strides = array<i32>} : memref<48x64xf32, #tpu.memory_space<vmem>>, vector<48x64xf32>,
    %c0_475 = arith.constant 0 : index
    %c0_476 = arith.constant 0 : index
    %293 = vector.load %arg17[%c0_475, %c0_476] : memref<48x64xf32, #tpu.memory_space<vmem>>, vector<2x64xf32>
    %c0_477 = arith.constant 0 : index
    %c0_478 = arith.constant 0 : index
    %294 = vector.load %arg18[%c0_477, %c0_478] : memref<2x1536xf32, #tpu.memory_space<vmem>>, vector<2x64xf32>
    tpu.vector_store %arg18[%c0_477, %c0_478], %293 {strides = array<i32>} : memref<2x1536xf32, #tpu.memory_space<vmem>>, vector<2x64xf32>,
    %c2_479 = arith.constant 2 : index
    %c0_480 = arith.constant 0 : index
    %295 = vector.load %arg17[%c2_479, %c0_480] : memref<48x64xf32, #tpu.memory_space<vmem>>, vector<2x64xf32>
    %c0_481 = arith.constant 0 : index
    %c64_482 = arith.constant 64 : index
    %296 = vector.load %arg18[%c0_481, %c64_482] : memref<2x1536xf32, #tpu.memory_space<vmem>>, vector<2x64xf32>
    tpu.vector_store %arg18[%c0_481, %c64_482], %295 {strides = array<i32>} : memref<2x1536xf32, #tpu.memory_space<vmem>>, vector<2x64xf32>,
    %c4_483 = arith.constant 4 : index
    %c0_484 = arith.constant 0 : index
    %297 = vector.load %arg17[%c4_483, %c0_484] : memref<48x64xf32, #tpu.memory_space<vmem>>, vector<2x64xf32>
    %c0_485 = arith.constant 0 : index
    %c128_486 = arith.constant 128 : index
    %298 = vector.load %arg18[%c0_485, %c128_486] : memref<2x1536xf32, #tpu.memory_space<vmem>>, vector<2x64xf32>
    tpu.vector_store %arg18[%c0_485, %c128_486], %297 {strides = array<i32>} : memref<2x1536xf32, #tpu.memory_space<vmem>>, vector<2x64xf32>,
    %c6 = arith.constant 6 : index
    %c0_487 = arith.constant 0 : index
    %299 = vector.load %arg17[%c6, %c0_487] : memref<48x64xf32, #tpu.memory_space<vmem>>, vector<2x64xf32>
    %c0_488 = arith.constant 0 : index
    %c192_489 = arith.constant 192 : index
    %300 = vector.load %arg18[%c0_488, %c192_489] : memref<2x1536xf32, #tpu.memory_space<vmem>>, vector<2x64xf32>
    tpu.vector_store %arg18[%c0_488, %c192_489], %299 {strides = array<i32>} : memref<2x1536xf32, #tpu.memory_space<vmem>>, vector<2x64xf32>,
    %c8 = arith.constant 8 : index
    %c0_490 = arith.constant 0 : index
    %301 = vector.load %arg17[%c8, %c0_490] : memref<48x64xf32, #tpu.memory_space<vmem>>, vector<2x64xf32>
    %c0_491 = arith.constant 0 : index
    %c256_492 = arith.constant 256 : index
    %302 = vector.load %arg18[%c0_491, %c256_492] : memref<2x1536xf32, #tpu.memory_space<vmem>>, vector<2x64xf32>
    tpu.vector_store %arg18[%c0_491, %c256_492], %301 {strides = array<i32>} : memref<2x1536xf32, #tpu.memory_space<vmem>>, vector<2x64xf32>,
    %c10 = arith.constant 10 : index
    %c0_493 = arith.constant 0 : index
    %303 = vector.load %arg17[%c10, %c0_493] : memref<48x64xf32, #tpu.memory_space<vmem>>, vector<2x64xf32>
    %c0_494 = arith.constant 0 : index
    %c320_495 = arith.constant 320 : index
    %304 = vector.load %arg18[%c0_494, %c320_495] : memref<2x1536xf32, #tpu.memory_space<vmem>>, vector<2x64xf32>
    tpu.vector_store %arg18[%c0_494, %c320_495], %303 {strides = array<i32>} : memref<2x1536xf32, #tpu.memory_space<vmem>>, vector<2x64xf32>,
    %c12_496 = arith.constant 12 : index
    %c0_497 = arith.constant 0 : index
    %305 = vector.load %arg17[%c12_496, %c0_497] : memref<48x64xf32, #tpu.memory_space<vmem>>, vector<2x64xf32>
    %c0_498 = arith.constant 0 : index
    %c384_499 = arith.constant 384 : index
    %306 = vector.load %arg18[%c0_498, %c384_499] : memref<2x1536xf32, #tpu.memory_space<vmem>>, vector<2x64xf32>
    tpu.vector_store %arg18[%c0_498, %c384_499], %305 {strides = array<i32>} : memref<2x1536xf32, #tpu.memory_space<vmem>>, vector<2x64xf32>,
    %c14 = arith.constant 14 : index
    %c0_500 = arith.constant 0 : index
    %307 = vector.load %arg17[%c14, %c0_500] : memref<48x64xf32, #tpu.memory_space<vmem>>, vector<2x64xf32>
    %c0_501 = arith.constant 0 : index
    %c448_502 = arith.constant 448 : index
    %308 = vector.load %arg18[%c0_501, %c448_502] : memref<2x1536xf32, #tpu.memory_space<vmem>>, vector<2x64xf32>
    tpu.vector_store %arg18[%c0_501, %c448_502], %307 {strides = array<i32>} : memref<2x1536xf32, #tpu.memory_space<vmem>>, vector<2x64xf32>,
    %c16_503 = arith.constant 16 : index
    %c0_504 = arith.constant 0 : index
    %309 = vector.load %arg17[%c16_503, %c0_504] : memref<48x64xf32, #tpu.memory_space<vmem>>, vector<2x64xf32>
    %c0_505 = arith.constant 0 : index
    %c512_506 = arith.constant 512 : index
    %310 = vector.load %arg18[%c0_505, %c512_506] : memref<2x1536xf32, #tpu.memory_space<vmem>>, vector<2x64xf32>
    tpu.vector_store %arg18[%c0_505, %c512_506], %309 {strides = array<i32>} : memref<2x1536xf32, #tpu.memory_space<vmem>>, vector<2x64xf32>,
    %c18_507 = arith.constant 18 : index
    %c0_508 = arith.constant 0 : index
    %311 = vector.load %arg17[%c18_507, %c0_508] : memref<48x64xf32, #tpu.memory_space<vmem>>, vector<2x64xf32>
    %c0_509 = arith.constant 0 : index
    %c576 = arith.constant 576 : index
    %312 = vector.load %arg18[%c0_509, %c576] : memref<2x1536xf32, #tpu.memory_space<vmem>>, vector<2x64xf32>
    tpu.vector_store %arg18[%c0_509, %c576], %311 {strides = array<i32>} : memref<2x1536xf32, #tpu.memory_space<vmem>>, vector<2x64xf32>,
    %c20_510 = arith.constant 20 : index
    %c0_511 = arith.constant 0 : index
    %313 = vector.load %arg17[%c20_510, %c0_511] : memref<48x64xf32, #tpu.memory_space<vmem>>, vector<2x64xf32>
    %c0_512 = arith.constant 0 : index
    %c640 = arith.constant 640 : index
    %314 = vector.load %arg18[%c0_512, %c640] : memref<2x1536xf32, #tpu.memory_space<vmem>>, vector<2x64xf32>
    tpu.vector_store %arg18[%c0_512, %c640], %313 {strides = array<i32>} : memref<2x1536xf32, #tpu.memory_space<vmem>>, vector<2x64xf32>,
    %c22 = arith.constant 22 : index
    %c0_513 = arith.constant 0 : index
    %315 = vector.load %arg17[%c22, %c0_513] : memref<48x64xf32, #tpu.memory_space<vmem>>, vector<2x64xf32>
    %c0_514 = arith.constant 0 : index
    %c704 = arith.constant 704 : index
    %316 = vector.load %arg18[%c0_514, %c704] : memref<2x1536xf32, #tpu.memory_space<vmem>>, vector<2x64xf32>
    tpu.vector_store %arg18[%c0_514, %c704], %315 {strides = array<i32>} : memref<2x1536xf32, #tpu.memory_space<vmem>>, vector<2x64xf32>,
    %c24_515 = arith.constant 24 : index
    %c0_516 = arith.constant 0 : index
    %317 = vector.load %arg17[%c24_515, %c0_516] : memref<48x64xf32, #tpu.memory_space<vmem>>, vector<2x64xf32>
    %c0_517 = arith.constant 0 : index
    %c768 = arith.constant 768 : index
    %318 = vector.load %arg18[%c0_517, %c768] : memref<2x1536xf32, #tpu.memory_space<vmem>>, vector<2x64xf32>
    tpu.vector_store %arg18[%c0_517, %c768], %317 {strides = array<i32>} : memref<2x1536xf32, #tpu.memory_space<vmem>>, vector<2x64xf32>,
    %c26 = arith.constant 26 : index
    %c0_518 = arith.constant 0 : index
    %319 = vector.load %arg17[%c26, %c0_518] : memref<48x64xf32, #tpu.memory_space<vmem>>, vector<2x64xf32>
    %c0_519 = arith.constant 0 : index
    %c832 = arith.constant 832 : index
    %320 = vector.load %arg18[%c0_519, %c832] : memref<2x1536xf32, #tpu.memory_space<vmem>>, vector<2x64xf32>
    tpu.vector_store %arg18[%c0_519, %c832], %319 {strides = array<i32>} : memref<2x1536xf32, #tpu.memory_space<vmem>>, vector<2x64xf32>,
    %c28 = arith.constant 28 : index
    %c0_520 = arith.constant 0 : index
    %321 = vector.load %arg17[%c28, %c0_520] : memref<48x64xf32, #tpu.memory_space<vmem>>, vector<2x64xf32>
    %c0_521 = arith.constant 0 : index
    %c896 = arith.constant 896 : index
    %322 = vector.load %arg18[%c0_521, %c896] : memref<2x1536xf32, #tpu.memory_space<vmem>>, vector<2x64xf32>
    tpu.vector_store %arg18[%c0_521, %c896], %321 {strides = array<i32>} : memref<2x1536xf32, #tpu.memory_space<vmem>>, vector<2x64xf32>,
    %c30 = arith.constant 30 : index
    %c0_522 = arith.constant 0 : index
    %323 = vector.load %arg17[%c30, %c0_522] : memref<48x64xf32, #tpu.memory_space<vmem>>, vector<2x64xf32>
    %c0_523 = arith.constant 0 : index
    %c960 = arith.constant 960 : index
    %324 = vector.load %arg18[%c0_523, %c960] : memref<2x1536xf32, #tpu.memory_space<vmem>>, vector<2x64xf32>
    tpu.vector_store %arg18[%c0_523, %c960], %323 {strides = array<i32>} : memref<2x1536xf32, #tpu.memory_space<vmem>>, vector<2x64xf32>,
    %c32_524 = arith.constant 32 : index
    %c0_525 = arith.constant 0 : index
    %325 = vector.load %arg17[%c32_524, %c0_525] : memref<48x64xf32, #tpu.memory_space<vmem>>, vector<2x64xf32>
    %c0_526 = arith.constant 0 : index
    %c1024 = arith.constant 1024 : index
    %326 = vector.load %arg18[%c0_526, %c1024] : memref<2x1536xf32, #tpu.memory_space<vmem>>, vector<2x64xf32>
    tpu.vector_store %arg18[%c0_526, %c1024], %325 {strides = array<i32>} : memref<2x1536xf32, #tpu.memory_space<vmem>>, vector<2x64xf32>,
    %c34_527 = arith.constant 34 : index
    %c0_528 = arith.constant 0 : index
    %327 = vector.load %arg17[%c34_527, %c0_528] : memref<48x64xf32, #tpu.memory_space<vmem>>, vector<2x64xf32>
    %c0_529 = arith.constant 0 : index
    %c1088 = arith.constant 1088 : index
    %328 = vector.load %arg18[%c0_529, %c1088] : memref<2x1536xf32, #tpu.memory_space<vmem>>, vector<2x64xf32>
    tpu.vector_store %arg18[%c0_529, %c1088], %327 {strides = array<i32>} : memref<2x1536xf32, #tpu.memory_space<vmem>>, vector<2x64xf32>,
    %c36_530 = arith.constant 36 : index
    %c0_531 = arith.constant 0 : index
    %329 = vector.load %arg17[%c36_530, %c0_531] : memref<48x64xf32, #tpu.memory_space<vmem>>, vector<2x64xf32>
    %c0_532 = arith.constant 0 : index
    %c1152 = arith.constant 1152 : index
    %330 = vector.load %arg18[%c0_532, %c1152] : memref<2x1536xf32, #tpu.memory_space<vmem>>, vector<2x64xf32>
    tpu.vector_store %arg18[%c0_532, %c1152], %329 {strides = array<i32>} : memref<2x1536xf32, #tpu.memory_space<vmem>>, vector<2x64xf32>,
    %c38_533 = arith.constant 38 : index
    %c0_534 = arith.constant 0 : index
    %331 = vector.load %arg17[%c38_533, %c0_534] : memref<48x64xf32, #tpu.memory_space<vmem>>, vector<2x64xf32>
    %c0_535 = arith.constant 0 : index
    %c1216 = arith.constant 1216 : index
    %332 = vector.load %arg18[%c0_535, %c1216] : memref<2x1536xf32, #tpu.memory_space<vmem>>, vector<2x64xf32>
    tpu.vector_store %arg18[%c0_535, %c1216], %331 {strides = array<i32>} : memref<2x1536xf32, #tpu.memory_space<vmem>>, vector<2x64xf32>,
    %c40 = arith.constant 40 : index
    %c0_536 = arith.constant 0 : index
    %333 = vector.load %arg17[%c40, %c0_536] : memref<48x64xf32, #tpu.memory_space<vmem>>, vector<2x64xf32>
    %c0_537 = arith.constant 0 : index
    %c1280 = arith.constant 1280 : index
    %334 = vector.load %arg18[%c0_537, %c1280] : memref<2x1536xf32, #tpu.memory_space<vmem>>, vector<2x64xf32>
    tpu.vector_store %arg18[%c0_537, %c1280], %333 {strides = array<i32>} : memref<2x1536xf32, #tpu.memory_space<vmem>>, vector<2x64xf32>,
    %c42 = arith.constant 42 : index
    %c0_538 = arith.constant 0 : index
    %335 = vector.load %arg17[%c42, %c0_538] : memref<48x64xf32, #tpu.memory_space<vmem>>, vector<2x64xf32>
    %c0_539 = arith.constant 0 : index
    %c1344 = arith.constant 1344 : index
    %336 = vector.load %arg18[%c0_539, %c1344] : memref<2x1536xf32, #tpu.memory_space<vmem>>, vector<2x64xf32>
    tpu.vector_store %arg18[%c0_539, %c1344], %335 {strides = array<i32>} : memref<2x1536xf32, #tpu.memory_space<vmem>>, vector<2x64xf32>,
    %c44 = arith.constant 44 : index
    %c0_540 = arith.constant 0 : index
    %337 = vector.load %arg17[%c44, %c0_540] : memref<48x64xf32, #tpu.memory_space<vmem>>, vector<2x64xf32>
    %c0_541 = arith.constant 0 : index
    %c1408 = arith.constant 1408 : index
    %338 = vector.load %arg18[%c0_541, %c1408] : memref<2x1536xf32, #tpu.memory_space<vmem>>, vector<2x64xf32>
    tpu.vector_store %arg18[%c0_541, %c1408], %337 {strides = array<i32>} : memref<2x1536xf32, #tpu.memory_space<vmem>>, vector<2x64xf32>,
    %c46 = arith.constant 46 : index
    %c0_542 = arith.constant 0 : index
    %339 = vector.load %arg17[%c46, %c0_542] : memref<48x64xf32, #tpu.memory_space<vmem>>, vector<2x64xf32>
    %c0_543 = arith.constant 0 : index
    %c1472 = arith.constant 1472 : index
    %340 = vector.load %arg18[%c0_543, %c1472] : memref<2x1536xf32, #tpu.memory_space<vmem>>, vector<2x64xf32>
    tpu.vector_store %arg18[%c0_543, %c1472], %339 {strides = array<i32>} : memref<2x1536xf32, #tpu.memory_space<vmem>>, vector<2x64xf32>,
    %c0_544 = arith.constant 0 : index
    %c0_545 = arith.constant 0 : index
    %341 = vector.load %arg18[%c0_544, %c0_545] : memref<2x1536xf32, #tpu.memory_space<vmem>>, vector<2x1536xf32>
    %c0_546 = arith.constant 0 : index
    %c0_547 = arith.constant 0 : index
    %342 = vector.load %arg8[%c0_546, %c0_547] : memref<1536x32xf32, #tpu.memory_space<vmem>>, vector<1536x32xf32>
    %cst_548 = arith.constant dense<0.000000e+00> : vector<2x32xf32>
    %343 = tpu.matmul %341, %342, %cst_548 {dimension_numbers = #tpu.dot_dimension_numbers<[1], [0], [0], [1], [0, 0, 1, 1], [], []>} : vector<2x1536xf32>, vector<1536x32xf32>, vector<2x32xf32> -> vector<2x32xf32>
    %c0_549 = arith.constant 0 : index
    %c0_550 = arith.constant 0 : index
    %344 = vector.load %arg9[%c0_549, %c0_550] : memref<1x32xf32, #tpu.memory_space<vmem>>, vector<1x32xf32>
    %345 = vector.broadcast %344 : vector<1x32xf32> to vector<2x32xf32>
    %346 = arith.addf %343, %345 : vector<2x32xf32>
    %cst_551 = arith.constant 0.000000e+00 : f32
    %347 = vector.broadcast %cst_551 : f32 to vector<2x32xf32>
    %348 = arith.maximumf %346, %347 : vector<2x32xf32>
    %c0_552 = arith.constant 0 : index
    %c0_553 = arith.constant 0 : index
    %349 = vector.load %arg10[%c0_552, %c0_553] : memref<32x128xf32, #tpu.memory_space<vmem>>, vector<32x128xf32>
    %cst_554 = arith.constant dense<0.000000e+00> : vector<2x128xf32>
    %350 = tpu.matmul %348, %349, %cst_554 {dimension_numbers = #tpu.dot_dimension_numbers<[1], [0], [0], [1], [0, 0, 1, 1], [], []>} : vector<2x32xf32>, vector<32x128xf32>, vector<2x128xf32> -> vector<2x128xf32>
    %c0_555 = arith.constant 0 : index
    %c0_556 = arith.constant 0 : index
    %351 = vector.load %arg11[%c0_555, %c0_556] : memref<1x128xf32, #tpu.memory_space<vmem>>, vector<1x128xf32>
    %352 = vector.broadcast %351 : vector<1x128xf32> to vector<2x128xf32>
    %353 = arith.addf %350, %352 : vector<2x128xf32>
    %c0_557 = arith.constant 0 : index
    %c0_558 = arith.constant 0 : index
    %354 = vector.load %arg12[%c0_557, %c0_558] : memref<2x128xf32, #tpu.memory_space<vmem>>, vector<2x128xf32>
    tpu.vector_store %arg12[%c0_557, %c0_558], %353 {strides = array<i32>} : memref<2x128xf32, #tpu.memory_space<vmem>>, vector<2x128xf32>,
    return
  }
  func.func @transform_0(%arg0: i32) -> (i32, i32) {
    %c0_i32 = arith.constant 0 : i32
    %c0_i32_0 = arith.constant 0 : i32
    %c0_i32_1 = arith.constant 0 : i32
    return %c0_i32, %c0_i32_0 : i32, i32
  }
  func.func @transform_1(%arg0: i32) -> (i32, i32) {
    %c0_i32 = arith.constant 0 : i32
    %c0_i32_0 = arith.constant 0 : i32
    %c0_i32_1 = arith.constant 0 : i32
    return %c0_i32, %c0_i32_0 : i32, i32
  }
  func.func @transform_2(%arg0: i32) -> (i32, i32) {
    %c0_i32 = arith.constant 0 : i32
    %c0_i32_0 = arith.constant 0 : i32
    %c0_i32_1 = arith.constant 0 : i32
    return %c0_i32, %c0_i32_0 : i32, i32
  }
  func.func @transform_3(%arg0: i32) -> (i32, i32) {
    %c0_i32 = arith.constant 0 : i32
    %c0_i32_0 = arith.constant 0 : i32
    %c0_i32_1 = arith.constant 0 : i32
    return %c0_i32, %c0_i32_0 : i32, i32
  }
  func.func @transform_4(%arg0: i32) -> (i32, i32) {
    %c0_i32 = arith.constant 0 : i32
    %c0_i32_0 = arith.constant 0 : i32
    %c0_i32_1 = arith.constant 0 : i32
    return %c0_i32, %c0_i32_0 : i32, i32
  }
  func.func @transform_5(%arg0: i32) -> (i32, i32) {
    %c0_i32 = arith.constant 0 : i32
    %c0_i32_0 = arith.constant 0 : i32
    %c0_i32_1 = arith.constant 0 : i32
    return %c0_i32, %c0_i32_0 : i32, i32
  }
  func.func @transform_6(%arg0: i32) -> (i32, i32) {
    %c0_i32 = arith.constant 0 : i32
    %c0_i32_0 = arith.constant 0 : i32
    %c0_i32_1 = arith.constant 0 : i32
    return %c0_i32, %c0_i32_0 : i32, i32
  }
  func.func @transform_7(%arg0: i32) -> (i32, i32) {
    %c0_i32 = arith.constant 0 : i32
    %c0_i32_0 = arith.constant 0 : i32
    %c0_i32_1 = arith.constant 0 : i32
    return %c0_i32, %c0_i32_0 : i32, i32
  }
  func.func @transform_8(%arg0: i32) -> (i32, i32) {
    %c0_i32 = arith.constant 0 : i32
    %c0_i32_0 = arith.constant 0 : i32
    %c0_i32_1 = arith.constant 0 : i32
    return %c0_i32, %c0_i32_0 : i32, i32
  }
  func.func @transform_9(%arg0: i32) -> (i32, i32) {
    %c0_i32 = arith.constant 0 : i32
    %c0_i32_0 = arith.constant 0 : i32
    %c0_i32_1 = arith.constant 0 : i32
    return %c0_i32, %c0_i32_0 : i32, i32
  }
  func.func @transform_10(%arg0: i32) -> (i32, i32) {
    %c0_i32 = arith.constant 0 : i32
    %c0_i32_0 = arith.constant 0 : i32
    %c0_i32_1 = arith.constant 0 : i32
    return %c0_i32, %c0_i32_0 : i32, i32
  }
  func.func @transform_11(%arg0: i32) -> (i32, i32) {
    %c0_i32 = arith.constant 0 : i32
    %c0_i32_0 = arith.constant 0 : i32
    %c0_i32_1 = arith.constant 0 : i32
    return %c0_i32, %c0_i32_0 : i32, i32
  }
}

</mosaic_0001>

<llo_original>
// kernel: dqn_forward.1
$region0: #{dqn_forward.1}
  #allocation0 [shape = 'u32[]', space=smem, size = 0x4, offset = 0x4, fixed_abs, tag = 'smem constant byte address 0x4 - core index']
  #allocation1 [shape = 'u32[72,128]{1,0:T(1,128)}', space=vmem, size = 0x9000, scoped, tag = 'internal scratch']
  #allocation2 [shape = 'f32[504,32]{1,0:T(8,128)}', space=vmem, size = 0x3f000, scoped, tag = 'scratch operand']
  #allocation3 [shape = 'f32[96,512]{1,0:T(8,128)}', space=vmem, size = 0x30000, scoped, tag = 'scratch operand']
  #allocation4 [shape = 'f32[96,64]{1,0:T(8,128)}', space=vmem, size = 0xc000, scoped, tag = 'scratch operand']
  #allocation5 [shape = 'f32[48,576]{1,0:T(8,128)}', space=vmem, size = 0x1e000, scoped, tag = 'scratch operand']
  #allocation6 [shape = 'f32[48,64]{1,0:T(8,128)}', space=vmem, size = 0x6000, scoped, tag = 'scratch operand']
  #allocation7 [shape = 'f32[2,1536]{1,0:T(2,128)}', space=vmem, size = 0x3000, scoped, tag = 'scratch operand']
  %s0 = inlined_call_operand.vmem [shape: bf16[504,256], index: 0, kind: input, shape index: {}]
  %s1 = inlined_call_operand.vmem [shape: bf16[256,32], index: 1, kind: input, shape index: {}]
  %s2 = inlined_call_operand.vmem [shape: f32[1,32], index: 2, kind: input, shape index: {}]
  %s3 = inlined_call_operand.vmem [shape: bf16[512,64], index: 3, kind: input, shape index: {}]
  %s4 = inlined_call_operand.vmem [shape: f32[1,64], index: 4, kind: input, shape index: {}]
  %s5 = inlined_call_operand.vmem [shape: bf16[576,64], index: 5, kind: input, shape index: {}]
  %s6 = inlined_call_operand.vmem [shape: f32[1,64], index: 6, kind: input, shape index: {}]
  %s7 = inlined_call_operand.vmem [shape: f32[1536,32], index: 7, kind: input, shape index: {}]
  %s8 = inlined_call_operand.vmem [shape: f32[1,32], index: 8, kind: input, shape index: {}]
  %s9 = inlined_call_operand.vmem [shape: f32[32,128], index: 9, kind: input, shape index: {}]
  %s10 = inlined_call_operand.vmem [shape: f32[1,128], index: 10, kind: input, shape index: {}]
  %s11 = inlined_call_operand.hbm [shape: f32[2,128], index: 11, kind: output, shape index: {}]
  %s12 = sld [smem:[#allocation0]]
  $region54: #{dqn_forward.1} parent=0
    _
  %s14 = ssub.s32 1, %s12
  %s15 = scalar_select 0, %s14, %s12
  $region1: #{dqn_forward.1} parent=0
    #allocation8 [shape = 'u8[1024]{0}', space=vmem, size = 0x400, scoped, tag = 'output window, operand 0, single buffered']
    #allocation9 [shape = 's32[1]{0}', space=sflag, size = 0x4, scoped, tag = 'scoped memory for dqn_forward.1']
    %16 = vsyncpa [#allocation9], 0
    // Predicated region
    $region2: #{dqn_forward.1} parent=1 // pred_check
      _
    $region3: #{dqn_forward.1} parent=1 // pred_check_branch
      %18 = sbr.rel (0) target = $region5
    $region4: #{dqn_forward.1} parent=1 // pred_region
      _
    $region5: #{dqn_forward.1} parent=1 // pred_fallthru
      _
    // Predicated region
    $region6: #{dqn_forward.1} parent=1 // pred_check
      _
    $region7: #{dqn_forward.1} parent=1 // pred_check_branch
      %20 = sbr.rel (0) target = $region9
    $region8: #{dqn_forward.1} parent=1 // pred_region
      _
    $region9: #{dqn_forward.1} parent=1 // pred_fallthru
      _
    // Predicated region
    $region10: #{dqn_forward.1} parent=1 // pred_check
      _
    $region11: #{dqn_forward.1} parent=1 // pred_check_branch
      %22 = sbr.rel (0) target = $region13
    $region12: #{dqn_forward.1} parent=1 // pred_region
      _
    $region13: #{dqn_forward.1} parent=1 // pred_fallthru
      _
    // Predicated region
    $region14: #{dqn_forward.1} parent=1 // pred_check
      _
    $region15: #{dqn_forward.1} parent=1 // pred_check_branch
      %24 = sbr.rel (0) target = $region17
    $region16: #{dqn_forward.1} parent=1 // pred_region
      _
    $region17: #{dqn_forward.1} parent=1 // pred_fallthru
      _
    // Predicated region
    $region18: #{dqn_forward.1} parent=1 // pred_check
      _
    $region19: #{dqn_forward.1} parent=1 // pred_check_branch
      %26 = sbr.rel (0) target = $region21
    $region20: #{dqn_forward.1} parent=1 // pred_region
      _
    $region21: #{dqn_forward.1} parent=1 // pred_fallthru
      _
    // Predicated region
    $region22: #{dqn_forward.1} parent=1 // pred_check
      _
    $region23: #{dqn_forward.1} parent=1 // pred_check_branch
      %28 = sbr.rel (0) target = $region25
    $region24: #{dqn_forward.1} parent=1 // pred_region
      _
    $region25: #{dqn_forward.1} parent=1 // pred_fallthru
      _
    // Predicated region
    $region26: #{dqn_forward.1} parent=1 // pred_check
      _
    $region27: #{dqn_forward.1} parent=1 // pred_check_branch
      %30 = sbr.rel (0) target = $region29
    $region28: #{dqn_forward.1} parent=1 // pred_region
      _
    $region29: #{dqn_forward.1} parent=1 // pred_fallthru
      _
    // Predicated region
    $region30: #{dqn_forward.1} parent=1 // pred_check
      _
    $region31: #{dqn_forward.1} parent=1 // pred_check_branch
      %32 = sbr.rel (0) target = $region33
    $region32: #{dqn_forward.1} parent=1 // pred_region
      _
    $region33: #{dqn_forward.1} parent=1 // pred_fallthru
      _
    // Predicated region
    $region34: #{dqn_forward.1} parent=1 // pred_check
      _
    $region35: #{dqn_forward.1} parent=1 // pred_check_branch
      %34 = sbr.rel (0) target = $region37
    $region36: #{dqn_forward.1} parent=1 // pred_region
      _
    $region37: #{dqn_forward.1} parent=1 // pred_fallthru
      _
    // Predicated region
    $region38: #{dqn_forward.1} parent=1 // pred_check
      _
    $region39: #{dqn_forward.1} parent=1 // pred_check_branch
      %36 = sbr.rel (0) target = $region41
    $region40: #{dqn_forward.1} parent=1 // pred_region
      _
    $region41: #{dqn_forward.1} parent=1 // pred_fallthru
      _
    // Predicated region
    $region42: #{dqn_forward.1} parent=1 // pred_check
      _
    $region43: #{dqn_forward.1} parent=1 // pred_check_branch
      %38 = sbr.rel (0) target = $region45
    $region44: #{dqn_forward.1} parent=1 // pred_region
      _
    $region45: #{dqn_forward.1} parent=1 // pred_fallthru
      _
    %v40 = vld [vmem:[%s0] sm:$0xff]
    %v41 = vld [vmem:[%s0 + $0x8] sm:$0xff]
    %v42 = vld [vmem:[%s0 + $0x10] sm:$0xff]
    %v43 = vld [vmem:[%s0 + $0x18] sm:$0xff]
    %v44 = vld [vmem:[%s0 + $0x20] sm:$0xff]
    %v45 = vld [vmem:[%s0 + $0x28] sm:$0xff]
    %v46 = vld [vmem:[%s0 + $0x30] sm:$0xff]
    %v47 = vld [vmem:[%s0 + $0x38] sm:$0xff]
    %v48 = vld [vmem:[%s0 + $0x40] sm:$0xff]
    %v49 = vld [vmem:[%s0 + $0x48] sm:$0xff]
    %v50 = vld [vmem:[%s0 + $0x50] sm:$0xff]
    %v51 = vld [vmem:[%s0 + $0x58] sm:$0xff]
    %v52 = vld [vmem:[%s0 + $0x60] sm:$0xff]
    %v53 = vld [vmem:[%s0 + $0x68] sm:$0xff]
    %v54 = vld [vmem:[%s0 + $0x70] sm:$0xff]
    %v55 = vld [vmem:[%s0 + $0x78] sm:$0xff]
    %v56 = vld [vmem:[%s0 + $0x80] sm:$0xff]
    %v57 = vld [vmem:[%s0 + $0x88] sm:$0xff]
    %v58 = vld [vmem:[%s0 + $0x90] sm:$0xff]
    %v59 = vld [vmem:[%s0 + $0x98] sm:$0xff]
    %v60 = vld [vmem:[%s0 + $0xa0] sm:$0xff]
    %v61 = vld [vmem:[%s0 + $0xa8] sm:$0xff]
    %v62 = vld [vmem:[%s0 + $0xb0] sm:$0xff]
    %v63 = vld [vmem:[%s0 + $0xb8] sm:$0xff]
    %v64 = vld [vmem:[%s0 + $0xc0] sm:$0xff]
    %v65 = vld [vmem:[%s0 + $0xc8] sm:$0xff]
    %v66 = vld [vmem:[%s0 + $0xd0] sm:$0xff]
    %v67 = vld [vmem:[%s0 + $0xd8] sm:$0xff]
    %v68 = vld [vmem:[%s0 + $0xe0] sm:$0xff]
    %v69 = vld [vmem:[%s0 + $0xe8] sm:$0xff]
    %v70 = vld [vmem:[%s0 + $0xf0] sm:$0xff]
    %v71 = vld [vmem:[%s0 + $0xf8] sm:$0xff]
    %v72 = vld [vmem:[%s0 + $0x100] sm:$0xff]
    %v73 = vld [vmem:[%s0 + $0x108] sm:$0xff]
    %v74 = vld [vmem:[%s0 + $0x110] sm:$0xff]
    %v75 = vld [vmem:[%s0 + $0x118] sm:$0xff]
    %v76 = vld [vmem:[%s0 + $0x120] sm:$0xff]
    %v77 = vld [vmem:[%s0 + $0x128] sm:$0xff]
    %v78 = vld [vmem:[%s0 + $0x130] sm:$0xff]
    %v79 = vld [vmem:[%s0 + $0x138] sm:$0xff]
    %v80 = vld [vmem:[%s0 + $0x140] sm:$0xff]
    %v81 = vld [vmem:[%s0 + $0x148] sm:$0xff]
    %v82 = vld [vmem:[%s0 + $0x150] sm:$0xff]
    %v83 = vld [vmem:[%s0 + $0x158] sm:$0xff]
    %v84 = vld [vmem:[%s0 + $0x160] sm:$0xff]
    %v85 = vld [vmem:[%s0 + $0x168] sm:$0xff]
    %v86 = vld [vmem:[%s0 + $0x170] sm:$0xff]
    %v87 = vld [vmem:[%s0 + $0x178] sm:$0xff]
    %v88 = vld [vmem:[%s0 + $0x180] sm:$0xff]
    %v89 = vld [vmem:[%s0 + $0x188] sm:$0xff]
    %v90 = vld [vmem:[%s0 + $0x190] sm:$0xff]
    %v91 = vld [vmem:[%s0 + $0x198] sm:$0xff]
    %v92 = vld [vmem:[%s0 + $0x1a0] sm:$0xff]
    %v93 = vld [vmem:[%s0 + $0x1a8] sm:$0xff]
    %v94 = vld [vmem:[%s0 + $0x1b0] sm:$0xff]
    %v95 = vld [vmem:[%s0 + $0x1b8] sm:$0xff]
    %v96 = vld [vmem:[%s0 + $0x1c0] sm:$0xff]
    %v97 = vld [vmem:[%s0 + $0x1c8] sm:$0xff]
    %v98 = vld [vmem:[%s0 + $0x1d0] sm:$0xff]
    %v99 = vld [vmem:[%s0 + $0x1d8] sm:$0xff]
    %v100 = vld [vmem:[%s0 + $0x1e0] sm:$0xff]
    %v101 = vld [vmem:[%s0 + $0x1e8] sm:$0xff]
    %v102 = vld [vmem:[%s0 + $0x1f0] sm:$0xff]
    %v103 = vld [vmem:[%s1] sm:$0xf]
    %v104 = vld [vmem:[%s1 + $0x4] sm:$0xf]
    %v105 = vld [vmem:[%s1 + $0x8] sm:$0xf]
    %v106 = vld [vmem:[%s1 + $0xc] sm:$0xf]
    %v107 = vld [vmem:[%s1 + $0x10] sm:$0xf]
    %v108 = vld [vmem:[%s1 + $0x14] sm:$0xf]
    %v109 = vld [vmem:[%s1 + $0x18] sm:$0xf]
    %v110 = vld [vmem:[%s1 + $0x1c] sm:$0xf]
    %v111 = vld [vmem:[%s1 + $0x20] sm:$0xf]
    %v112 = vld [vmem:[%s1 + $0x24] sm:$0xf]
    %v113 = vld [vmem:[%s1 + $0x28] sm:$0xf]
    %v114 = vld [vmem:[%s1 + $0x2c] sm:$0xf]
    %v115 = vld [vmem:[%s1 + $0x30] sm:$0xf]
    %v116 = vld [vmem:[%s1 + $0x34] sm:$0xf]
    %v117 = vld [vmem:[%s1 + $0x38] sm:$0xf]
    %v118 = vld [vmem:[%s1 + $0x3c] sm:$0xf]
    %v119 = vld [vmem:[%s1 + $0x40] sm:$0xf]
    %v120 = vld [vmem:[%s1 + $0x44] sm:$0xf]
    %v121 = vld [vmem:[%s1 + $0x48] sm:$0xf]
    %v122 = vld [vmem:[%s1 + $0x4c] sm:$0xf]
    %v123 = vld [vmem:[%s1 + $0x50] sm:$0xf]
    %v124 = vld [vmem:[%s1 + $0x54] sm:$0xf]
    %v125 = vld [vmem:[%s1 + $0x58] sm:$0xf]
    %v126 = vld [vmem:[%s1 + $0x5c] sm:$0xf]
    %v127 = vld [vmem:[%s1 + $0x60] sm:$0xf]
    %v128 = vld [vmem:[%s1 + $0x64] sm:$0xf]
    %v129 = vld [vmem:[%s1 + $0x68] sm:$0xf]
    %v130 = vld [vmem:[%s1 + $0x6c] sm:$0xf]
    %v131 = vld [vmem:[%s1 + $0x70] sm:$0xf]
    %v132 = vld [vmem:[%s1 + $0x74] sm:$0xf]
    %v133 = vld [vmem:[%s1 + $0x78] sm:$0xf]
    %v134 = vld [vmem:[%s1 + $0x7c] sm:$0xf]
    %v135 = vld [vmem:[%s2] sm:$0x1]
    %v137 = vperm.slane %v135, 0
    %v202 = vunpack.c.l.b16 %v40
    %v203 = vunpack.c.h.b16 %v40
    %v204 = vunpack.c.l.b16 %v41
    %v205 = vunpack.c.h.b16 %v41
    %v206 = vunpack.c.l.b16 %v42
    %v207 = vunpack.c.h.b16 %v42
    %v208 = vunpack.c.l.b16 %v43
    %v209 = vunpack.c.h.b16 %v43
    %v210 = vunpack.c.l.b16 %v44
    %v211 = vunpack.c.h.b16 %v44
    %v212 = vunpack.c.l.b16 %v45
    %v213 = vunpack.c.h.b16 %v45
    %v214 = vunpack.c.l.b16 %v46
    %v215 = vunpack.c.h.b16 %v46
    %v216 = vunpack.c.l.b16 %v47
    %v217 = vunpack.c.h.b16 %v47
    %v218 = vunpack.c.l.b16 %v48
    %v219 = vunpack.c.h.b16 %v48
    %v220 = vunpack.c.l.b16 %v49
    %v221 = vunpack.c.h.b16 %v49
    %v222 = vunpack.c.l.b16 %v50
    %v223 = vunpack.c.h.b16 %v50
    %v224 = vunpack.c.l.b16 %v51
    %v225 = vunpack.c.h.b16 %v51
    %v226 = vunpack.c.l.b16 %v52
    %v227 = vunpack.c.h.b16 %v52
    %v228 = vunpack.c.l.b16 %v53
    %v229 = vunpack.c.h.b16 %v53
    %v230 = vunpack.c.l.b16 %v54
    %v231 = vunpack.c.h.b16 %v54
    %v232 = vunpack.c.l.b16 %v55
    %v233 = vunpack.c.h.b16 %v55
    %v234 = vunpack.c.l.b16 %v56
    %v235 = vunpack.c.h.b16 %v56
    %v236 = vunpack.c.l.b16 %v57
    %v237 = vunpack.c.h.b16 %v57
    %v238 = vunpack.c.l.b16 %v58
    %v239 = vunpack.c.h.b16 %v58
    %v240 = vunpack.c.l.b16 %v59
    %v241 = vunpack.c.h.b16 %v59
    %v242 = vunpack.c.l.b16 %v60
    %v243 = vunpack.c.h.b16 %v60
    %v244 = vunpack.c.l.b16 %v61
    %v245 = vunpack.c.h.b16 %v61
    %v246 = vunpack.c.l.b16 %v62
    %v247 = vunpack.c.h.b16 %v62
    %v248 = vunpack.c.l.b16 %v63
    %v249 = vunpack.c.h.b16 %v63
    %v250 = vunpack.c.l.b16 %v64
    %v251 = vunpack.c.h.b16 %v64
    %v252 = vunpack.c.l.b16 %v65
    %v253 = vunpack.c.h.b16 %v65
    %v254 = vunpack.c.l.b16 %v66
    %v255 = vunpack.c.h.b16 %v66
    %v256 = vunpack.c.l.b16 %v67
    %v257 = vunpack.c.h.b16 %v67
    %v258 = vunpack.c.l.b16 %v68
    %v259 = vunpack.c.h.b16 %v68
    %v260 = vunpack.c.l.b16 %v69
    %v261 = vunpack.c.h.b16 %v69
    %v262 = vunpack.c.l.b16 %v70
    %v263 = vunpack.c.h.b16 %v70
    %v264 = vunpack.c.l.b16 %v71
    %v265 = vunpack.c.h.b16 %v71
    %v266 = vunpack.c.l.b16 %v72
    %v267 = vunpack.c.h.b16 %v72
    %v268 = vunpack.c.l.b16 %v73
    %v269 = vunpack.c.h.b16 %v73
    %v270 = vunpack.c.l.b16 %v74
    %v271 = vunpack.c.h.b16 %v74
    %v272 = vunpack.c.l.b16 %v75
    %v273 = vunpack.c.h.b16 %v75
    %v274 = vunpack.c.l.b16 %v76
    %v275 = vunpack.c.h.b16 %v76
    %v276 = vunpack.c.l.b16 %v77
    %v277 = vunpack.c.h.b16 %v77
    %v278 = vunpack.c.l.b16 %v78
    %v279 = vunpack.c.h.b16 %v78
    %v280 = vunpack.c.l.b16 %v79
    %v281 = vunpack.c.h.b16 %v79
    %v282 = vunpack.c.l.b16 %v80
    %v283 = vunpack.c.h.b16 %v80
    %v284 = vunpack.c.l.b16 %v81
    %v285 = vunpack.c.h.b16 %v81
    %v286 = vunpack.c.l.b16 %v82
    %v287 = vunpack.c.h.b16 %v82
    %v288 = vunpack.c.l.b16 %v83
    %v289 = vunpack.c.h.b16 %v83
    %v290 = vunpack.c.l.b16 %v84
    %v291 = vunpack.c.h.b16 %v84
    %v292 = vunpack.c.l.b16 %v85
    %v293 = vunpack.c.h.b16 %v85
    %v294 = vunpack.c.l.b16 %v86
    %v295 = vunpack.c.h.b16 %v86
    %v296 = vunpack.c.l.b16 %v87
    %v297 = vunpack.c.h.b16 %v87
    %v298 = vunpack.c.l.b16 %v88
    %v299 = vunpack.c.h.b16 %v88
    %v300 = vunpack.c.l.b16 %v89
    %v301 = vunpack.c.h.b16 %v89
    %v302 = vunpack.c.l.b16 %v90
    %v303 = vunpack.c.h.b16 %v90
    %v304 = vunpack.c.l.b16 %v91
    %v305 = vunpack.c.h.b16 %v91
    %v306 = vunpack.c.l.b16 %v92
    %v307 = vunpack.c.h.b16 %v92
    %v308 = vunpack.c.l.b16 %v93
    %v309 = vunpack.c.h.b16 %v93
    %v310 = vunpack.c.l.b16 %v94
    %v311 = vunpack.c.h.b16 %v94
    %v312 = vunpack.c.l.b16 %v95
    %v313 = vunpack.c.h.b16 %v95
    %v314 = vunpack.c.l.b16 %v96
    %v315 = vunpack.c.h.b16 %v96
    %v316 = vunpack.c.l.b16 %v97
    %v317 = vunpack.c.h.b16 %v97
    %v318 = vunpack.c.l.b16 %v98
    %v319 = vunpack.c.h.b16 %v98
    %v320 = vunpack.c.l.b16 %v99
    %v321 = vunpack.c.h.b16 %v99
    %v322 = vunpack.c.l.b16 %v100
    %v323 = vunpack.c.h.b16 %v100
    %v324 = vunpack.c.l.b16 %v101
    %v325 = vunpack.c.h.b16 %v101
    %v326 = vunpack.c.l.b16 %v102
    %v327 = vunpack.c.h.b16 %v102
    %v328 = vpack.c.b16 %v204, %v202
    %v329 = vpack.c.b16 %v205, %v203
    %v330 = vpack.c.b16 %v208, %v206
    %v331 = vpack.c.b16 %v209, %v207
    %v332 = vpack.c.b16 %v212, %v210
    %v333 = vpack.c.b16 %v213, %v211
    %v334 = vpack.c.b16 %v216, %v214
    %v335 = vpack.c.b16 %v217, %v215
    %v336 = vpack.c.b16 %v220, %v218
    %v337 = vpack.c.b16 %v221, %v219
    %v338 = vpack.c.b16 %v224, %v222
    %v339 = vpack.c.b16 %v225, %v223
    %v340 = vpack.c.b16 %v228, %v226
    %v341 = vpack.c.b16 %v229, %v227
    %v342 = vpack.c.b16 %v232, %v230
    %v343 = vpack.c.b16 %v233, %v231
    %v344 = vpack.c.b16 %v236, %v234
    %v345 = vpack.c.b16 %v237, %v235
    %v346 = vpack.c.b16 %v240, %v238
    %v347 = vpack.c.b16 %v241, %v239
    %v348 = vpack.c.b16 %v244, %v242
    %v349 = vpack.c.b16 %v245, %v243
    %v350 = vpack.c.b16 %v248, %v246
    %v351 = vpack.c.b16 %v249, %v247
    %v352 = vpack.c.b16 %v252, %v250
    %v353 = vpack.c.b16 %v253, %v251
    %v354 = vpack.c.b16 %v256, %v254
    %v355 = vpack.c.b16 %v257, %v255
    %v356 = vpack.c.b16 %v260, %v258
    %v357 = vpack.c.b16 %v261, %v259
    %v358 = vpack.c.b16 %v264, %v262
    %v359 = vpack.c.b16 %v265, %v263
    %v360 = vpack.c.b16 %v268, %v266
    %v361 = vpack.c.b16 %v269, %v267
    %v362 = vpack.c.b16 %v272, %v270
    %v363 = vpack.c.b16 %v273, %v271
    %v364 = vpack.c.b16 %v276, %v274
    %v365 = vpack.c.b16 %v277, %v275
    %v366 = vpack.c.b16 %v280, %v278
    %v367 = vpack.c.b16 %v281, %v279
    %v368 = vpack.c.b16 %v284, %v282
    %v369 = vpack.c.b16 %v285, %v283
    %v370 = vpack.c.b16 %v288, %v286
    %v371 = vpack.c.b16 %v289, %v287
    %v372 = vpack.c.b16 %v292, %v290
    %v373 = vpack.c.b16 %v293, %v291
    %v374 = vpack.c.b16 %v296, %v294
    %v375 = vpack.c.b16 %v297, %v295
    %v376 = vpack.c.b16 %v300, %v298
    %v377 = vpack.c.b16 %v301, %v299
    %v378 = vpack.c.b16 %v304, %v302
    %v379 = vpack.c.b16 %v305, %v303
    %v380 = vpack.c.b16 %v308, %v306
    %v381 = vpack.c.b16 %v309, %v307
    %v382 = vpack.c.b16 %v312, %v310
    %v383 = vpack.c.b16 %v313, %v311
    %v384 = vpack.c.b16 %v316, %v314
    %v385 = vpack.c.b16 %v317, %v315
    %v386 = vpack.c.b16 %v320, %v318
    %v387 = vpack.c.b16 %v321, %v319
    %v388 = vpack.c.b16 %v324, %v322
    %v389 = vpack.c.b16 %v325, %v323
    %v390 = vpack.c.b16 %v326, %v326
    %v391 = vpack.c.b16 %v327, %v327
    %v488 = vunpack.c.l.b16 %v103
    %v489 = vunpack.c.l.b16 %v104
    %v490 = vunpack.c.l.b16 %v105
    %v491 = vunpack.c.l.b16 %v106
    %v492 = vunpack.c.l.b16 %v107
    %v493 = vunpack.c.l.b16 %v108
    %v494 = vunpack.c.l.b16 %v109
    %v495 = vunpack.c.l.b16 %v110
    %v496 = vunpack.c.l.b16 %v111
    %v497 = vunpack.c.l.b16 %v112
    %v498 = vunpack.c.l.b16 %v113
    %v499 = vunpack.c.l.b16 %v114
    %v500 = vunpack.c.l.b16 %v115
    %v501 = vunpack.c.l.b16 %v116
    %v502 = vunpack.c.l.b16 %v117
    %v503 = vunpack.c.l.b16 %v118
    %v504 = vunpack.c.l.b16 %v119
    %v505 = vunpack.c.l.b16 %v120
    %v506 = vunpack.c.l.b16 %v121
    %v507 = vunpack.c.l.b16 %v122
    %v508 = vunpack.c.l.b16 %v123
    %v509 = vunpack.c.l.b16 %v124
    %v510 = vunpack.c.l.b16 %v125
    %v511 = vunpack.c.l.b16 %v126
    %v512 = vunpack.c.l.b16 %v127
    %v513 = vunpack.c.l.b16 %v128
    %v514 = vunpack.c.l.b16 %v129
    %v515 = vunpack.c.l.b16 %v130
    %v516 = vunpack.c.l.b16 %v131
    %v517 = vunpack.c.l.b16 %v132
    %v518 = vunpack.c.l.b16 %v133
    %v519 = vunpack.c.l.b16 %v134
    %v520 = vpack.c.b16 %v489, %v488
    %v521 = vpack.c.b16 %v491, %v490
    %v522 = vpack.c.b16 %v493, %v492
    %v523 = vpack.c.b16 %v495, %v494
    %v524 = vpack.c.b16 %v497, %v496
    %v525 = vpack.c.b16 %v499, %v498
    %v526 = vpack.c.b16 %v501, %v500
    %v527 = vpack.c.b16 %v503, %v502
    %v528 = vpack.c.b16 %v505, %v504
    %v529 = vpack.c.b16 %v507, %v506
    %v530 = vpack.c.b16 %v509, %v508
    %v531 = vpack.c.b16 %v511, %v510
    %v532 = vpack.c.b16 %v513, %v512
    %v533 = vpack.c.b16 %v515, %v514
    %v534 = vpack.c.b16 %v517, %v516
    %v535 = vpack.c.b16 %v519, %v518
    %552 = vmatpush.bf16.msra.mxu0 %v527
    %553 = vmatpush.bf16.msra.mxu0 %v526
    %554 = vmatpush.bf16.msra.mxu0 %v525
    %555 = vmatpush.bf16.msra.mxu0 %v524
    %556 = vmatpush.bf16.msra.mxu0 %v523
    %557 = vmatpush.bf16.msra.mxu0 %v522
    %558 = vmatpush.bf16.msra.mxu0 %v521
    %559 = vmatpush.bf16.msra.mxu0 %v520
    %560 = vmatmul.bf16.gmra.mxu0 %v328
    %v561 = vpop.f32.mrf.mxu0
    %v562 = vadd.f32 %v137, %v561
    %v563 = vpop.f32.mrf.mxu0
    %v564 = vadd.f32 %v137, %v563
    %565 = vmatmul.bf16.gmra.mxu0 %v330
    %v566 = vpop.f32.mrf.mxu0
    %v567 = vadd.f32 %v137, %v566
    %v568 = vpop.f32.mrf.mxu0
    %v569 = vadd.f32 %v137, %v568
    %570 = vmatmul.bf16.gmra.mxu0 %v332
    %v571 = vpop.f32.mrf.mxu0
    %v572 = vadd.f32 %v137, %v571
    %v573 = vpop.f32.mrf.mxu0
    %v574 = vadd.f32 %v137, %v573
    %575 = vmatmul.bf16.gmra.mxu0 %v334
    %v576 = vpop.f32.mrf.mxu0
    %v577 = vadd.f32 %v137, %v576
    %v578 = vpop.f32.mrf.mxu0
    %v579 = vadd.f32 %v137, %v578
    %580 = vmatmul.bf16.gmra.mxu0 %v336
    %v581 = vpop.f32.mrf.mxu0
    %v582 = vadd.f32 %v137, %v581
    %v583 = vpop.f32.mrf.mxu0
    %v584 = vadd.f32 %v137, %v583
    %585 = vmatmul.bf16.gmra.mxu0 %v338
    %v586 = vpop.f32.mrf.mxu0
    %v587 = vadd.f32 %v137, %v586
    %v588 = vpop.f32.mrf.mxu0
    %v589 = vadd.f32 %v137, %v588
    %590 = vmatmul.bf16.gmra.mxu0 %v340
    %v591 = vpop.f32.mrf.mxu0
    %v592 = vadd.f32 %v137, %v591
    %v593 = vpop.f32.mrf.mxu0
    %v594 = vadd.f32 %v137, %v593
    %595 = vmatmul.bf16.gmra.mxu0 %v342
    %v596 = vpop.f32.mrf.mxu0
    %v597 = vadd.f32 %v137, %v596
    %v598 = vpop.f32.mrf.mxu0
    %v599 = vadd.f32 %v137, %v598
    %600 = vmatmul.bf16.gmra.mxu0 %v344
    %v601 = vpop.f32.mrf.mxu0
    %v602 = vadd.f32 %v137, %v601
    %v603 = vpop.f32.mrf.mxu0
    %v604 = vadd.f32 %v137, %v603
    %605 = vmatmul.bf16.gmra.mxu0 %v346
    %v606 = vpop.f32.mrf.mxu0
    %v607 = vadd.f32 %v137, %v606
    %v608 = vpop.f32.mrf.mxu0
    %v609 = vadd.f32 %v137, %v608
    %610 = vmatmul.bf16.gmra.mxu0 %v348
    %v611 = vpop.f32.mrf.mxu0
    %v612 = vadd.f32 %v137, %v611
    %v613 = vpop.f32.mrf.mxu0
    %v614 = vadd.f32 %v137, %v613
    %615 = vmatmul.bf16.gmra.mxu0 %v350
    %v616 = vpop.f32.mrf.mxu0
    %v617 = vadd.f32 %v137, %v616
    %v618 = vpop.f32.mrf.mxu0
    %v619 = vadd.f32 %v137, %v618
    %620 = vmatmul.bf16.gmra.mxu0 %v352
    %v621 = vpop.f32.mrf.mxu0
    %v622 = vadd.f32 %v137, %v621
    %v623 = vpop.f32.mrf.mxu0
    %v624 = vadd.f32 %v137, %v623
    %625 = vmatmul.bf16.gmra.mxu0 %v354
    %v626 = vpop.f32.mrf.mxu0
    %v627 = vadd.f32 %v137, %v626
    %v628 = vpop.f32.mrf.mxu0
    %v629 = vadd.f32 %v137, %v628
    %630 = vmatmul.bf16.gmra.mxu0 %v356
    %v631 = vpop.f32.mrf.mxu0
    %v632 = vadd.f32 %v137, %v631
    %v633 = vpop.f32.mrf.mxu0
    %v634 = vadd.f32 %v137, %v633
    %635 = vmatmul.bf16.gmra.mxu0 %v358
    %v636 = vpop.f32.mrf.mxu0
    %v637 = vadd.f32 %v137, %v636
    %v638 = vpop.f32.mrf.mxu0
    %v639 = vadd.f32 %v137, %v638
    %640 = vmatmul.bf16.gmra.mxu0 %v360
    %v641 = vpop.f32.mrf.mxu0
    %v642 = vadd.f32 %v137, %v641
    %v643 = vpop.f32.mrf.mxu0
    %v644 = vadd.f32 %v137, %v643
    %645 = vmatmul.bf16.gmra.mxu0 %v362
    %v646 = vpop.f32.mrf.mxu0
    %v647 = vadd.f32 %v137, %v646
    %v648 = vpop.f32.mrf.mxu0
    %v649 = vadd.f32 %v137, %v648
    %650 = vmatmul.bf16.gmra.mxu0 %v364
    %v651 = vpop.f32.mrf.mxu0
    %v652 = vadd.f32 %v137, %v651
    %v653 = vpop.f32.mrf.mxu0
    %v654 = vadd.f32 %v137, %v653
    %655 = vmatmul.bf16.gmra.mxu0 %v366
    %v656 = vpop.f32.mrf.mxu0
    %v657 = vadd.f32 %v137, %v656
    %v658 = vpop.f32.mrf.mxu0
    %v659 = vadd.f32 %v137, %v658
    %660 = vmatmul.bf16.gmra.mxu0 %v368
    %v661 = vpop.f32.mrf.mxu0
    %v662 = vadd.f32 %v137, %v661
    %v663 = vpop.f32.mrf.mxu0
    %v664 = vadd.f32 %v137, %v663
    %665 = vmatmul.bf16.gmra.mxu0 %v370
    %v666 = vpop.f32.mrf.mxu0
    %v667 = vadd.f32 %v137, %v666
    %v668 = vpop.f32.mrf.mxu0
    %v669 = vadd.f32 %v137, %v668
    %670 = vmatmul.bf16.gmra.mxu0 %v372
    %v671 = vpop.f32.mrf.mxu0
    %v672 = vadd.f32 %v137, %v671
    %v673 = vpop.f32.mrf.mxu0
    %v674 = vadd.f32 %v137, %v673
    %675 = vmatmul.bf16.gmra.mxu0 %v374
    %v676 = vpop.f32.mrf.mxu0
    %v677 = vadd.f32 %v137, %v676
    %v678 = vpop.f32.mrf.mxu0
    %v679 = vadd.f32 %v137, %v678
    %680 = vmatmul.bf16.gmra.mxu0 %v376
    %v681 = vpop.f32.mrf.mxu0
    %v682 = vadd.f32 %v137, %v681
    %v683 = vpop.f32.mrf.mxu0
    %v684 = vadd.f32 %v137, %v683
    %685 = vmatmul.bf16.gmra.mxu0 %v378
    %v686 = vpop.f32.mrf.mxu0
    %v687 = vadd.f32 %v137, %v686
    %v688 = vpop.f32.mrf.mxu0
    %v689 = vadd.f32 %v137, %v688
    %690 = vmatmul.bf16.gmra.mxu0 %v380
    %v691 = vpop.f32.mrf.mxu0
    %v692 = vadd.f32 %v137, %v691
    %v693 = vpop.f32.mrf.mxu0
    %v694 = vadd.f32 %v137, %v693
    %695 = vmatmul.bf16.gmra.mxu0 %v382
    %v696 = vpop.f32.mrf.mxu0
    %v697 = vadd.f32 %v137, %v696
    %v698 = vpop.f32.mrf.mxu0
    %v699 = vadd.f32 %v137, %v698
    %700 = vmatmul.bf16.gmra.mxu0 %v384
    %v701 = vpop.f32.mrf.mxu0
    %v702 = vadd.f32 %v137, %v701
    %v703 = vpop.f32.mrf.mxu0
    %v704 = vadd.f32 %v137, %v703
    %705 = vmatmul.bf16.gmra.mxu0 %v386
    %v706 = vpop.f32.mrf.mxu0
    %v707 = vadd.f32 %v137, %v706
    %v708 = vpop.f32.mrf.mxu0
    %v709 = vadd.f32 %v137, %v708
    %710 = vmatmul.bf16.gmra.mxu0 %v388
    %v711 = vpop.f32.mrf.mxu0
    %v712 = vadd.f32 %v137, %v711
    %v713 = vpop.f32.mrf.mxu0
    %v714 = vadd.f32 %v137, %v713
    %715 = vmatmul.bf16.gmra.mxu0 %v390
    %v716 = vpop.f32.mrf.mxu0
    %v717 = vadd.f32 %v137, %v716
    %v718 = vpop.f32.mrf.mxu0
    %719 = vdwg.mxu0
    %720 = vmatpush.bf16.msra.mxu0 %v535
    %721 = vmatpush.bf16.msra.mxu0 %v534
    %722 = vmatpush.bf16.msra.mxu0 %v533
    %723 = vmatpush.bf16.msra.mxu0 %v532
    %724 = vmatpush.bf16.msra.mxu0 %v531
    %725 = vmatpush.bf16.msra.mxu0 %v530
    %726 = vmatpush.bf16.msra.mxu0 %v529
    %727 = vmatpush.bf16.msra.mxu0 %v528
    %728 = vmatmul.bf16.gmra.mxu0 %v329
    %v729 = vpop.f32.mrf.mxu0
    %v730 = vadd.f32 %v562, %v729
    %v731 = vpop.f32.mrf.mxu0
    %v732 = vadd.f32 %v564, %v731
    %733 = vmatmul.bf16.gmra.mxu0 %v331
    %v734 = vpop.f32.mrf.mxu0
    %v735 = vadd.f32 %v567, %v734
    %v736 = vpop.f32.mrf.mxu0
    %v737 = vadd.f32 %v569, %v736
    %738 = vmatmul.bf16.gmra.mxu0 %v333
    %v739 = vpop.f32.mrf.mxu0
    %v740 = vadd.f32 %v572, %v739
    %v741 = vpop.f32.mrf.mxu0
    %v742 = vadd.f32 %v574, %v741
    %743 = vmatmul.bf16.gmra.mxu0 %v335
    %v744 = vpop.f32.mrf.mxu0
    %v745 = vadd.f32 %v577, %v744
    %v746 = vpop.f32.mrf.mxu0
    %v747 = vadd.f32 %v579, %v746
    %748 = vmatmul.bf16.gmra.mxu0 %v337
    %v749 = vpop.f32.mrf.mxu0
    %v750 = vadd.f32 %v582, %v749
    %v751 = vpop.f32.mrf.mxu0
    %v752 = vadd.f32 %v584, %v751
    %753 = vmatmul.bf16.gmra.mxu0 %v339
    %v754 = vpop.f32.mrf.mxu0
    %v755 = vadd.f32 %v587, %v754
    %v756 = vpop.f32.mrf.mxu0
    %v757 = vadd.f32 %v589, %v756
    %758 = vmatmul.bf16.gmra.mxu0 %v341
    %v759 = vpop.f32.mrf.mxu0
    %v760 = vadd.f32 %v592, %v759
    %v761 = vpop.f32.mrf.mxu0
    %v762 = vadd.f32 %v594, %v761
    %763 = vmatmul.bf16.gmra.mxu0 %v343
    %v764 = vpop.f32.mrf.mxu0
    %v765 = vadd.f32 %v597, %v764
    %v766 = vpop.f32.mrf.mxu0
    %v767 = vadd.f32 %v599, %v766
    %768 = vmatmul.bf16.gmra.mxu0 %v345
    %v769 = vpop.f32.mrf.mxu0
    %v770 = vadd.f32 %v602, %v769
    %v771 = vpop.f32.mrf.mxu0
    %v772 = vadd.f32 %v604, %v771
    %773 = vmatmul.bf16.gmra.mxu0 %v347
    %v774 = vpop.f32.mrf.mxu0
    %v775 = vadd.f32 %v607, %v774
    %v776 = vpop.f32.mrf.mxu0
    %v777 = vadd.f32 %v609, %v776
    %778 = vmatmul.bf16.gmra.mxu0 %v349
    %v779 = vpop.f32.mrf.mxu0
    %v780 = vadd.f32 %v612, %v779
    %v781 = vpop.f32.mrf.mxu0
    %v782 = vadd.f32 %v614, %v781
    %783 = vmatmul.bf16.gmra.mxu0 %v351
    %v784 = vpop.f32.mrf.mxu0
    %v785 = vadd.f32 %v617, %v784
    %v786 = vpop.f32.mrf.mxu0
    %v787 = vadd.f32 %v619, %v786
    %788 = vmatmul.bf16.gmra.mxu0 %v353
    %v789 = vpop.f32.mrf.mxu0
    %v790 = vadd.f32 %v622, %v789
    %v791 = vpop.f32.mrf.mxu0
    %v792 = vadd.f32 %v624, %v791
    %793 = vmatmul.bf16.gmra.mxu0 %v355
    %v794 = vpop.f32.mrf.mxu0
    %v795 = vadd.f32 %v627, %v794
    %v796 = vpop.f32.mrf.mxu0
    %v797 = vadd.f32 %v629, %v796
    %798 = vmatmul.bf16.gmra.mxu0 %v357
    %v799 = vpop.f32.mrf.mxu0
    %v800 = vadd.f32 %v632, %v799
    %v801 = vpop.f32.mrf.mxu0
    %v802 = vadd.f32 %v634, %v801
    %803 = vmatmul.bf16.gmra.mxu0 %v359
    %v804 = vpop.f32.mrf.mxu0
    %v805 = vadd.f32 %v637, %v804
    %v806 = vpop.f32.mrf.mxu0
    %v807 = vadd.f32 %v639, %v806
    %808 = vmatmul.bf16.gmra.mxu0 %v361
    %v809 = vpop.f32.mrf.mxu0
    %v810 = vadd.f32 %v642, %v809
    %v811 = vpop.f32.mrf.mxu0
    %v812 = vadd.f32 %v644, %v811
    %813 = vmatmul.bf16.gmra.mxu0 %v363
    %v814 = vpop.f32.mrf.mxu0
    %v815 = vadd.f32 %v647, %v814
    %v816 = vpop.f32.mrf.mxu0
    %v817 = vadd.f32 %v649, %v816
    %818 = vmatmul.bf16.gmra.mxu0 %v365
    %v819 = vpop.f32.mrf.mxu0
    %v820 = vadd.f32 %v652, %v819
    %v821 = vpop.f32.mrf.mxu0
    %v822 = vadd.f32 %v654, %v821
    %823 = vmatmul.bf16.gmra.mxu0 %v367
    %v824 = vpop.f32.mrf.mxu0
    %v825 = vadd.f32 %v657, %v824
    %v826 = vpop.f32.mrf.mxu0
    %v827 = vadd.f32 %v659, %v826
    %828 = vmatmul.bf16.gmra.mxu0 %v369
    %v829 = vpop.f32.mrf.mxu0
    %v830 = vadd.f32 %v662, %v829
    %v831 = vpop.f32.mrf.mxu0
    %v832 = vadd.f32 %v664, %v831
    %833 = vmatmul.bf16.gmra.mxu0 %v371
    %v834 = vpop.f32.mrf.mxu0
    %v835 = vadd.f32 %v667, %v834
    %v836 = vpop.f32.mrf.mxu0
    %v837 = vadd.f32 %v669, %v836
    %838 = vmatmul.bf16.gmra.mxu0 %v373
    %v839 = vpop.f32.mrf.mxu0
    %v840 = vadd.f32 %v672, %v839
    %v841 = vpop.f32.mrf.mxu0
    %v842 = vadd.f32 %v674, %v841
    %843 = vmatmul.bf16.gmra.mxu0 %v375
    %v844 = vpop.f32.mrf.mxu0
    %v845 = vadd.f32 %v677, %v844
    %v846 = vpop.f32.mrf.mxu0
    %v847 = vadd.f32 %v679, %v846
    %848 = vmatmul.bf16.gmra.mxu0 %v377
    %v849 = vpop.f32.mrf.mxu0
    %v850 = vadd.f32 %v682, %v849
    %v851 = vpop.f32.mrf.mxu0
    %v852 = vadd.f32 %v684, %v851
    %853 = vmatmul.bf16.gmra.mxu0 %v379
    %v854 = vpop.f32.mrf.mxu0
    %v855 = vadd.f32 %v687, %v854
    %v856 = vpop.f32.mrf.mxu0
    %v857 = vadd.f32 %v689, %v856
    %858 = vmatmul.bf16.gmra.mxu0 %v381
    %v859 = vpop.f32.mrf.mxu0
    %v860 = vadd.f32 %v692, %v859
    %v861 = vpop.f32.mrf.mxu0
    %v862 = vadd.f32 %v694, %v861
    %863 = vmatmul.bf16.gmra.mxu0 %v383
    %v864 = vpop.f32.mrf.mxu0
    %v865 = vadd.f32 %v697, %v864
    %v866 = vpop.f32.mrf.mxu0
    %v867 = vadd.f32 %v699, %v866
    %868 = vmatmul.bf16.gmra.mxu0 %v385
    %v869 = vpop.f32.mrf.mxu0
    %v870 = vadd.f32 %v702, %v869
    %v871 = vpop.f32.mrf.mxu0
    %v872 = vadd.f32 %v704, %v871
    %873 = vmatmul.bf16.gmra.mxu0 %v387
    %v874 = vpop.f32.mrf.mxu0
    %v875 = vadd.f32 %v707, %v874
    %v876 = vpop.f32.mrf.mxu0
    %v877 = vadd.f32 %v709, %v876
    %878 = vmatmul.bf16.gmra.mxu0 %v389
    %v879 = vpop.f32.mrf.mxu0
    %v880 = vadd.f32 %v712, %v879
    %v881 = vpop.f32.mrf.mxu0
    %v882 = vadd.f32 %v714, %v881
    %883 = vmatmul.bf16.gmra.mxu0 %v391
    %v884 = vpop.f32.mrf.mxu0
    %v885 = vadd.f32 %v717, %v884
    %v886 = vpop.f32.mrf.mxu0
    %887 = vdwg.mxu0
    %v888 = vmax.f32 %v730, 0.0
    %v889 = vmax.f32 %v732, 0.0
    %v890 = vmax.f32 %v735, 0.0
    %v891 = vmax.f32 %v737, 0.0
    %v892 = vmax.f32 %v740, 0.0
    %v893 = vmax.f32 %v742, 0.0
    %v894 = vmax.f32 %v745, 0.0
    %v895 = vmax.f32 %v747, 0.0
    %v896 = vmax.f32 %v750, 0.0
    %v897 = vmax.f32 %v752, 0.0
    %v898 = vmax.f32 %v755, 0.0
    %v899 = vmax.f32 %v757, 0.0
    %v900 = vmax.f32 %v760, 0.0
    %v901 = vmax.f32 %v762, 0.0
    %v902 = vmax.f32 %v765, 0.0
    %v903 = vmax.f32 %v767, 0.0
    %v904 = vmax.f32 %v770, 0.0
    %v905 = vmax.f32 %v772, 0.0
    %v906 = vmax.f32 %v775, 0.0
    %v907 = vmax.f32 %v777, 0.0
    %v908 = vmax.f32 %v780, 0.0
    %v909 = vmax.f32 %v782, 0.0
    %v910 = vmax.f32 %v785, 0.0
    %v911 = vmax.f32 %v787, 0.0
    %v912 = vmax.f32 %v790, 0.0
    %v913 = vmax.f32 %v792, 0.0
    %v914 = vmax.f32 %v795, 0.0
    %v915 = vmax.f32 %v797, 0.0
    %v916 = vmax.f32 %v800, 0.0
    %v917 = vmax.f32 %v802, 0.0
    %v918 = vmax.f32 %v805, 0.0
    %v919 = vmax.f32 %v807, 0.0
    %v920 = vmax.f32 %v810, 0.0
    %v921 = vmax.f32 %v812, 0.0
    %v922 = vmax.f32 %v815, 0.0
    %v923 = vmax.f32 %v817, 0.0
    %v924 = vmax.f32 %v820, 0.0
    %v925 = vmax.f32 %v822, 0.0
    %v926 = vmax.f32 %v825, 0.0
    %v927 = vmax.f32 %v827, 0.0
    %v928 = vmax.f32 %v830, 0.0
    %v929 = vmax.f32 %v832, 0.0
    %v930 = vmax.f32 %v835, 0.0
    %v931 = vmax.f32 %v837, 0.0
    %v932 = vmax.f32 %v840, 0.0
    %v933 = vmax.f32 %v842, 0.0
    %v934 = vmax.f32 %v845, 0.0
    %v935 = vmax.f32 %v847, 0.0
    %v936 = vmax.f32 %v850, 0.0
    %v937 = vmax.f32 %v852, 0.0
    %v938 = vmax.f32 %v855, 0.0
    %v939 = vmax.f32 %v857, 0.0
    %v940 = vmax.f32 %v860, 0.0
    %v941 = vmax.f32 %v862, 0.0
    %v942 = vmax.f32 %v865, 0.0
    %v943 = vmax.f32 %v867, 0.0
    %v944 = vmax.f32 %v870, 0.0
    %v945 = vmax.f32 %v872, 0.0
    %v946 = vmax.f32 %v875, 0.0
    %v947 = vmax.f32 %v877, 0.0
    %v948 = vmax.f32 %v880, 0.0
    %v949 = vmax.f32 %v882, 0.0
    %v950 = vmax.f32 %v885, 0.0
    %vm951 = vcmask 261120
    %952 = vst.msk [vmem:[#allocation2] sm:$0xff] %vm951, %v888
    %953 = vst.msk [vmem:[#allocation2 + $0x8] sm:$0xff] %vm951, %v889
    %954 = vst.msk [vmem:[#allocation2 + $0x10] sm:$0xff] %vm951, %v890
    %955 = vst.msk [vmem:[#allocation2 + $0x18] sm:$0xff] %vm951, %v891
    %956 = vst.msk [vmem:[#allocation2 + $0x20] sm:$0xff] %vm951, %v892
    %957 = vst.msk [vmem:[#allocation2 + $0x28] sm:$0xff] %vm951, %v893
    %958 = vst.msk [vmem:[#allocation2 + $0x30] sm:$0xff] %vm951, %v894
    %959 = vst.msk [vmem:[#allocation2 + $0x38] sm:$0xff] %vm951, %v895
    %960 = vst.msk [vmem:[#allocation2 + $0x40] sm:$0xff] %vm951, %v896
    %961 = vst.msk [vmem:[#allocation2 + $0x48] sm:$0xff] %vm951, %v897
    %962 = vst.msk [vmem:[#allocation2 + $0x50] sm:$0xff] %vm951, %v898
    %963 = vst.msk [vmem:[#allocation2 + $0x58] sm:$0xff] %vm951, %v899
    %964 = vst.msk [vmem:[#allocation2 + $0x60] sm:$0xff] %vm951, %v900
    %965 = vst.msk [vmem:[#allocation2 + $0x68] sm:$0xff] %vm951, %v901
    %966 = vst.msk [vmem:[#allocation2 + $0x70] sm:$0xff] %vm951, %v902
    %967 = vst.msk [vmem:[#allocation2 + $0x78] sm:$0xff] %vm951, %v903
    %968 = vst.msk [vmem:[#allocation2 + $0x80] sm:$0xff] %vm951, %v904
    %969 = vst.msk [vmem:[#allocation2 + $0x88] sm:$0xff] %vm951, %v905
    %970 = vst.msk [vmem:[#allocation2 + $0x90] sm:$0xff] %vm951, %v906
    %971 = vst.msk [vmem:[#allocation2 + $0x98] sm:$0xff] %vm951, %v907
    %972 = vst.msk [vmem:[#allocation2 + $0xa0] sm:$0xff] %vm951, %v908
    %973 = vst.msk [vmem:[#allocation2 + $0xa8] sm:$0xff] %vm951, %v909
    %974 = vst.msk [vmem:[#allocation2 + $0xb0] sm:$0xff] %vm951, %v910
    %975 = vst.msk [vmem:[#allocation2 + $0xb8] sm:$0xff] %vm951, %v911
    %976 = vst.msk [vmem:[#allocation2 + $0xc0] sm:$0xff] %vm951, %v912
    %977 = vst.msk [vmem:[#allocation2 + $0xc8] sm:$0xff] %vm951, %v913
    %978 = vst.msk [vmem:[#allocation2 + $0xd0] sm:$0xff] %vm951, %v914
    %979 = vst.msk [vmem:[#allocation2 + $0xd8] sm:$0xff] %vm951, %v915
    %980 = vst.msk [vmem:[#allocation2 + $0xe0] sm:$0xff] %vm951, %v916
    %981 = vst.msk [vmem:[#allocation2 + $0xe8] sm:$0xff] %vm951, %v917
    %982 = vst.msk [vmem:[#allocation2 + $0xf0] sm:$0xff] %vm951, %v918
    %983 = vst.msk [vmem:[#allocation2 + $0xf8] sm:$0xff] %vm951, %v919
    %984 = vst.msk [vmem:[#allocation2 + $0x100] sm:$0xff] %vm951, %v920
    %985 = vst.msk [vmem:[#allocation2 + $0x108] sm:$0xff] %vm951, %v921
    %986 = vst.msk [vmem:[#allocation2 + $0x110] sm:$0xff] %vm951, %v922
    %987 = vst.msk [vmem:[#allocation2 + $0x118] sm:$0xff] %vm951, %v923
    %988 = vst.msk [vmem:[#allocation2 + $0x120] sm:$0xff] %vm951, %v924
    %989 = vst.msk [vmem:[#allocation2 + $0x128] sm:$0xff] %vm951, %v925
    %990 = vst.msk [vmem:[#allocation2 + $0x130] sm:$0xff] %vm951, %v926
    %991 = vst.msk [vmem:[#allocation2 + $0x138] sm:$0xff] %vm951, %v927
    %992 = vst.msk [vmem:[#allocation2 + $0x140] sm:$0xff] %vm951, %v928
    %993 = vst.msk [vmem:[#allocation2 + $0x148] sm:$0xff] %vm951, %v929
    %994 = vst.msk [vmem:[#allocation2 + $0x150] sm:$0xff] %vm951, %v930
    %995 = vst.msk [vmem:[#allocation2 + $0x158] sm:$0xff] %vm951, %v931
    %996 = vst.msk [vmem:[#allocation2 + $0x160] sm:$0xff] %vm951, %v932
    %997 = vst.msk [vmem:[#allocation2 + $0x168] sm:$0xff] %vm951, %v933
    %998 = vst.msk [vmem:[#allocation2 + $0x170] sm:$0xff] %vm951, %v934
    %999 = vst.msk [vmem:[#allocation2 + $0x178] sm:$0xff] %vm951, %v935
    %1000 = vst.msk [vmem:[#allocation2 + $0x180] sm:$0xff] %vm951, %v936
    %1001 = vst.msk [vmem:[#allocation2 + $0x188] sm:$0xff] %vm951, %v937
    %1002 = vst.msk [vmem:[#allocation2 + $0x190] sm:$0xff] %vm951, %v938
    %1003 = vst.msk [vmem:[#allocation2 + $0x198] sm:$0xff] %vm951, %v939
    %1004 = vst.msk [vmem:[#allocation2 + $0x1a0] sm:$0xff] %vm951, %v940
    %1005 = vst.msk [vmem:[#allocation2 + $0x1a8] sm:$0xff] %vm951, %v941
    %1006 = vst.msk [vmem:[#allocation2 + $0x1b0] sm:$0xff] %vm951, %v942
    %1007 = vst.msk [vmem:[#allocation2 + $0x1b8] sm:$0xff] %vm951, %v943
    %1008 = vst.msk [vmem:[#allocation2 + $0x1c0] sm:$0xff] %vm951, %v944
    %1009 = vst.msk [vmem:[#allocation2 + $0x1c8] sm:$0xff] %vm951, %v945
    %1010 = vst.msk [vmem:[#allocation2 + $0x1d0] sm:$0xff] %vm951, %v946
    %1011 = vst.msk [vmem:[#allocation2 + $0x1d8] sm:$0xff] %vm951, %v947
    %1012 = vst.msk [vmem:[#allocation2 + $0x1e0] sm:$0xff] %vm951, %v948
    %1013 = vst.msk [vmem:[#allocation2 + $0x1e8] sm:$0xff] %vm951, %v949
    %1014 = vst.msk [vmem:[#allocation2 + $0x1f0] sm:$0xff] %vm951, %v950
    %v1015 = vld [vmem:[#allocation2] sm:$0xff]
    %v1016 = vld [vmem:[#allocation2 + $0x8] sm:$0xff]
    %1017 = vst.msk [vmem:[#allocation3] sm:$0xff] %vm951, %v1015
    %1018 = vst.msk [vmem:[#allocation3 + $0x20] sm:$0xff] %vm951, %v1016
    %v1019 = vld [vmem:[#allocation2 + $0x12] sm:$0xff]
    %v1020 = vld [vmem:[#allocation2 + $0x1a] sm:$0xff]
    %1021 = vst.msk [vmem:[#allocation3 + $0x40] sm:$0xff] %vm951, %v1019
    %1022 = vst.msk [vmem:[#allocation3 + $0x60] sm:$0xff] %vm951, %v1020
    %v1023 = vld [vmem:[#allocation2 + $0x24] sm:$0xff]
    %v1024 = vld [vmem:[#allocation2 + $0x2c] sm:$0xff]
    %1025 = vst.msk [vmem:[#allocation3 + $0x80] sm:$0xff] %vm951, %v1023
    %1026 = vst.msk [vmem:[#allocation3 + $0xa0] sm:$0xff] %vm951, %v1024
    %v1027 = vld [vmem:[#allocation2 + $0x36] sm:$0xff]
    %v1028 = vld [vmem:[#allocation2 + $0x3e] sm:$0xff]
    %1029 = vst.msk [vmem:[#allocation3 + $0xc0] sm:$0xff] %vm951, %v1027
    %1030 = vst.msk [vmem:[#allocation3 + $0xe0] sm:$0xff] %vm951, %v1028
    %v1031 = vld [vmem:[#allocation2 + $0x48] sm:$0xff]
    %v1032 = vld [vmem:[#allocation2 + $0x50] sm:$0xff]
    %1033 = vst.msk [vmem:[#allocation3 + $0x100] sm:$0xff] %vm951, %v1031
    %1034 = vst.msk [vmem:[#allocation3 + $0x120] sm:$0xff] %vm951, %v1032
    %v1035 = vld [vmem:[#allocation2 + $0x5a] sm:$0xff]
    %v1036 = vld [vmem:[#allocation2 + $0x62] sm:$0xff]
    %1037 = vst.msk [vmem:[#allocation3 + $0x140] sm:$0xff] %vm951, %v1035
    %1038 = vst.msk [vmem:[#allocation3 + $0x160] sm:$0xff] %vm951, %v1036
    %v1039 = vld [vmem:[#allocation2 + $0x7e] sm:$0xff]
    %v1040 = vld [vmem:[#allocation2 + $0x86] sm:$0xff]
    %1043 = vrot.lane.b32.xlu0 %v1039, 32
    %v1044 = vpop.permute.xlu0 %1043
    %1045 = vrot.lane.b32.xlu0 %v1040, 32
    %v1046 = vpop.permute.xlu0 %1045
    %vm1049 = vcmask 523520
    %1050 = vst.msk [vmem:[#allocation3] sm:$0xff] %vm1049, %v1044
    %1051 = vst.msk [vmem:[#allocation3 + $0x20] sm:$0xff] %vm1049, %v1046
    %v1052 = vld [vmem:[#allocation2 + $0x90] sm:$0xff]
    %v1053 = vld [vmem:[#allocation2 + $0x98] sm:$0xff]
    %1056 = vrot.lane.b32.xlu0 %v1052, 32
    %v1057 = vpop.permute.xlu0 %1056
    %1058 = vrot.lane.b32.xlu0 %v1053, 32
    %v1059 = vpop.permute.xlu0 %1058
    %1062 = vst.msk [vmem:[#allocation3 + $0x40] sm:$0xff] %vm1049, %v1057
    %1063 = vst.msk [vmem:[#allocation3 + $0x60] sm:$0xff] %vm1049, %v1059
    %v1064 = vld [vmem:[#allocation2 + $0xa2] sm:$0xff]
    %v1065 = vld [vmem:[#allocation2 + $0xaa] sm:$0xff]
    %1068 = vrot.lane.b32.xlu0 %v1064, 32
    %v1069 = vpop.permute.xlu0 %1068
    %1070 = vrot.lane.b32.xlu0 %v1065, 32
    %v1071 = vpop.permute.xlu0 %1070
    %1074 = vst.msk [vmem:[#allocation3 + $0x80] sm:$0xff] %vm1049, %v1069
    %1075 = vst.msk [vmem:[#allocation3 + $0xa0] sm:$0xff] %vm1049, %v1071
    %v1076 = vld [vmem:[#allocation2 + $0xb4] sm:$0xff]
    %v1077 = vld [vmem:[#allocation2 + $0xbc] sm:$0xff]
    %1080 = vrot.lane.b32.xlu0 %v1076, 32
    %v1081 = vpop.permute.xlu0 %1080
    %1082 = vrot.lane.b32.xlu0 %v1077, 32
    %v1083 = vpop.permute.xlu0 %1082
    %1086 = vst.msk [vmem:[#allocation3 + $0xc0] sm:$0xff] %vm1049, %v1081
    %1087 = vst.msk [vmem:[#allocation3 + $0xe0] sm:$0xff] %vm1049, %v1083
    %v1088 = vld [vmem:[#allocation2 + $0xc6] sm:$0xff]
    %v1089 = vld [vmem:[#allocation2 + $0xce] sm:$0xff]
    %1092 = vrot.lane.b32.xlu0 %v1088, 32
    %v1093 = vpop.permute.xlu0 %1092
    %1094 = vrot.lane.b32.xlu0 %v1089, 32
    %v1095 = vpop.permute.xlu0 %1094
    %1098 = vst.msk [vmem:[#allocation3 + $0x100] sm:$0xff] %vm1049, %v1093
    %1099 = vst.msk [vmem:[#allocation3 + $0x120] sm:$0xff] %vm1049, %v1095
    %v1100 = vld [vmem:[#allocation2 + $0xd8] sm:$0xff]
    %v1101 = vld [vmem:[#allocation2 + $0xe0] sm:$0xff]
    %1104 = vrot.lane.b32.xlu0 %v1100, 32
    %v1105 = vpop.permute.xlu0 %1104
    %1106 = vrot.lane.b32.xlu0 %v1101, 32
    %v1107 = vpop.permute.xlu0 %1106
    %1110 = vst.msk [vmem:[#allocation3 + $0x140] sm:$0xff] %vm1049, %v1105
    %1111 = vst.msk [vmem:[#allocation3 + $0x160] sm:$0xff] %vm1049, %v1107
    %v1112 = vld [vmem:[#allocation2 + $0x2] sm:$0xff]
    %v1113 = vld [vmem:[#allocation2 + $0xa] sm:$0xff]
    %1116 = vrot.lane.b32.xlu0 %v1112, 64
    %v1117 = vpop.permute.xlu0 %1116
    %1118 = vrot.lane.b32.xlu0 %v1113, 64
    %v1119 = vpop.permute.xlu0 %1118
    %vm1122 = vcmask 785920
    %1123 = vst.msk [vmem:[#allocation3] sm:$0xff] %vm1122, %v1117
    %1124 = vst.msk [vmem:[#allocation3 + $0x20] sm:$0xff] %vm1122, %v1119
    %v1125 = vld [vmem:[#allocation2 + $0x14] sm:$0xff]
    %v1126 = vld [vmem:[#allocation2 + $0x1c] sm:$0xff]
    %1129 = vrot.lane.b32.xlu0 %v1125, 64
    %v1130 = vpop.permute.xlu0 %1129
    %1131 = vrot.lane.b32.xlu0 %v1126, 64
    %v1132 = vpop.permute.xlu0 %1131
    %1135 = vst.msk [vmem:[#allocation3 + $0x40] sm:$0xff] %vm1122, %v1130
    %1136 = vst.msk [vmem:[#allocation3 + $0x60] sm:$0xff] %vm1122, %v1132
    %v1137 = vld [vmem:[#allocation2 + $0x26] sm:$0xff]
    %v1138 = vld [vmem:[#allocation2 + $0x2e] sm:$0xff]
    %1141 = vrot.lane.b32.xlu0 %v1137, 64
    %v1142 = vpop.permute.xlu0 %1141
    %1143 = vrot.lane.b32.xlu0 %v1138, 64
    %v1144 = vpop.permute.xlu0 %1143
    %1147 = vst.msk [vmem:[#allocation3 + $0x80] sm:$0xff] %vm1122, %v1142
    %1148 = vst.msk [vmem:[#allocation3 + $0xa0] sm:$0xff] %vm1122, %v1144
    %v1149 = vld [vmem:[#allocation2 + $0x38] sm:$0xff]
    %v1150 = vld [vmem:[#allocation2 + $0x40] sm:$0xff]
    %1153 = vrot.lane.b32.xlu0 %v1149, 64
    %v1154 = vpop.permute.xlu0 %1153
    %1155 = vrot.lane.b32.xlu0 %v1150, 64
    %v1156 = vpop.permute.xlu0 %1155
    %1159 = vst.msk [vmem:[#allocation3 + $0xc0] sm:$0xff] %vm1122, %v1154
    %1160 = vst.msk [vmem:[#allocation3 + $0xe0] sm:$0xff] %vm1122, %v1156
    %v1161 = vld [vmem:[#allocation2 + $0x4a] sm:$0xff]
    %v1162 = vld [vmem:[#allocation2 + $0x52] sm:$0xff]
    %1165 = vrot.lane.b32.xlu0 %v1161, 64
    %v1166 = vpop.permute.xlu0 %1165
    %1167 = vrot.lane.b32.xlu0 %v1162, 64
    %v1168 = vpop.permute.xlu0 %1167
    %1171 = vst.msk [vmem:[#allocation3 + $0x100] sm:$0xff] %vm1122, %v1166
    %1172 = vst.msk [vmem:[#allocation3 + $0x120] sm:$0xff] %vm1122, %v1168
    %v1173 = vld [vmem:[#allocation2 + $0x5c] sm:$0xff]
    %v1174 = vld [vmem:[#allocation2 + $0x64] sm:$0xff]
    %1177 = vrot.lane.b32.xlu0 %v1173, 64
    %v1178 = vpop.permute.xlu0 %1177
    %1179 = vrot.lane.b32.xlu0 %v1174, 64
    %v1180 = vpop.permute.xlu0 %1179
    %1183 = vst.msk [vmem:[#allocation3 + $0x140] sm:$0xff] %vm1122, %v1178
    %1184 = vst.msk [vmem:[#allocation3 + $0x160] sm:$0xff] %vm1122, %v1180
    %v1185 = vld [vmem:[#allocation2 + $0x80] sm:$0xff]
    %v1186 = vld [vmem:[#allocation2 + $0x88] sm:$0xff]
    %1189 = vrot.lane.b32.xlu0 %v1185, 96
    %v1190 = vpop.permute.xlu0 %1189
    %1191 = vrot.lane.b32.xlu0 %v1186, 96
    %v1192 = vpop.permute.xlu0 %1191
    %vm1195 = vcmask 1048320
    %1196 = vst.msk [vmem:[#allocation3] sm:$0xff] %vm1195, %v1190
    %1197 = vst.msk [vmem:[#allocation3 + $0x20] sm:$0xff] %vm1195, %v1192
    %v1198 = vld [vmem:[#allocation2 + $0x92] sm:$0xff]
    %v1199 = vld [vmem:[#allocation2 + $0x9a] sm:$0xff]
    %1202 = vrot.lane.b32.xlu0 %v1198, 96
    %v1203 = vpop.permute.xlu0 %1202
    %1204 = vrot.lane.b32.xlu0 %v1199, 96
    %v1205 = vpop.permute.xlu0 %1204
    %1208 = vst.msk [vmem:[#allocation3 + $0x40] sm:$0xff] %vm1195, %v1203
    %1209 = vst.msk [vmem:[#allocation3 + $0x60] sm:$0xff] %vm1195, %v1205
    %v1210 = vld [vmem:[#allocation2 + $0xa4] sm:$0xff]
    %v1211 = vld [vmem:[#allocation2 + $0xac] sm:$0xff]
    %1214 = vrot.lane.b32.xlu0 %v1210, 96
    %v1215 = vpop.permute.xlu0 %1214
    %1216 = vrot.lane.b32.xlu0 %v1211, 96
    %v1217 = vpop.permute.xlu0 %1216
    %1220 = vst.msk [vmem:[#allocation3 + $0x80] sm:$0xff] %vm1195, %v1215
    %1221 = vst.msk [vmem:[#allocation3 + $0xa0] sm:$0xff] %vm1195, %v1217
    %v1222 = vld [vmem:[#allocation2 + $0xb6] sm:$0xff]
    %v1223 = vld [vmem:[#allocation2 + $0xbe] sm:$0xff]
    %1226 = vrot.lane.b32.xlu0 %v1222, 96
    %v1227 = vpop.permute.xlu0 %1226
    %1228 = vrot.lane.b32.xlu0 %v1223, 96
    %v1229 = vpop.permute.xlu0 %1228
    %1232 = vst.msk [vmem:[#allocation3 + $0xc0] sm:$0xff] %vm1195, %v1227
    %1233 = vst.msk [vmem:[#allocation3 + $0xe0] sm:$0xff] %vm1195, %v1229
    %v1234 = vld [vmem:[#allocation2 + $0xc8] sm:$0xff]
    %v1235 = vld [vmem:[#allocation2 + $0xd0] sm:$0xff]
    %1238 = vrot.lane.b32.xlu0 %v1234, 96
    %v1239 = vpop.permute.xlu0 %1238
    %1240 = vrot.lane.b32.xlu0 %v1235, 96
    %v1241 = vpop.permute.xlu0 %1240
    %1244 = vst.msk [vmem:[#allocation3 + $0x100] sm:$0xff] %vm1195, %v1239
    %1245 = vst.msk [vmem:[#allocation3 + $0x120] sm:$0xff] %vm1195, %v1241
    %v1246 = vld [vmem:[#allocation2 + $0xda] sm:$0xff]
    %v1247 = vld [vmem:[#allocation2 + $0xe2] sm:$0xff]
    %1250 = vrot.lane.b32.xlu0 %v1246, 96
    %v1251 = vpop.permute.xlu0 %1250
    %1252 = vrot.lane.b32.xlu0 %v1247, 96
    %v1253 = vpop.permute.xlu0 %1252
    %1256 = vst.msk [vmem:[#allocation3 + $0x140] sm:$0xff] %vm1195, %v1251
    %1257 = vst.msk [vmem:[#allocation3 + $0x160] sm:$0xff] %vm1195, %v1253
    %v1258 = vld [vmem:[#allocation2 + $0xfc] sm:$0xff]
    %v1259 = vld [vmem:[#allocation2 + $0x104] sm:$0xff]
    %1260 = vst.msk [vmem:[#allocation3 + $0x8] sm:$0xff] %vm951, %v1258
    %1261 = vst.msk [vmem:[#allocation3 + $0x28] sm:$0xff] %vm951, %v1259
    %v1262 = vld [vmem:[#allocation2 + $0x10e] sm:$0xff]
    %v1263 = vld [vmem:[#allocation2 + $0x116] sm:$0xff]
    %1264 = vst.msk [vmem:[#allocation3 + $0x48] sm:$0xff] %vm951, %v1262
    %1265 = vst.msk [vmem:[#allocation3 + $0x68] sm:$0xff] %vm951, %v1263
    %v1266 = vld [vmem:[#allocation2 + $0x120] sm:$0xff]
    %v1267 = vld [vmem:[#allocation2 + $0x128] sm:$0xff]
    %1268 = vst.msk [vmem:[#allocation3 + $0x88] sm:$0xff] %vm951, %v1266
    %1269 = vst.msk [vmem:[#allocation3 + $0xa8] sm:$0xff] %vm951, %v1267
    %v1270 = vld [vmem:[#allocation2 + $0x132] sm:$0xff]
    %v1271 = vld [vmem:[#allocation2 + $0x13a] sm:$0xff]
    %1272 = vst.msk [vmem:[#allocation3 + $0xc8] sm:$0xff] %vm951, %v1270
    %1273 = vst.msk [vmem:[#allocation3 + $0xe8] sm:$0xff] %vm951, %v1271
    %v1274 = vld [vmem:[#allocation2 + $0x144] sm:$0xff]
    %v1275 = vld [vmem:[#allocation2 + $0x14c] sm:$0xff]
    %1276 = vst.msk [vmem:[#allocation3 + $0x108] sm:$0xff] %vm951, %v1274
    %1277 = vst.msk [vmem:[#allocation3 + $0x128] sm:$0xff] %vm951, %v1275
    %v1278 = vld [vmem:[#allocation2 + $0x156] sm:$0xff]
    %v1279 = vld [vmem:[#allocation2 + $0x15e] sm:$0xff]
    %1280 = vst.msk [vmem:[#allocation3 + $0x148] sm:$0xff] %vm951, %v1278
    %1281 = vst.msk [vmem:[#allocation3 + $0x168] sm:$0xff] %vm951, %v1279
    %v1282 = vld [vmem:[#allocation2 + $0x17a] sm:$0xff]
    %v1283 = vld [vmem:[#allocation2 + $0x182] sm:$0xff]
    %1286 = vrot.lane.b32.xlu0 %v1282, 32
    %v1287 = vpop.permute.xlu0 %1286
    %1288 = vrot.lane.b32.xlu0 %v1283, 32
    %v1289 = vpop.permute.xlu0 %1288
    %1292 = vst.msk [vmem:[#allocation3 + $0x8] sm:$0xff] %vm1049, %v1287
    %1293 = vst.msk [vmem:[#allocation3 + $0x28] sm:$0xff] %vm1049, %v1289
    %v1294 = vld [vmem:[#allocation2 + $0x18c] sm:$0xff]
    %v1295 = vld [vmem:[#allocation2 + $0x194] sm:$0xff]
    %1298 = vrot.lane.b32.xlu0 %v1294, 32
    %v1299 = vpop.permute.xlu0 %1298
    %1300 = vrot.lane.b32.xlu0 %v1295, 32
    %v1301 = vpop.permute.xlu0 %1300
    %1304 = vst.msk [vmem:[#allocation3 + $0x48] sm:$0xff] %vm1049, %v1299
    %1305 = vst.msk [vmem:[#allocation3 + $0x68] sm:$0xff] %vm1049, %v1301
    %v1306 = vld [vmem:[#allocation2 + $0x19e] sm:$0xff]
    %v1307 = vld [vmem:[#allocation2 + $0x1a6] sm:$0xff]
    %1310 = vrot.lane.b32.xlu0 %v1306, 32
    %v1311 = vpop.permute.xlu0 %1310
    %1312 = vrot.lane.b32.xlu0 %v1307, 32
    %v1313 = vpop.permute.xlu0 %1312
    %1316 = vst.msk [vmem:[#allocation3 + $0x88] sm:$0xff] %vm1049, %v1311
    %1317 = vst.msk [vmem:[#allocation3 + $0xa8] sm:$0xff] %vm1049, %v1313
    %v1318 = vld [vmem:[#allocation2 + $0x1b0] sm:$0xff]
    %v1319 = vld [vmem:[#allocation2 + $0x1b8] sm:$0xff]
    %1322 = vrot.lane.b32.xlu0 %v1318, 32
    %v1323 = vpop.permute.xlu0 %1322
    %1324 = vrot.lane.b32.xlu0 %v1319, 32
    %v1325 = vpop.permute.xlu0 %1324
    %1328 = vst.msk [vmem:[#allocation3 + $0xc8] sm:$0xff] %vm1049, %v1323
    %1329 = vst.msk [vmem:[#allocation3 + $0xe8] sm:$0xff] %vm1049, %v1325
    %v1330 = vld [vmem:[#allocation2 + $0x1c2] sm:$0xff]
    %v1331 = vld [vmem:[#allocation2 + $0x1ca] sm:$0xff]
    %1334 = vrot.lane.b32.xlu0 %v1330, 32
    %v1335 = vpop.permute.xlu0 %1334
    %1336 = vrot.lane.b32.xlu0 %v1331, 32
    %v1337 = vpop.permute.xlu0 %1336
    %1340 = vst.msk [vmem:[#allocation3 + $0x108] sm:$0xff] %vm1049, %v1335
    %1341 = vst.msk [vmem:[#allocation3 + $0x128] sm:$0xff] %vm1049, %v1337
    %v1342 = vld [vmem:[#allocation2 + $0x1d4] sm:$0xff]
    %v1343 = vld [vmem:[#allocation2 + $0x1dc] sm:$0xff]
    %1346 = vrot.lane.b32.xlu0 %v1342, 32
    %v1347 = vpop.permute.xlu0 %1346
    %1348 = vrot.lane.b32.xlu0 %v1343, 32
    %v1349 = vpop.permute.xlu0 %1348
    %1352 = vst.msk [vmem:[#allocation3 + $0x148] sm:$0xff] %vm1049, %v1347
    %1353 = vst.msk [vmem:[#allocation3 + $0x168] sm:$0xff] %vm1049, %v1349
    %v1354 = vld [vmem:[#allocation2 + $0xfe] sm:$0xff]
    %v1355 = vld [vmem:[#allocation2 + $0x106] sm:$0xff]
    %1358 = vrot.lane.b32.xlu0 %v1354, 64
    %v1359 = vpop.permute.xlu0 %1358
    %1360 = vrot.lane.b32.xlu0 %v1355, 64
    %v1361 = vpop.permute.xlu0 %1360
    %1364 = vst.msk [vmem:[#allocation3 + $0x8] sm:$0xff] %vm1122, %v1359
    %1365 = vst.msk [vmem:[#allocation3 + $0x28] sm:$0xff] %vm1122, %v1361
    %v1366 = vld [vmem:[#allocation2 + $0x110] sm:$0xff]
    %v1367 = vld [vmem:[#allocation2 + $0x118] sm:$0xff]
    %1370 = vrot.lane.b32.xlu0 %v1366, 64
    %v1371 = vpop.permute.xlu0 %1370
    %1372 = vrot.lane.b32.xlu0 %v1367, 64
    %v1373 = vpop.permute.xlu0 %1372
    %1376 = vst.msk [vmem:[#allocation3 + $0x48] sm:$0xff] %vm1122, %v1371
    %1377 = vst.msk [vmem:[#allocation3 + $0x68] sm:$0xff] %vm1122, %v1373
    %v1378 = vld [vmem:[#allocation2 + $0x122] sm:$0xff]
    %v1379 = vld [vmem:[#allocation2 + $0x12a] sm:$0xff]
    %1382 = vrot.lane.b32.xlu0 %v1378, 64
    %v1383 = vpop.permute.xlu0 %1382
    %1384 = vrot.lane.b32.xlu0 %v1379, 64
    %v1385 = vpop.permute.xlu0 %1384
    %1388 = vst.msk [vmem:[#allocation3 + $0x88] sm:$0xff] %vm1122, %v1383
    %1389 = vst.msk [vmem:[#allocation3 + $0xa8] sm:$0xff] %vm1122, %v1385
    %v1390 = vld [vmem:[#allocation2 + $0x134] sm:$0xff]
    %v1391 = vld [vmem:[#allocation2 + $0x13c] sm:$0xff]
    %1394 = vrot.lane.b32.xlu0 %v1390, 64
    %v1395 = vpop.permute.xlu0 %1394
    %1396 = vrot.lane.b32.xlu0 %v1391, 64
    %v1397 = vpop.permute.xlu0 %1396
    %1400 = vst.msk [vmem:[#allocation3 + $0xc8] sm:$0xff] %vm1122, %v1395
    %1401 = vst.msk [vmem:[#allocation3 + $0xe8] sm:$0xff] %vm1122, %v1397
    %v1402 = vld [vmem:[#allocation2 + $0x146] sm:$0xff]
    %v1403 = vld [vmem:[#allocation2 + $0x14e] sm:$0xff]
    %1406 = vrot.lane.b32.xlu0 %v1402, 64
    %v1407 = vpop.permute.xlu0 %1406
    %1408 = vrot.lane.b32.xlu0 %v1403, 64
    %v1409 = vpop.permute.xlu0 %1408
    %1412 = vst.msk [vmem:[#allocation3 + $0x108] sm:$0xff] %vm1122, %v1407
    %1413 = vst.msk [vmem:[#allocation3 + $0x128] sm:$0xff] %vm1122, %v1409
    %v1414 = vld [vmem:[#allocation2 + $0x158] sm:$0xff]
    %v1415 = vld [vmem:[#allocation2 + $0x160] sm:$0xff]
    %1418 = vrot.lane.b32.xlu0 %v1414, 64
    %v1419 = vpop.permute.xlu0 %1418
    %1420 = vrot.lane.b32.xlu0 %v1415, 64
    %v1421 = vpop.permute.xlu0 %1420
    %1424 = vst.msk [vmem:[#allocation3 + $0x148] sm:$0xff] %vm1122, %v1419
    %1425 = vst.msk [vmem:[#allocation3 + $0x168] sm:$0xff] %vm1122, %v1421
    %v1426 = vld [vmem:[#allocation2 + $0x17c] sm:$0xff]
    %v1427 = vld [vmem:[#allocation2 + $0x184] sm:$0xff]
    %1430 = vrot.lane.b32.xlu0 %v1426, 96
    %v1431 = vpop.permute.xlu0 %1430
    %1432 = vrot.lane.b32.xlu0 %v1427, 96
    %v1433 = vpop.permute.xlu0 %1432
    %1436 = vst.msk [vmem:[#allocation3 + $0x8] sm:$0xff] %vm1195, %v1431
    %1437 = vst.msk [vmem:[#allocation3 + $0x28] sm:$0xff] %vm1195, %v1433
    %v1438 = vld [vmem:[#allocation2 + $0x18e] sm:$0xff]
    %v1439 = vld [vmem:[#allocation2 + $0x196] sm:$0xff]
    %1442 = vrot.lane.b32.xlu0 %v1438, 96
    %v1443 = vpop.permute.xlu0 %1442
    %1444 = vrot.lane.b32.xlu0 %v1439, 96
    %v1445 = vpop.permute.xlu0 %1444
    %1448 = vst.msk [vmem:[#allocation3 + $0x48] sm:$0xff] %vm1195, %v1443
    %1449 = vst.msk [vmem:[#allocation3 + $0x68] sm:$0xff] %vm1195, %v1445
    %v1450 = vld [vmem:[#allocation2 + $0x1a0] sm:$0xff]
    %v1451 = vld [vmem:[#allocation2 + $0x1a8] sm:$0xff]
    %1454 = vrot.lane.b32.xlu0 %v1450, 96
    %v1455 = vpop.permute.xlu0 %1454
    %1456 = vrot.lane.b32.xlu0 %v1451, 96
    %v1457 = vpop.permute.xlu0 %1456
    %1460 = vst.msk [vmem:[#allocation3 + $0x88] sm:$0xff] %vm1195, %v1455
    %1461 = vst.msk [vmem:[#allocation3 + $0xa8] sm:$0xff] %vm1195, %v1457
    %v1462 = vld [vmem:[#allocation2 + $0x1b2] sm:$0xff]
    %v1463 = vld [vmem:[#allocation2 + $0x1ba] sm:$0xff]
    %1466 = vrot.lane.b32.xlu0 %v1462, 96
    %v1467 = vpop.permute.xlu0 %1466
    %1468 = vrot.lane.b32.xlu0 %v1463, 96
    %v1469 = vpop.permute.xlu0 %1468
    %1472 = vst.msk [vmem:[#allocation3 + $0xc8] sm:$0xff] %vm1195, %v1467
    %1473 = vst.msk [vmem:[#allocation3 + $0xe8] sm:$0xff] %vm1195, %v1469
    %v1474 = vld [vmem:[#allocation2 + $0x1c4] sm:$0xff]
    %v1475 = vld [vmem:[#allocation2 + $0x1cc] sm:$0xff]
    %1478 = vrot.lane.b32.xlu0 %v1474, 96
    %v1479 = vpop.permute.xlu0 %1478
    %1480 = vrot.lane.b32.xlu0 %v1475, 96
    %v1481 = vpop.permute.xlu0 %1480
    %1484 = vst.msk [vmem:[#allocation3 + $0x108] sm:$0xff] %vm1195, %v1479
    %1485 = vst.msk [vmem:[#allocation3 + $0x128] sm:$0xff] %vm1195, %v1481
    %v1486 = vld [vmem:[#allocation2 + $0x1d6] sm:$0xff]
    %v1487 = vld [vmem:[#allocation2 + $0x1de] sm:$0xff]
    %1490 = vrot.lane.b32.xlu0 %v1486, 96
    %v1491 = vpop.permute.xlu0 %1490
    %1492 = vrot.lane.b32.xlu0 %v1487, 96
    %v1493 = vpop.permute.xlu0 %1492
    %1496 = vst.msk [vmem:[#allocation3 + $0x148] sm:$0xff] %vm1195, %v1491
    %1497 = vst.msk [vmem:[#allocation3 + $0x168] sm:$0xff] %vm1195, %v1493
    %v1498 = vld [vmem:[#allocation2 + $0x12] sm:$0xff]
    %v1499 = vld [vmem:[#allocation2 + $0x1a] sm:$0xff]
    %1500 = vst.msk [vmem:[#allocation3 + $0x10] sm:$0xff] %vm951, %v1498
    %1501 = vst.msk [vmem:[#allocation3 + $0x30] sm:$0xff] %vm951, %v1499
    %v1502 = vld [vmem:[#allocation2 + $0x24] sm:$0xff]
    %v1503 = vld [vmem:[#allocation2 + $0x2c] sm:$0xff]
    %1504 = vst.msk [vmem:[#allocation3 + $0x50] sm:$0xff] %vm951, %v1502
    %1505 = vst.msk [vmem:[#allocation3 + $0x70] sm:$0xff] %vm951, %v1503
    %v1506 = vld [vmem:[#allocation2 + $0x36] sm:$0xff]
    %v1507 = vld [vmem:[#allocation2 + $0x3e] sm:$0xff]
    %1508 = vst.msk [vmem:[#allocation3 + $0x90] sm:$0xff] %vm951, %v1506
    %1509 = vst.msk [vmem:[#allocation3 + $0xb0] sm:$0xff] %vm951, %v1507
    %v1510 = vld [vmem:[#allocation2 + $0x48] sm:$0xff]
    %v1511 = vld [vmem:[#allocation2 + $0x50] sm:$0xff]
    %1512 = vst.msk [vmem:[#allocation3 + $0xd0] sm:$0xff] %vm951, %v1510
    %1513 = vst.msk [vmem:[#allocation3 + $0xf0] sm:$0xff] %vm951, %v1511
    %v1514 = vld [vmem:[#allocation2 + $0x5a] sm:$0xff]
    %v1515 = vld [vmem:[#allocation2 + $0x62] sm:$0xff]
    %1516 = vst.msk [vmem:[#allocation3 + $0x110] sm:$0xff] %vm951, %v1514
    %1517 = vst.msk [vmem:[#allocation3 + $0x130] sm:$0xff] %vm951, %v1515
    %v1518 = vld [vmem:[#allocation2 + $0x6c] sm:$0xff]
    %v1519 = vld [vmem:[#allocation2 + $0x74] sm:$0xff]
    %1520 = vst.msk [vmem:[#allocation3 + $0x150] sm:$0xff] %vm951, %v1518
    %1521 = vst.msk [vmem:[#allocation3 + $0x170] sm:$0xff] %vm951, %v1519
    %v1522 = vld [vmem:[#allocation2 + $0x90] sm:$0xff]
    %v1523 = vld [vmem:[#allocation2 + $0x98] sm:$0xff]
    %1526 = vrot.lane.b32.xlu0 %v1522, 32
    %v1527 = vpop.permute.xlu0 %1526
    %1528 = vrot.lane.b32.xlu0 %v1523, 32
    %v1529 = vpop.permute.xlu0 %1528
    %1532 = vst.msk [vmem:[#allocation3 + $0x10] sm:$0xff] %vm1049, %v1527
    %1533 = vst.msk [vmem:[#allocation3 + $0x30] sm:$0xff] %vm1049, %v1529
    %v1534 = vld [vmem:[#allocation2 + $0xa2] sm:$0xff]
    %v1535 = vld [vmem:[#allocation2 + $0xaa] sm:$0xff]
    %1538 = vrot.lane.b32.xlu0 %v1534, 32
    %v1539 = vpop.permute.xlu0 %1538
    %1540 = vrot.lane.b32.xlu0 %v1535, 32
    %v1541 = vpop.permute.xlu0 %1540
    %1544 = vst.msk [vmem:[#allocation3 + $0x50] sm:$0xff] %vm1049, %v1539
    %1545 = vst.msk [vmem:[#allocation3 + $0x70] sm:$0xff] %vm1049, %v1541
    %v1546 = vld [vmem:[#allocation2 + $0xb4] sm:$0xff]
    %v1547 = vld [vmem:[#allocation2 + $0xbc] sm:$0xff]
    %1550 = vrot.lane.b32.xlu0 %v1546, 32
    %v1551 = vpop.permute.xlu0 %1550
    %1552 = vrot.lane.b32.xlu0 %v1547, 32
    %v1553 = vpop.permute.xlu0 %1552
    %1556 = vst.msk [vmem:[#allocation3 + $0x90] sm:$0xff] %vm1049, %v1551
    %1557 = vst.msk [vmem:[#allocation3 + $0xb0] sm:$0xff] %vm1049, %v1553
    %v1558 = vld [vmem:[#allocation2 + $0xc6] sm:$0xff]
    %v1559 = vld [vmem:[#allocation2 + $0xce] sm:$0xff]
    %1562 = vrot.lane.b32.xlu0 %v1558, 32
    %v1563 = vpop.permute.xlu0 %1562
    %1564 = vrot.lane.b32.xlu0 %v1559, 32
    %v1565 = vpop.permute.xlu0 %1564
    %1568 = vst.msk [vmem:[#allocation3 + $0xd0] sm:$0xff] %vm1049, %v1563
    %1569 = vst.msk [vmem:[#allocation3 + $0xf0] sm:$0xff] %vm1049, %v1565
    %v1570 = vld [vmem:[#allocation2 + $0xd8] sm:$0xff]
    %v1571 = vld [vmem:[#allocation2 + $0xe0] sm:$0xff]
    %1574 = vrot.lane.b32.xlu0 %v1570, 32
    %v1575 = vpop.permute.xlu0 %1574
    %1576 = vrot.lane.b32.xlu0 %v1571, 32
    %v1577 = vpop.permute.xlu0 %1576
    %1580 = vst.msk [vmem:[#allocation3 + $0x110] sm:$0xff] %vm1049, %v1575
    %1581 = vst.msk [vmem:[#allocation3 + $0x130] sm:$0xff] %vm1049, %v1577
    %v1582 = vld [vmem:[#allocation2 + $0xea] sm:$0xff]
    %v1583 = vld [vmem:[#allocation2 + $0xf2] sm:$0xff]
    %1586 = vrot.lane.b32.xlu0 %v1582, 32
    %v1587 = vpop.permute.xlu0 %1586
    %1588 = vrot.lane.b32.xlu0 %v1583, 32
    %v1589 = vpop.permute.xlu0 %1588
    %1592 = vst.msk [vmem:[#allocation3 + $0x150] sm:$0xff] %vm1049, %v1587
    %1593 = vst.msk [vmem:[#allocation3 + $0x170] sm:$0xff] %vm1049, %v1589
    %v1594 = vld [vmem:[#allocation2 + $0x14] sm:$0xff]
    %v1595 = vld [vmem:[#allocation2 + $0x1c] sm:$0xff]
    %1598 = vrot.lane.b32.xlu0 %v1594, 64
    %v1599 = vpop.permute.xlu0 %1598
    %1600 = vrot.lane.b32.xlu0 %v1595, 64
    %v1601 = vpop.permute.xlu0 %1600
    %1604 = vst.msk [vmem:[#allocation3 + $0x10] sm:$0xff] %vm1122, %v1599
    %1605 = vst.msk [vmem:[#allocation3 + $0x30] sm:$0xff] %vm1122, %v1601
    %v1606 = vld [vmem:[#allocation2 + $0x26] sm:$0xff]
    %v1607 = vld [vmem:[#allocation2 + $0x2e] sm:$0xff]
    %1610 = vrot.lane.b32.xlu0 %v1606, 64
    %v1611 = vpop.permute.xlu0 %1610
    %1612 = vrot.lane.b32.xlu0 %v1607, 64
    %v1613 = vpop.permute.xlu0 %1612
    %1616 = vst.msk [vmem:[#allocation3 + $0x50] sm:$0xff] %vm1122, %v1611
    %1617 = vst.msk [vmem:[#allocation3 + $0x70] sm:$0xff] %vm1122, %v1613
    %v1618 = vld [vmem:[#allocation2 + $0x38] sm:$0xff]
    %v1619 = vld [vmem:[#allocation2 + $0x40] sm:$0xff]
    %1622 = vrot.lane.b32.xlu0 %v1618, 64
    %v1623 = vpop.permute.xlu0 %1622
    %1624 = vrot.lane.b32.xlu0 %v1619, 64
    %v1625 = vpop.permute.xlu0 %1624
    %1628 = vst.msk [vmem:[#allocation3 + $0x90] sm:$0xff] %vm1122, %v1623
    %1629 = vst.msk [vmem:[#allocation3 + $0xb0] sm:$0xff] %vm1122, %v1625
    %v1630 = vld [vmem:[#allocation2 + $0x4a] sm:$0xff]
    %v1631 = vld [vmem:[#allocation2 + $0x52] sm:$0xff]
    %1634 = vrot.lane.b32.xlu0 %v1630, 64
    %v1635 = vpop.permute.xlu0 %1634
    %1636 = vrot.lane.b32.xlu0 %v1631, 64
    %v1637 = vpop.permute.xlu0 %1636
    %1640 = vst.msk [vmem:[#allocation3 + $0xd0] sm:$0xff] %vm1122, %v1635
    %1641 = vst.msk [vmem:[#allocation3 + $0xf0] sm:$0xff] %vm1122, %v1637
    %v1642 = vld [vmem:[#allocation2 + $0x5c] sm:$0xff]
    %v1643 = vld [vmem:[#allocation2 + $0x64] sm:$0xff]
    %1646 = vrot.lane.b32.xlu0 %v1642, 64
    %v1647 = vpop.permute.xlu0 %1646
    %1648 = vrot.lane.b32.xlu0 %v1643, 64
    %v1649 = vpop.permute.xlu0 %1648
    %1652 = vst.msk [vmem:[#allocation3 + $0x110] sm:$0xff] %vm1122, %v1647
    %1653 = vst.msk [vmem:[#allocation3 + $0x130] sm:$0xff] %vm1122, %v1649
    %v1654 = vld [vmem:[#allocation2 + $0x6e] sm:$0xff]
    %v1655 = vld [vmem:[#allocation2 + $0x76] sm:$0xff]
    %1658 = vrot.lane.b32.xlu0 %v1654, 64
    %v1659 = vpop.permute.xlu0 %1658
    %1660 = vrot.lane.b32.xlu0 %v1655, 64
    %v1661 = vpop.permute.xlu0 %1660
    %1664 = vst.msk [vmem:[#allocation3 + $0x150] sm:$0xff] %vm1122, %v1659
    %1665 = vst.msk [vmem:[#allocation3 + $0x170] sm:$0xff] %vm1122, %v1661
    %v1666 = vld [vmem:[#allocation2 + $0x92] sm:$0xff]
    %v1667 = vld [vmem:[#allocation2 + $0x9a] sm:$0xff]
    %1670 = vrot.lane.b32.xlu0 %v1666, 96
    %v1671 = vpop.permute.xlu0 %1670
    %1672 = vrot.lane.b32.xlu0 %v1667, 96
    %v1673 = vpop.permute.xlu0 %1672
    %1676 = vst.msk [vmem:[#allocation3 + $0x10] sm:$0xff] %vm1195, %v1671
    %1677 = vst.msk [vmem:[#allocation3 + $0x30] sm:$0xff] %vm1195, %v1673
    %v1678 = vld [vmem:[#allocation2 + $0xa4] sm:$0xff]
    %v1679 = vld [vmem:[#allocation2 + $0xac] sm:$0xff]
    %1682 = vrot.lane.b32.xlu0 %v1678, 96
    %v1683 = vpop.permute.xlu0 %1682
    %1684 = vrot.lane.b32.xlu0 %v1679, 96
    %v1685 = vpop.permute.xlu0 %1684
    %1688 = vst.msk [vmem:[#allocation3 + $0x50] sm:$0xff] %vm1195, %v1683
    %1689 = vst.msk [vmem:[#allocation3 + $0x70] sm:$0xff] %vm1195, %v1685
    %v1690 = vld [vmem:[#allocation2 + $0xb6] sm:$0xff]
    %v1691 = vld [vmem:[#allocation2 + $0xbe] sm:$0xff]
    %1694 = vrot.lane.b32.xlu0 %v1690, 96
    %v1695 = vpop.permute.xlu0 %1694
    %1696 = vrot.lane.b32.xlu0 %v1691, 96
    %v1697 = vpop.permute.xlu0 %1696
    %1700 = vst.msk [vmem:[#allocation3 + $0x90] sm:$0xff] %vm1195, %v1695
    %1701 = vst.msk [vmem:[#allocation3 + $0xb0] sm:$0xff] %vm1195, %v1697
    %v1702 = vld [vmem:[#allocation2 + $0xc8] sm:$0xff]
    %v1703 = vld [vmem:[#allocation2 + $0xd0] sm:$0xff]
    %1706 = vrot.lane.b32.xlu0 %v1702, 96
    %v1707 = vpop.permute.xlu0 %1706
    %1708 = vrot.lane.b32.xlu0 %v1703, 96
    %v1709 = vpop.permute.xlu0 %1708
    %1712 = vst.msk [vmem:[#allocation3 + $0xd0] sm:$0xff] %vm1195, %v1707
    %1713 = vst.msk [vmem:[#allocation3 + $0xf0] sm:$0xff] %vm1195, %v1709
    %v1714 = vld [vmem:[#allocation2 + $0xda] sm:$0xff]
    %v1715 = vld [vmem:[#allocation2 + $0xe2] sm:$0xff]
    %1718 = vrot.lane.b32.xlu0 %v1714, 96
    %v1719 = vpop.permute.xlu0 %1718
    %1720 = vrot.lane.b32.xlu0 %v1715, 96
    %v1721 = vpop.permute.xlu0 %1720
    %1724 = vst.msk [vmem:[#allocation3 + $0x110] sm:$0xff] %vm1195, %v1719
    %1725 = vst.msk [vmem:[#allocation3 + $0x130] sm:$0xff] %vm1195, %v1721
    %v1726 = vld [vmem:[#allocation2 + $0xec] sm:$0xff]
    %v1727 = vld [vmem:[#allocation2 + $0xf4] sm:$0xff]
    %1730 = vrot.lane.b32.xlu0 %v1726, 96
    %v1731 = vpop.permute.xlu0 %1730
    %1732 = vrot.lane.b32.xlu0 %v1727, 96
    %v1733 = vpop.permute.xlu0 %1732
    %1736 = vst.msk [vmem:[#allocation3 + $0x150] sm:$0xff] %vm1195, %v1731
    %1737 = vst.msk [vmem:[#allocation3 + $0x170] sm:$0xff] %vm1195, %v1733
    %v1738 = vld [vmem:[#allocation2 + $0x10e] sm:$0xff]
    %v1739 = vld [vmem:[#allocation2 + $0x116] sm:$0xff]
    %1740 = vst.msk [vmem:[#allocation3 + $0x18] sm:$0xff] %vm951, %v1738
    %1741 = vst.msk [vmem:[#allocation3 + $0x38] sm:$0xff] %vm951, %v1739
    %v1742 = vld [vmem:[#allocation2 + $0x120] sm:$0xff]
    %v1743 = vld [vmem:[#allocation2 + $0x128] sm:$0xff]
    %1744 = vst.msk [vmem:[#allocation3 + $0x58] sm:$0xff] %vm951, %v1742
    %1745 = vst.msk [vmem:[#allocation3 + $0x78] sm:$0xff] %vm951, %v1743
    %v1746 = vld [vmem:[#allocation2 + $0x132] sm:$0xff]
    %v1747 = vld [vmem:[#allocation2 + $0x13a] sm:$0xff]
    %1748 = vst.msk [vmem:[#allocation3 + $0x98] sm:$0xff] %vm951, %v1746
    %1749 = vst.msk [vmem:[#allocation3 + $0xb8] sm:$0xff] %vm951, %v1747
    %v1750 = vld [vmem:[#allocation2 + $0x144] sm:$0xff]
    %v1751 = vld [vmem:[#allocation2 + $0x14c] sm:$0xff]
    %1752 = vst.msk [vmem:[#allocation3 + $0xd8] sm:$0xff] %vm951, %v1750
    %1753 = vst.msk [vmem:[#allocation3 + $0xf8] sm:$0xff] %vm951, %v1751
    %v1754 = vld [vmem:[#allocation2 + $0x156] sm:$0xff]
    %v1755 = vld [vmem:[#allocation2 + $0x15e] sm:$0xff]
    %1756 = vst.msk [vmem:[#allocation3 + $0x118] sm:$0xff] %vm951, %v1754
    %1757 = vst.msk [vmem:[#allocation3 + $0x138] sm:$0xff] %vm951, %v1755
    %v1758 = vld [vmem:[#allocation2 + $0x168] sm:$0xff]
    %v1759 = vld [vmem:[#allocation2 + $0x170] sm:$0xff]
    %1760 = vst.msk [vmem:[#allocation3 + $0x158] sm:$0xff] %vm951, %v1758
    %1761 = vst.msk [vmem:[#allocation3 + $0x178] sm:$0xff] %vm951, %v1759
    %v1762 = vld [vmem:[#allocation2 + $0x18c] sm:$0xff]
    %v1763 = vld [vmem:[#allocation2 + $0x194] sm:$0xff]
    %1766 = vrot.lane.b32.xlu0 %v1762, 32
    %v1767 = vpop.permute.xlu0 %1766
    %1768 = vrot.lane.b32.xlu0 %v1763, 32
    %v1769 = vpop.permute.xlu0 %1768
    %1772 = vst.msk [vmem:[#allocation3 + $0x18] sm:$0xff] %vm1049, %v1767
    %1773 = vst.msk [vmem:[#allocation3 + $0x38] sm:$0xff] %vm1049, %v1769
    %v1774 = vld [vmem:[#allocation2 + $0x19e] sm:$0xff]
    %v1775 = vld [vmem:[#allocation2 + $0x1a6] sm:$0xff]
    %1778 = vrot.lane.b32.xlu0 %v1774, 32
    %v1779 = vpop.permute.xlu0 %1778
    %1780 = vrot.lane.b32.xlu0 %v1775, 32
    %v1781 = vpop.permute.xlu0 %1780
    %1784 = vst.msk [vmem:[#allocation3 + $0x58] sm:$0xff] %vm1049, %v1779
    %1785 = vst.msk [vmem:[#allocation3 + $0x78] sm:$0xff] %vm1049, %v1781
    %v1786 = vld [vmem:[#allocation2 + $0x1b0] sm:$0xff]
    %v1787 = vld [vmem:[#allocation2 + $0x1b8] sm:$0xff]
    %1790 = vrot.lane.b32.xlu0 %v1786, 32
    %v1791 = vpop.permute.xlu0 %1790
    %1792 = vrot.lane.b32.xlu0 %v1787, 32
    %v1793 = vpop.permute.xlu0 %1792
    %1796 = vst.msk [vmem:[#allocation3 + $0x98] sm:$0xff] %vm1049, %v1791
    %1797 = vst.msk [vmem:[#allocation3 + $0xb8] sm:$0xff] %vm1049, %v1793
    %v1798 = vld [vmem:[#allocation2 + $0x1c2] sm:$0xff]
    %v1799 = vld [vmem:[#allocation2 + $0x1ca] sm:$0xff]
    %1802 = vrot.lane.b32.xlu0 %v1798, 32
    %v1803 = vpop.permute.xlu0 %1802
    %1804 = vrot.lane.b32.xlu0 %v1799, 32
    %v1805 = vpop.permute.xlu0 %1804
    %1808 = vst.msk [vmem:[#allocation3 + $0xd8] sm:$0xff] %vm1049, %v1803
    %1809 = vst.msk [vmem:[#allocation3 + $0xf8] sm:$0xff] %vm1049, %v1805
    %v1810 = vld [vmem:[#allocation2 + $0x1d4] sm:$0xff]
    %v1811 = vld [vmem:[#allocation2 + $0x1dc] sm:$0xff]
    %1814 = vrot.lane.b32.xlu0 %v1810, 32
    %v1815 = vpop.permute.xlu0 %1814
    %1816 = vrot.lane.b32.xlu0 %v1811, 32
    %v1817 = vpop.permute.xlu0 %1816
    %1820 = vst.msk [vmem:[#allocation3 + $0x118] sm:$0xff] %vm1049, %v1815
    %1821 = vst.msk [vmem:[#allocation3 + $0x138] sm:$0xff] %vm1049, %v1817
    %v1822 = vld [vmem:[#allocation2 + $0x1e6] sm:$0xff]
    %v1823 = vld [vmem:[#allocation2 + $0x1ee] sm:$0xff]
    %1826 = vrot.lane.b32.xlu0 %v1822, 32
    %v1827 = vpop.permute.xlu0 %1826
    %1828 = vrot.lane.b32.xlu0 %v1823, 32
    %v1829 = vpop.permute.xlu0 %1828
    %1832 = vst.msk [vmem:[#allocation3 + $0x158] sm:$0xff] %vm1049, %v1827
    %1833 = vst.msk [vmem:[#allocation3 + $0x178] sm:$0xff] %vm1049, %v1829
    %v1834 = vld [vmem:[#allocation2 + $0x110] sm:$0xff]
    %v1835 = vld [vmem:[#allocation2 + $0x118] sm:$0xff]
    %1838 = vrot.lane.b32.xlu0 %v1834, 64
    %v1839 = vpop.permute.xlu0 %1838
    %1840 = vrot.lane.b32.xlu0 %v1835, 64
    %v1841 = vpop.permute.xlu0 %1840
    %1844 = vst.msk [vmem:[#allocation3 + $0x18] sm:$0xff] %vm1122, %v1839
    %1845 = vst.msk [vmem:[#allocation3 + $0x38] sm:$0xff] %vm1122, %v1841
    %v1846 = vld [vmem:[#allocation2 + $0x122] sm:$0xff]
    %v1847 = vld [vmem:[#allocation2 + $0x12a] sm:$0xff]
    %1850 = vrot.lane.b32.xlu0 %v1846, 64
    %v1851 = vpop.permute.xlu0 %1850
    %1852 = vrot.lane.b32.xlu0 %v1847, 64
    %v1853 = vpop.permute.xlu0 %1852
    %1856 = vst.msk [vmem:[#allocation3 + $0x58] sm:$0xff] %vm1122, %v1851
    %1857 = vst.msk [vmem:[#allocation3 + $0x78] sm:$0xff] %vm1122, %v1853
    %v1858 = vld [vmem:[#allocation2 + $0x134] sm:$0xff]
    %v1859 = vld [vmem:[#allocation2 + $0x13c] sm:$0xff]
    %1862 = vrot.lane.b32.xlu0 %v1858, 64
    %v1863 = vpop.permute.xlu0 %1862
    %1864 = vrot.lane.b32.xlu0 %v1859, 64
    %v1865 = vpop.permute.xlu0 %1864
    %1868 = vst.msk [vmem:[#allocation3 + $0x98] sm:$0xff] %vm1122, %v1863
    %1869 = vst.msk [vmem:[#allocation3 + $0xb8] sm:$0xff] %vm1122, %v1865
    %v1870 = vld [vmem:[#allocation2 + $0x146] sm:$0xff]
    %v1871 = vld [vmem:[#allocation2 + $0x14e] sm:$0xff]
    %1874 = vrot.lane.b32.xlu0 %v1870, 64
    %v1875 = vpop.permute.xlu0 %1874
    %1876 = vrot.lane.b32.xlu0 %v1871, 64
    %v1877 = vpop.permute.xlu0 %1876
    %1880 = vst.msk [vmem:[#allocation3 + $0xd8] sm:$0xff] %vm1122, %v1875
    %1881 = vst.msk [vmem:[#allocation3 + $0xf8] sm:$0xff] %vm1122, %v1877
    %v1882 = vld [vmem:[#allocation2 + $0x158] sm:$0xff]
    %v1883 = vld [vmem:[#allocation2 + $0x160] sm:$0xff]
    %1886 = vrot.lane.b32.xlu0 %v1882, 64
    %v1887 = vpop.permute.xlu0 %1886
    %1888 = vrot.lane.b32.xlu0 %v1883, 64
    %v1889 = vpop.permute.xlu0 %1888
    %1892 = vst.msk [vmem:[#allocation3 + $0x118] sm:$0xff] %vm1122, %v1887
    %1893 = vst.msk [vmem:[#allocation3 + $0x138] sm:$0xff] %vm1122, %v1889
    %v1894 = vld [vmem:[#allocation2 + $0x16a] sm:$0xff]
    %v1895 = vld [vmem:[#allocation2 + $0x172] sm:$0xff]
    %1898 = vrot.lane.b32.xlu0 %v1894, 64
    %v1899 = vpop.permute.xlu0 %1898
    %1900 = vrot.lane.b32.xlu0 %v1895, 64
    %v1901 = vpop.permute.xlu0 %1900
    %1904 = vst.msk [vmem:[#allocation3 + $0x158] sm:$0xff] %vm1122, %v1899
    %1905 = vst.msk [vmem:[#allocation3 + $0x178] sm:$0xff] %vm1122, %v1901
    %v1906 = vld [vmem:[#allocation2 + $0x18e] sm:$0xff]
    %v1907 = vld [vmem:[#allocation2 + $0x196] sm:$0xff]
    %1910 = vrot.lane.b32.xlu0 %v1906, 96
    %v1911 = vpop.permute.xlu0 %1910
    %1912 = vrot.lane.b32.xlu0 %v1907, 96
    %v1913 = vpop.permute.xlu0 %1912
    %1916 = vst.msk [vmem:[#allocation3 + $0x18] sm:$0xff] %vm1195, %v1911
    %1917 = vst.msk [vmem:[#allocation3 + $0x38] sm:$0xff] %vm1195, %v1913
    %v1918 = vld [vmem:[#allocation2 + $0x1a0] sm:$0xff]
    %v1919 = vld [vmem:[#allocation2 + $0x1a8] sm:$0xff]
    %1922 = vrot.lane.b32.xlu0 %v1918, 96
    %v1923 = vpop.permute.xlu0 %1922
    %1924 = vrot.lane.b32.xlu0 %v1919, 96
    %v1925 = vpop.permute.xlu0 %1924
    %1928 = vst.msk [vmem:[#allocation3 + $0x58] sm:$0xff] %vm1195, %v1923
    %1929 = vst.msk [vmem:[#allocation3 + $0x78] sm:$0xff] %vm1195, %v1925
    %v1930 = vld [vmem:[#allocation2 + $0x1b2] sm:$0xff]
    %v1931 = vld [vmem:[#allocation2 + $0x1ba] sm:$0xff]
    %1934 = vrot.lane.b32.xlu0 %v1930, 96
    %v1935 = vpop.permute.xlu0 %1934
    %1936 = vrot.lane.b32.xlu0 %v1931, 96
    %v1937 = vpop.permute.xlu0 %1936
    %1940 = vst.msk [vmem:[#allocation3 + $0x98] sm:$0xff] %vm1195, %v1935
    %1941 = vst.msk [vmem:[#allocation3 + $0xb8] sm:$0xff] %vm1195, %v1937
    %v1942 = vld [vmem:[#allocation2 + $0x1c4] sm:$0xff]
    %v1943 = vld [vmem:[#allocation2 + $0x1cc] sm:$0xff]
    %1946 = vrot.lane.b32.xlu0 %v1942, 96
    %v1947 = vpop.permute.xlu0 %1946
    %1948 = vrot.lane.b32.xlu0 %v1943, 96
    %v1949 = vpop.permute.xlu0 %1948
    %1952 = vst.msk [vmem:[#allocation3 + $0xd8] sm:$0xff] %vm1195, %v1947
    %1953 = vst.msk [vmem:[#allocation3 + $0xf8] sm:$0xff] %vm1195, %v1949
    %v1954 = vld [vmem:[#allocation2 + $0x1d6] sm:$0xff]
    %v1955 = vld [vmem:[#allocation2 + $0x1de] sm:$0xff]
    %1958 = vrot.lane.b32.xlu0 %v1954, 96
    %v1959 = vpop.permute.xlu0 %1958
    %1960 = vrot.lane.b32.xlu0 %v1955, 96
    %v1961 = vpop.permute.xlu0 %1960
    %1964 = vst.msk [vmem:[#allocation3 + $0x118] sm:$0xff] %vm1195, %v1959
    %1965 = vst.msk [vmem:[#allocation3 + $0x138] sm:$0xff] %vm1195, %v1961
    %v1966 = vld [vmem:[#allocation2 + $0x1e8] sm:$0xff]
    %v1967 = vld [vmem:[#allocation2 + $0x1f0] sm:$0xff]
    %1970 = vrot.lane.b32.xlu0 %v1966, 96
    %v1971 = vpop.permute.xlu0 %1970
    %1972 = vrot.lane.b32.xlu0 %v1967, 96
    %v1973 = vpop.permute.xlu0 %1972
    %1976 = vst.msk [vmem:[#allocation3 + $0x158] sm:$0xff] %vm1195, %v1971
    %1977 = vst.msk [vmem:[#allocation3 + $0x178] sm:$0xff] %vm1195, %v1973
    %v1978 = vld [vmem:[#allocation3] sm:$0xff]
    %v1979 = vld [vmem:[#allocation3 + $0x8] sm:$0xff]
    %v1980 = vld [vmem:[#allocation3 + $0x10] sm:$0xff]
    %v1981 = vld [vmem:[#allocation3 + $0x18] sm:$0xff]
    %v1982 = vld [vmem:[#allocation3 + $0x20] sm:$0xff]
    %v1983 = vld [vmem:[#allocation3 + $0x28] sm:$0xff]
    %v1984 = vld [vmem:[#allocation3 + $0x30] sm:$0xff]
    %v1985 = vld [vmem:[#allocation3 + $0x38] sm:$0xff]
    %v1986 = vld [vmem:[#allocation3 + $0x40] sm:$0xff]
    %v1987 = vld [vmem:[#allocation3 + $0x48] sm:$0xff]
    %v1988 = vld [vmem:[#allocation3 + $0x50] sm:$0xff]
    %v1989 = vld [vmem:[#allocation3 + $0x58] sm:$0xff]
    %v1990 = vld [vmem:[#allocation3 + $0x60] sm:$0xff]
    %v1991 = vld [vmem:[#allocation3 + $0x68] sm:$0xff]
    %v1992 = vld [vmem:[#allocation3 + $0x70] sm:$0xff]
    %v1993 = vld [vmem:[#allocation3 + $0x78] sm:$0xff]
    %v1994 = vld [vmem:[#allocation3 + $0x80] sm:$0xff]
    %v1995 = vld [vmem:[#allocation3 + $0x88] sm:$0xff]
    %v1996 = vld [vmem:[#allocation3 + $0x90] sm:$0xff]
    %v1997 = vld [vmem:[#allocation3 + $0x98] sm:$0xff]
    %v1998 = vld [vmem:[#allocation3 + $0xa0] sm:$0xff]
    %v1999 = vld [vmem:[#allocation3 + $0xa8] sm:$0xff]
    %v2000 = vld [vmem:[#allocation3 + $0xb0] sm:$0xff]
    %v2001 = vld [vmem:[#allocation3 + $0xb8] sm:$0xff]
    %v2002 = vld [vmem:[#allocation3 + $0xc0] sm:$0xff]
    %v2003 = vld [vmem:[#allocation3 + $0xc8] sm:$0xff]
    %v2004 = vld [vmem:[#allocation3 + $0xd0] sm:$0xff]
    %v2005 = vld [vmem:[#allocation3 + $0xd8] sm:$0xff]
    %v2006 = vld [vmem:[#allocation3 + $0xe0] sm:$0xff]
    %v2007 = vld [vmem:[#allocation3 + $0xe8] sm:$0xff]
    %v2008 = vld [vmem:[#allocation3 + $0xf0] sm:$0xff]
    %v2009 = vld [vmem:[#allocation3 + $0xf8] sm:$0xff]
    %v2010 = vld [vmem:[#allocation3 + $0x100] sm:$0xff]
    %v2011 = vld [vmem:[#allocation3 + $0x108] sm:$0xff]
    %v2012 = vld [vmem:[#allocation3 + $0x110] sm:$0xff]
    %v2013 = vld [vmem:[#allocation3 + $0x118] sm:$0xff]
    %v2014 = vld [vmem:[#allocation3 + $0x120] sm:$0xff]
    %v2015 = vld [vmem:[#allocation3 + $0x128] sm:$0xff]
    %v2016 = vld [vmem:[#allocation3 + $0x130] sm:$0xff]
    %v2017 = vld [vmem:[#allocation3 + $0x138] sm:$0xff]
    %v2018 = vld [vmem:[#allocation3 + $0x140] sm:$0xff]
    %v2019 = vld [vmem:[#allocation3 + $0x148] sm:$0xff]
    %v2020 = vld [vmem:[#allocation3 + $0x150] sm:$0xff]
    %v2021 = vld [vmem:[#allocation3 + $0x158] sm:$0xff]
    %v2022 = vld [vmem:[#allocation3 + $0x160] sm:$0xff]
    %v2023 = vld [vmem:[#allocation3 + $0x168] sm:$0xff]
    %v2024 = vld [vmem:[#allocation3 + $0x170] sm:$0xff]
    %v2025 = vld [vmem:[#allocation3 + $0x178] sm:$0xff]
    %v2026 = vpack.c.bf16 %v1982, %v1978
    %v2027 = vpack.c.bf16 %v1983, %v1979
    %v2028 = vpack.c.bf16 %v1984, %v1980
    %v2029 = vpack.c.bf16 %v1985, %v1981
    %v2030 = vpack.c.bf16 %v1990, %v1986
    %v2031 = vpack.c.bf16 %v1991, %v1987
    %v2032 = vpack.c.bf16 %v1992, %v1988
    %v2033 = vpack.c.bf16 %v1993, %v1989
    %v2034 = vpack.c.bf16 %v1998, %v1994
    %v2035 = vpack.c.bf16 %v1999, %v1995
    %v2036 = vpack.c.bf16 %v2000, %v1996
    %v2037 = vpack.c.bf16 %v2001, %v1997
    %v2038 = vpack.c.bf16 %v2006, %v2002
    %v2039 = vpack.c.bf16 %v2007, %v2003
    %v2040 = vpack.c.bf16 %v2008, %v2004
    %v2041 = vpack.c.bf16 %v2009, %v2005
    %v2042 = vpack.c.bf16 %v2014, %v2010
    %v2043 = vpack.c.bf16 %v2015, %v2011
    %v2044 = vpack.c.bf16 %v2016, %v2012
    %v2045 = vpack.c.bf16 %v2017, %v2013
    %v2046 = vpack.c.bf16 %v2022, %v2018
    %v2047 = vpack.c.bf16 %v2023, %v2019
    %v2048 = vpack.c.bf16 %v2024, %v2020
    %v2049 = vpack.c.bf16 %v2025, %v2021
    %v2050 = vld [vmem:[%s3] sm:$0xf]
    %v2051 = vld [vmem:[%s3 + $0x4] sm:$0xf]
    %v2052 = vld [vmem:[%s3 + $0x8] sm:$0xf]
    %v2053 = vld [vmem:[%s3 + $0xc] sm:$0xf]
    %v2054 = vld [vmem:[%s3 + $0x10] sm:$0xf]
    %v2055 = vld [vmem:[%s3 + $0x14] sm:$0xf]
    %v2056 = vld [vmem:[%s3 + $0x18] sm:$0xf]
    %v2057 = vld [vmem:[%s3 + $0x1c] sm:$0xf]
    %v2058 = vld [vmem:[%s3 + $0x20] sm:$0xf]
    %v2059 = vld [vmem:[%s3 + $0x24] sm:$0xf]
    %v2060 = vld [vmem:[%s3 + $0x28] sm:$0xf]
    %v2061 = vld [vmem:[%s3 + $0x2c] sm:$0xf]
    %v2062 = vld [vmem:[%s3 + $0x30] sm:$0xf]
    %v2063 = vld [vmem:[%s3 + $0x34] sm:$0xf]
    %v2064 = vld [vmem:[%s3 + $0x38] sm:$0xf]
    %v2065 = vld [vmem:[%s3 + $0x3c] sm:$0xf]
    %v2066 = vld [vmem:[%s3 + $0x40] sm:$0xf]
    %v2067 = vld [vmem:[%s3 + $0x44] sm:$0xf]
    %v2068 = vld [vmem:[%s3 + $0x48] sm:$0xf]
    %v2069 = vld [vmem:[%s3 + $0x4c] sm:$0xf]
    %v2070 = vld [vmem:[%s3 + $0x50] sm:$0xf]
    %v2071 = vld [vmem:[%s3 + $0x54] sm:$0xf]
    %v2072 = vld [vmem:[%s3 + $0x58] sm:$0xf]
    %v2073 = vld [vmem:[%s3 + $0x5c] sm:$0xf]
    %v2074 = vld [vmem:[%s3 + $0x60] sm:$0xf]
    %v2075 = vld [vmem:[%s3 + $0x64] sm:$0xf]
    %v2076 = vld [vmem:[%s3 + $0x68] sm:$0xf]
    %v2077 = vld [vmem:[%s3 + $0x6c] sm:$0xf]
    %v2078 = vld [vmem:[%s3 + $0x70] sm:$0xf]
    %v2079 = vld [vmem:[%s3 + $0x74] sm:$0xf]
    %v2080 = vld [vmem:[%s3 + $0x78] sm:$0xf]
    %v2081 = vld [vmem:[%s3 + $0x7c] sm:$0xf]
    %v2082 = vld [vmem:[%s3 + $0x80] sm:$0xf]
    %v2083 = vld [vmem:[%s3 + $0x84] sm:$0xf]
    %v2084 = vld [vmem:[%s3 + $0x88] sm:$0xf]
    %v2085 = vld [vmem:[%s3 + $0x8c] sm:$0xf]
    %v2086 = vld [vmem:[%s3 + $0x90] sm:$0xf]
    %v2087 = vld [vmem:[%s3 + $0x94] sm:$0xf]
    %v2088 = vld [vmem:[%s3 + $0x98] sm:$0xf]
    %v2089 = vld [vmem:[%s3 + $0x9c] sm:$0xf]
    %v2090 = vld [vmem:[%s3 + $0xa0] sm:$0xf]
    %v2091 = vld [vmem:[%s3 + $0xa4] sm:$0xf]
    %v2092 = vld [vmem:[%s3 + $0xa8] sm:$0xf]
    %v2093 = vld [vmem:[%s3 + $0xac] sm:$0xf]
    %v2094 = vld [vmem:[%s3 + $0xb0] sm:$0xf]
    %v2095 = vld [vmem:[%s3 + $0xb4] sm:$0xf]
    %v2096 = vld [vmem:[%s3 + $0xb8] sm:$0xf]
    %v2097 = vld [vmem:[%s3 + $0xbc] sm:$0xf]
    %v2098 = vld [vmem:[%s3 + $0xc0] sm:$0xf]
    %v2099 = vld [vmem:[%s3 + $0xc4] sm:$0xf]
    %v2100 = vld [vmem:[%s3 + $0xc8] sm:$0xf]
    %v2101 = vld [vmem:[%s3 + $0xcc] sm:$0xf]
    %v2102 = vld [vmem:[%s3 + $0xd0] sm:$0xf]
    %v2103 = vld [vmem:[%s3 + $0xd4] sm:$0xf]
    %v2104 = vld [vmem:[%s3 + $0xd8] sm:$0xf]
    %v2105 = vld [vmem:[%s3 + $0xdc] sm:$0xf]
    %v2106 = vld [vmem:[%s3 + $0xe0] sm:$0xf]
    %v2107 = vld [vmem:[%s3 + $0xe4] sm:$0xf]
    %v2108 = vld [vmem:[%s3 + $0xe8] sm:$0xf]
    %v2109 = vld [vmem:[%s3 + $0xec] sm:$0xf]
    %v2110 = vld [vmem:[%s3 + $0xf0] sm:$0xf]
    %v2111 = vld [vmem:[%s3 + $0xf4] sm:$0xf]
    %v2112 = vld [vmem:[%s3 + $0xf8] sm:$0xf]
    %v2113 = vld [vmem:[%s3 + $0xfc] sm:$0xf]
    %v2114 = vld [vmem:[%s4] sm:$0x1]
    %v2116 = vperm.slane %v2114, 0
    %v2182 = vunpack.c.l.b16 %v2050
    %v2183 = vunpack.c.l.b16 %v2051
    %v2184 = vunpack.c.l.b16 %v2052
    %v2185 = vunpack.c.l.b16 %v2053
    %v2186 = vunpack.c.l.b16 %v2054
    %v2187 = vunpack.c.l.b16 %v2055
    %v2188 = vunpack.c.l.b16 %v2056
    %v2189 = vunpack.c.l.b16 %v2057
    %v2190 = vunpack.c.l.b16 %v2058
    %v2191 = vunpack.c.l.b16 %v2059
    %v2192 = vunpack.c.l.b16 %v2060
    %v2193 = vunpack.c.l.b16 %v2061
    %v2194 = vunpack.c.l.b16 %v2062
    %v2195 = vunpack.c.l.b16 %v2063
    %v2196 = vunpack.c.l.b16 %v2064
    %v2197 = vunpack.c.l.b16 %v2065
    %v2198 = vunpack.c.l.b16 %v2066
    %v2199 = vunpack.c.l.b16 %v2067
    %v2200 = vunpack.c.l.b16 %v2068
    %v2201 = vunpack.c.l.b16 %v2069
    %v2202 = vunpack.c.l.b16 %v2070
    %v2203 = vunpack.c.l.b16 %v2071
    %v2204 = vunpack.c.l.b16 %v2072
    %v2205 = vunpack.c.l.b16 %v2073
    %v2206 = vunpack.c.l.b16 %v2074
    %v2207 = vunpack.c.l.b16 %v2075
    %v2208 = vunpack.c.l.b16 %v2076
    %v2209 = vunpack.c.l.b16 %v2077
    %v2210 = vunpack.c.l.b16 %v2078
    %v2211 = vunpack.c.l.b16 %v2079
    %v2212 = vunpack.c.l.b16 %v2080
    %v2213 = vunpack.c.l.b16 %v2081
    %v2214 = vunpack.c.l.b16 %v2082
    %v2215 = vunpack.c.l.b16 %v2083
    %v2216 = vunpack.c.l.b16 %v2084
    %v2217 = vunpack.c.l.b16 %v2085
    %v2218 = vunpack.c.l.b16 %v2086
    %v2219 = vunpack.c.l.b16 %v2087
    %v2220 = vunpack.c.l.b16 %v2088
    %v2221 = vunpack.c.l.b16 %v2089
    %v2222 = vunpack.c.l.b16 %v2090
    %v2223 = vunpack.c.l.b16 %v2091
    %v2224 = vunpack.c.l.b16 %v2092
    %v2225 = vunpack.c.l.b16 %v2093
    %v2226 = vunpack.c.l.b16 %v2094
    %v2227 = vunpack.c.l.b16 %v2095
    %v2228 = vunpack.c.l.b16 %v2096
    %v2229 = vunpack.c.l.b16 %v2097
    %v2230 = vunpack.c.l.b16 %v2098
    %v2231 = vunpack.c.l.b16 %v2099
    %v2232 = vunpack.c.l.b16 %v2100
    %v2233 = vunpack.c.l.b16 %v2101
    %v2234 = vunpack.c.l.b16 %v2102
    %v2235 = vunpack.c.l.b16 %v2103
    %v2236 = vunpack.c.l.b16 %v2104
    %v2237 = vunpack.c.l.b16 %v2105
    %v2238 = vunpack.c.l.b16 %v2106
    %v2239 = vunpack.c.l.b16 %v2107
    %v2240 = vunpack.c.l.b16 %v2108
    %v2241 = vunpack.c.l.b16 %v2109
    %v2242 = vunpack.c.l.b16 %v2110
    %v2243 = vunpack.c.l.b16 %v2111
    %v2244 = vunpack.c.l.b16 %v2112
    %v2245 = vunpack.c.l.b16 %v2113
    %v2246 = vpack.c.b16 %v2183, %v2182
    %v2247 = vpack.c.b16 %v2185, %v2184
    %v2248 = vpack.c.b16 %v2187, %v2186
    %v2249 = vpack.c.b16 %v2189, %v2188
    %v2250 = vpack.c.b16 %v2191, %v2190
    %v2251 = vpack.c.b16 %v2193, %v2192
    %v2252 = vpack.c.b16 %v2195, %v2194
    %v2253 = vpack.c.b16 %v2197, %v2196
    %v2254 = vpack.c.b16 %v2199, %v2198
    %v2255 = vpack.c.b16 %v2201, %v2200
    %v2256 = vpack.c.b16 %v2203, %v2202
    %v2257 = vpack.c.b16 %v2205, %v2204
    %v2258 = vpack.c.b16 %v2207, %v2206
    %v2259 = vpack.c.b16 %v2209, %v2208
    %v2260 = vpack.c.b16 %v2211, %v2210
    %v2261 = vpack.c.b16 %v2213, %v2212
    %v2262 = vpack.c.b16 %v2215, %v2214
    %v2263 = vpack.c.b16 %v2217, %v2216
    %v2264 = vpack.c.b16 %v2219, %v2218
    %v2265 = vpack.c.b16 %v2221, %v2220
    %v2266 = vpack.c.b16 %v2223, %v2222
    %v2267 = vpack.c.b16 %v2225, %v2224
    %v2268 = vpack.c.b16 %v2227, %v2226
    %v2269 = vpack.c.b16 %v2229, %v2228
    %v2270 = vpack.c.b16 %v2231, %v2230
    %v2271 = vpack.c.b16 %v2233, %v2232
    %v2272 = vpack.c.b16 %v2235, %v2234
    %v2273 = vpack.c.b16 %v2237, %v2236
    %v2274 = vpack.c.b16 %v2239, %v2238
    %v2275 = vpack.c.b16 %v2241, %v2240
    %v2276 = vpack.c.b16 %v2243, %v2242
    %v2277 = vpack.c.b16 %v2245, %v2244
    %2310 = vmatpush.bf16.msra.mxu0 %v2253
    %2311 = vmatpush.bf16.msra.mxu0 %v2252
    %2312 = vmatpush.bf16.msra.mxu0 %v2251
    %2313 = vmatpush.bf16.msra.mxu0 %v2250
    %2314 = vmatpush.bf16.msra.mxu0 %v2249
    %2315 = vmatpush.bf16.msra.mxu0 %v2248
    %2316 = vmatpush.bf16.msra.mxu0 %v2247
    %2317 = vmatpush.bf16.msra.mxu0 %v2246
    %2318 = vmatmul.bf16.gmra.mxu0 %v2026
    %v2319 = vpop.f32.mrf.mxu0
    %v2320 = vadd.f32 %v2116, %v2319
    %v2321 = vpop.f32.mrf.mxu0
    %v2322 = vadd.f32 %v2116, %v2321
    %2323 = vmatmul.bf16.gmra.mxu0 %v2030
    %v2324 = vpop.f32.mrf.mxu0
    %v2325 = vadd.f32 %v2116, %v2324
    %v2326 = vpop.f32.mrf.mxu0
    %v2327 = vadd.f32 %v2116, %v2326
    %2328 = vmatmul.bf16.gmra.mxu0 %v2034
    %v2329 = vpop.f32.mrf.mxu0
    %v2330 = vadd.f32 %v2116, %v2329
    %v2331 = vpop.f32.mrf.mxu0
    %v2332 = vadd.f32 %v2116, %v2331
    %2333 = vmatmul.bf16.gmra.mxu0 %v2038
    %v2334 = vpop.f32.mrf.mxu0
    %v2335 = vadd.f32 %v2116, %v2334
    %v2336 = vpop.f32.mrf.mxu0
    %v2337 = vadd.f32 %v2116, %v2336
    %2338 = vmatmul.bf16.gmra.mxu0 %v2042
    %v2339 = vpop.f32.mrf.mxu0
    %v2340 = vadd.f32 %v2116, %v2339
    %v2341 = vpop.f32.mrf.mxu0
    %v2342 = vadd.f32 %v2116, %v2341
    %2343 = vmatmul.bf16.gmra.mxu0 %v2046
    %v2344 = vpop.f32.mrf.mxu0
    %v2345 = vadd.f32 %v2116, %v2344
    %v2346 = vpop.f32.mrf.mxu0
    %v2347 = vadd.f32 %v2116, %v2346
    %2348 = vdwg.mxu0
    %2349 = vmatpush.bf16.msra.mxu0 %v2261
    %2350 = vmatpush.bf16.msra.mxu0 %v2260
    %2351 = vmatpush.bf16.msra.mxu0 %v2259
    %2352 = vmatpush.bf16.msra.mxu0 %v2258
    %2353 = vmatpush.bf16.msra.mxu0 %v2257
    %2354 = vmatpush.bf16.msra.mxu0 %v2256
    %2355 = vmatpush.bf16.msra.mxu0 %v2255
    %2356 = vmatpush.bf16.msra.mxu0 %v2254
    %2357 = vmatmul.bf16.gmra.mxu0 %v2027
    %v2358 = vpop.f32.mrf.mxu0
    %v2359 = vadd.f32 %v2320, %v2358
    %v2360 = vpop.f32.mrf.mxu0
    %v2361 = vadd.f32 %v2322, %v2360
    %2362 = vmatmul.bf16.gmra.mxu0 %v2031
    %v2363 = vpop.f32.mrf.mxu0
    %v2364 = vadd.f32 %v2325, %v2363
    %v2365 = vpop.f32.mrf.mxu0
    %v2366 = vadd.f32 %v2327, %v2365
    %2367 = vmatmul.bf16.gmra.mxu0 %v2035
    %v2368 = vpop.f32.mrf.mxu0
    %v2369 = vadd.f32 %v2330, %v2368
    %v2370 = vpop.f32.mrf.mxu0
    %v2371 = vadd.f32 %v2332, %v2370
    %2372 = vmatmul.bf16.gmra.mxu0 %v2039
    %v2373 = vpop.f32.mrf.mxu0
    %v2374 = vadd.f32 %v2335, %v2373
    %v2375 = vpop.f32.mrf.mxu0
    %v2376 = vadd.f32 %v2337, %v2375
    %2377 = vmatmul.bf16.gmra.mxu0 %v2043
    %v2378 = vpop.f32.mrf.mxu0
    %v2379 = vadd.f32 %v2340, %v2378
    %v2380 = vpop.f32.mrf.mxu0
    %v2381 = vadd.f32 %v2342, %v2380
    %2382 = vmatmul.bf16.gmra.mxu0 %v2047
    %v2383 = vpop.f32.mrf.mxu0
    %v2384 = vadd.f32 %v2345, %v2383
    %v2385 = vpop.f32.mrf.mxu0
    %v2386 = vadd.f32 %v2347, %v2385
    %2387 = vdwg.mxu0
    %2388 = vmatpush.bf16.msra.mxu0 %v2269
    %2389 = vmatpush.bf16.msra.mxu0 %v2268
    %2390 = vmatpush.bf16.msra.mxu0 %v2267
    %2391 = vmatpush.bf16.msra.mxu0 %v2266
    %2392 = vmatpush.bf16.msra.mxu0 %v2265
    %2393 = vmatpush.bf16.msra.mxu0 %v2264
    %2394 = vmatpush.bf16.msra.mxu0 %v2263
    %2395 = vmatpush.bf16.msra.mxu0 %v2262
    %2396 = vmatmul.bf16.gmra.mxu0 %v2028
    %v2397 = vpop.f32.mrf.mxu0
    %v2398 = vadd.f32 %v2359, %v2397
    %v2399 = vpop.f32.mrf.mxu0
    %v2400 = vadd.f32 %v2361, %v2399
    %2401 = vmatmul.bf16.gmra.mxu0 %v2032
    %v2402 = vpop.f32.mrf.mxu0
    %v2403 = vadd.f32 %v2364, %v2402
    %v2404 = vpop.f32.mrf.mxu0
    %v2405 = vadd.f32 %v2366, %v2404
    %2406 = vmatmul.bf16.gmra.mxu0 %v2036
    %v2407 = vpop.f32.mrf.mxu0
    %v2408 = vadd.f32 %v2369, %v2407
    %v2409 = vpop.f32.mrf.mxu0
    %v2410 = vadd.f32 %v2371, %v2409
    %2411 = vmatmul.bf16.gmra.mxu0 %v2040
    %v2412 = vpop.f32.mrf.mxu0
    %v2413 = vadd.f32 %v2374, %v2412
    %v2414 = vpop.f32.mrf.mxu0
    %v2415 = vadd.f32 %v2376, %v2414
    %2416 = vmatmul.bf16.gmra.mxu0 %v2044
    %v2417 = vpop.f32.mrf.mxu0
    %v2418 = vadd.f32 %v2379, %v2417
    %v2419 = vpop.f32.mrf.mxu0
    %v2420 = vadd.f32 %v2381, %v2419
    %2421 = vmatmul.bf16.gmra.mxu0 %v2048
    %v2422 = vpop.f32.mrf.mxu0
    %v2423 = vadd.f32 %v2384, %v2422
    %v2424 = vpop.f32.mrf.mxu0
    %v2425 = vadd.f32 %v2386, %v2424
    %2426 = vdwg.mxu0
    %2427 = vmatpush.bf16.msra.mxu0 %v2277
    %2428 = vmatpush.bf16.msra.mxu0 %v2276
    %2429 = vmatpush.bf16.msra.mxu0 %v2275
    %2430 = vmatpush.bf16.msra.mxu0 %v2274
    %2431 = vmatpush.bf16.msra.mxu0 %v2273
    %2432 = vmatpush.bf16.msra.mxu0 %v2272
    %2433 = vmatpush.bf16.msra.mxu0 %v2271
    %2434 = vmatpush.bf16.msra.mxu0 %v2270
    %2435 = vmatmul.bf16.gmra.mxu0 %v2029
    %v2436 = vpop.f32.mrf.mxu0
    %v2437 = vadd.f32 %v2398, %v2436
    %v2438 = vpop.f32.mrf.mxu0
    %v2439 = vadd.f32 %v2400, %v2438
    %2440 = vmatmul.bf16.gmra.mxu0 %v2033
    %v2441 = vpop.f32.mrf.mxu0
    %v2442 = vadd.f32 %v2403, %v2441
    %v2443 = vpop.f32.mrf.mxu0
    %v2444 = vadd.f32 %v2405, %v2443
    %2445 = vmatmul.bf16.gmra.mxu0 %v2037
    %v2446 = vpop.f32.mrf.mxu0
    %v2447 = vadd.f32 %v2408, %v2446
    %v2448 = vpop.f32.mrf.mxu0
    %v2449 = vadd.f32 %v2410, %v2448
    %2450 = vmatmul.bf16.gmra.mxu0 %v2041
    %v2451 = vpop.f32.mrf.mxu0
    %v2452 = vadd.f32 %v2413, %v2451
    %v2453 = vpop.f32.mrf.mxu0
    %v2454 = vadd.f32 %v2415, %v2453
    %2455 = vmatmul.bf16.gmra.mxu0 %v2045
    %v2456 = vpop.f32.mrf.mxu0
    %v2457 = vadd.f32 %v2418, %v2456
    %v2458 = vpop.f32.mrf.mxu0
    %v2459 = vadd.f32 %v2420, %v2458
    %2460 = vmatmul.bf16.gmra.mxu0 %v2049
    %v2461 = vpop.f32.mrf.mxu0
    %v2462 = vadd.f32 %v2423, %v2461
    %v2463 = vpop.f32.mrf.mxu0
    %v2464 = vadd.f32 %v2425, %v2463
    %2465 = vdwg.mxu0
    %v2466 = vmax.f32 %v2437, 0.0
    %v2467 = vmax.f32 %v2439, 0.0
    %v2468 = vmax.f32 %v2442, 0.0
    %v2469 = vmax.f32 %v2444, 0.0
    %v2470 = vmax.f32 %v2447, 0.0
    %v2471 = vmax.f32 %v2449, 0.0
    %v2472 = vmax.f32 %v2452, 0.0
    %v2473 = vmax.f32 %v2454, 0.0
    %v2474 = vmax.f32 %v2457, 0.0
    %v2475 = vmax.f32 %v2459, 0.0
    %v2476 = vmax.f32 %v2462, 0.0
    %v2477 = vmax.f32 %v2464, 0.0
    %vm2478 = vcmask 523264
    %2479 = vst.msk [vmem:[#allocation4] sm:$0xff] %vm2478, %v2466
    %2480 = vst.msk [vmem:[#allocation4 + $0x8] sm:$0xff] %vm2478, %v2467
    %2481 = vst.msk [vmem:[#allocation4 + $0x10] sm:$0xff] %vm2478, %v2468
    %2482 = vst.msk [vmem:[#allocation4 + $0x18] sm:$0xff] %vm2478, %v2469
    %2483 = vst.msk [vmem:[#allocation4 + $0x20] sm:$0xff] %vm2478, %v2470
    %2484 = vst.msk [vmem:[#allocation4 + $0x28] sm:$0xff] %vm2478, %v2471
    %2485 = vst.msk [vmem:[#allocation4 + $0x30] sm:$0xff] %vm2478, %v2472
    %2486 = vst.msk [vmem:[#allocation4 + $0x38] sm:$0xff] %vm2478, %v2473
    %2487 = vst.msk [vmem:[#allocation4 + $0x40] sm:$0xff] %vm2478, %v2474
    %2488 = vst.msk [vmem:[#allocation4 + $0x48] sm:$0xff] %vm2478, %v2475
    %2489 = vst.msk [vmem:[#allocation4 + $0x50] sm:$0xff] %vm2478, %v2476
    %2490 = vst.msk [vmem:[#allocation4 + $0x58] sm:$0xff] %vm2478, %v2477
    %v2491 = vld [vmem:[#allocation4] sm:$0xff]
    %v2492 = vld [vmem:[#allocation4 + $0x8] sm:$0xf]
    %2493 = vst.msk [vmem:[#allocation5] sm:$0xff] %vm2478, %v2491
    %vm2494 = vcmask 519168
    %2495 = vst.msk [vmem:[#allocation5 + $0x28] sm:$0xf] %vm2494, %v2492
    %v2496 = vld [vmem:[#allocation4 + $0x10] sm:$0xff]
    %v2497 = vld [vmem:[#allocation4 + $0x18] sm:$0xf]
    %vm2500 = vcmask 1043456
    %v2501 = vrot.slane %v2496, 4
    %v2502 = vrot.slane %v2497, 4
    %v2503 = vsel %vm2500, %v2501, %v2502
    %vm2506 = vcmask 523268
    %2507 = vst.msk [vmem:[#allocation5 + $0x28] sm:$0xf0] %vm2506, %v2501
    %2508 = vst.msk [vmem:[#allocation5 + $0x50] sm:$0xff] %vm2478, %v2503
    %v2509 = vld [vmem:[#allocation4 + $0x20] sm:$0xff]
    %v2510 = vld [vmem:[#allocation4 + $0x28] sm:$0xf]
    %2511 = vst.msk [vmem:[#allocation5 + $0x78] sm:$0xff] %vm2478, %v2509
    %2512 = vst.msk [vmem:[#allocation5 + $0xa0] sm:$0xf] %vm2494, %v2510
    %v2513 = vld [vmem:[#allocation4 + $0x30] sm:$0xff]
    %v2514 = vld [vmem:[#allocation4 + $0x38] sm:$0xf]
    %v2517 = vrot.slane %v2513, 4
    %v2518 = vrot.slane %v2514, 4
    %v2519 = vsel %vm2500, %v2517, %v2518
    %2522 = vst.msk [vmem:[#allocation5 + $0xa0] sm:$0xf0] %vm2506, %v2517
    %2523 = vst.msk [vmem:[#allocation5 + $0xc8] sm:$0xff] %vm2478, %v2519
    %v2524 = vld [vmem:[#allocation4 + $0x2] sm:$0xff]
    %v2525 = vld [vmem:[#allocation4 + $0xa] sm:$0xf]
    %2528 = vrot.lane.b32.xlu0 %v2524, 64
    %v2529 = vpop.permute.xlu0 %2528
    %2530 = vrot.lane.b32.xlu0 %v2525, 64
    %v2531 = vpop.permute.xlu0 %2530
    %vm2534 = vcmask 1048064
    %2535 = vst.msk [vmem:[#allocation5] sm:$0xff] %vm2534, %v2529
    %vm2536 = vcmask 1043968
    %2537 = vst.msk [vmem:[#allocation5 + $0x28] sm:$0xf] %vm2536, %v2531
    %v2538 = vld [vmem:[#allocation4 + $0x12] sm:$0xff]
    %v2539 = vld [vmem:[#allocation4 + $0x1a] sm:$0xf]
    %v2542 = vrot.slane %v2538, 4
    %v2543 = vrot.slane %v2539, 4
    %v2544 = vsel %vm2500, %v2542, %v2543
    %2545 = vrot.lane.b32.xlu0 %v2542, 64
    %v2546 = vpop.permute.xlu0 %2545
    %2547 = vrot.lane.b32.xlu0 %v2544, 64
    %v2548 = vpop.permute.xlu0 %2547
    %vm2551 = vcmask 1048068
    %2552 = vst.msk [vmem:[#allocation5 + $0x28] sm:$0xf0] %vm2551, %v2546
    %2553 = vst.msk [vmem:[#allocation5 + $0x50] sm:$0xff] %vm2534, %v2548
    %v2554 = vld [vmem:[#allocation4 + $0x22] sm:$0xff]
    %v2555 = vld [vmem:[#allocation4 + $0x2a] sm:$0xf]
    %2558 = vrot.lane.b32.xlu0 %v2554, 64
    %v2559 = vpop.permute.xlu0 %2558
    %2560 = vrot.lane.b32.xlu0 %v2555, 64
    %v2561 = vpop.permute.xlu0 %2560
    %2564 = vst.msk [vmem:[#allocation5 + $0x78] sm:$0xff] %vm2534, %v2559
    %2565 = vst.msk [vmem:[#allocation5 + $0xa0] sm:$0xf] %vm2536, %v2561
    %v2566 = vld [vmem:[#allocation4 + $0x32] sm:$0xff]
    %v2567 = vld [vmem:[#allocation4 + $0x3a] sm:$0xf]
    %v2570 = vrot.slane %v2566, 4
    %v2571 = vrot.slane %v2567, 4
    %v2572 = vsel %vm2500, %v2570, %v2571
    %2573 = vrot.lane.b32.xlu0 %v2570, 64
    %v2574 = vpop.permute.xlu0 %2573
    %2575 = vrot.lane.b32.xlu0 %v2572, 64
    %v2576 = vpop.permute.xlu0 %2575
    %2579 = vst.msk [vmem:[#allocation5 + $0xa0] sm:$0xf0] %vm2551, %v2574
    %2580 = vst.msk [vmem:[#allocation5 + $0xc8] sm:$0xff] %vm2534, %v2576
    %v2581 = vld [vmem:[#allocation4 + $0x4] sm:$0xff]
    %v2582 = vld [vmem:[#allocation4 + $0xc] sm:$0xf]
    %2583 = vst.msk [vmem:[#allocation5 + $0x8] sm:$0xff] %vm2478, %v2581
    %2584 = vst.msk [vmem:[#allocation5 + $0x30] sm:$0xf] %vm2494, %v2582
    %v2585 = vld [vmem:[#allocation4 + $0x14] sm:$0xff]
    %v2586 = vld [vmem:[#allocation4 + $0x1c] sm:$0xf]
    %v2589 = vrot.slane %v2585, 4
    %v2590 = vrot.slane %v2586, 4
    %v2591 = vsel %vm2500, %v2589, %v2590
    %2594 = vst.msk [vmem:[#allocation5 + $0x30] sm:$0xf0] %vm2506, %v2589
    %2595 = vst.msk [vmem:[#allocation5 + $0x58] sm:$0xff] %vm2478, %v2591
    %v2596 = vld [vmem:[#allocation4 + $0x24] sm:$0xff]
    %v2597 = vld [vmem:[#allocation4 + $0x2c] sm:$0xf]
    %2598 = vst.msk [vmem:[#allocation5 + $0x80] sm:$0xff] %vm2478, %v2596
    %2599 = vst.msk [vmem:[#allocation5 + $0xa8] sm:$0xf] %vm2494, %v2597
    %v2600 = vld [vmem:[#allocation4 + $0x34] sm:$0xff]
    %v2601 = vld [vmem:[#allocation4 + $0x3c] sm:$0xf]
    %v2604 = vrot.slane %v2600, 4
    %v2605 = vrot.slane %v2601, 4
    %v2606 = vsel %vm2500, %v2604, %v2605
    %2609 = vst.msk [vmem:[#allocation5 + $0xa8] sm:$0xf0] %vm2506, %v2604
    %2610 = vst.msk [vmem:[#allocation5 + $0xd0] sm:$0xff] %vm2478, %v2606
    %v2611 = vld [vmem:[#allocation4 + $0x10] sm:$0xff]
    %v2612 = vld [vmem:[#allocation4 + $0x18] sm:$0xf]
    %2615 = vrot.lane.b32.xlu0 %v2611, 64
    %v2616 = vpop.permute.xlu0 %2615
    %2617 = vrot.lane.b32.xlu0 %v2612, 64
    %v2618 = vpop.permute.xlu0 %2617
    %2621 = vst.msk [vmem:[#allocation5 + $0x8] sm:$0xff] %vm2534, %v2616
    %2622 = vst.msk [vmem:[#allocation5 + $0x30] sm:$0xf] %vm2536, %v2618
    %v2623 = vld [vmem:[#allocation4 + $0x20] sm:$0xff]
    %v2624 = vld [vmem:[#allocation4 + $0x28] sm:$0xf]
    %v2627 = vrot.slane %v2623, 4
    %v2628 = vrot.slane %v2624, 4
    %v2629 = vsel %vm2500, %v2627, %v2628
    %2630 = vrot.lane.b32.xlu0 %v2627, 64
    %v2631 = vpop.permute.xlu0 %2630
    %2632 = vrot.lane.b32.xlu0 %v2629, 64
    %v2633 = vpop.permute.xlu0 %2632
    %2636 = vst.msk [vmem:[#allocation5 + $0x30] sm:$0xf0] %vm2551, %v2631
    %2637 = vst.msk [vmem:[#allocation5 + $0x58] sm:$0xff] %vm2534, %v2633
    %v2638 = vld [vmem:[#allocation4 + $0x30] sm:$0xff]
    %v2639 = vld [vmem:[#allocation4 + $0x38] sm:$0xf]
    %2642 = vrot.lane.b32.xlu0 %v2638, 64
    %v2643 = vpop.permute.xlu0 %2642
    %2644 = vrot.lane.b32.xlu0 %v2639, 64
    %v2645 = vpop.permute.xlu0 %2644
    %2648 = vst.msk [vmem:[#allocation5 + $0x80] sm:$0xff] %vm2534, %v2643
    %2649 = vst.msk [vmem:[#allocation5 + $0xa8] sm:$0xf] %vm2536, %v2645
    %v2650 = vld [vmem:[#allocation4 + $0x40] sm:$0xff]
    %v2651 = vld [vmem:[#allocation4 + $0x48] sm:$0xf]
    %v2654 = vrot.slane %v2650, 4
    %v2655 = vrot.slane %v2651, 4
    %v2656 = vsel %vm2500, %v2654, %v2655
    %2657 = vrot.lane.b32.xlu0 %v2654, 64
    %v2658 = vpop.permute.xlu0 %2657
    %2659 = vrot.lane.b32.xlu0 %v2656, 64
    %v2660 = vpop.permute.xlu0 %2659
    %2663 = vst.msk [vmem:[#allocation5 + $0xa8] sm:$0xf0] %vm2551, %v2658
    %2664 = vst.msk [vmem:[#allocation5 + $0xd0] sm:$0xff] %vm2534, %v2660
    %v2665 = vld [vmem:[#allocation4 + $0x12] sm:$0xff]
    %v2666 = vld [vmem:[#allocation4 + $0x1a] sm:$0xf]
    %2667 = vst.msk [vmem:[#allocation5 + $0x10] sm:$0xff] %vm2478, %v2665
    %2668 = vst.msk [vmem:[#allocation5 + $0x38] sm:$0xf] %vm2494, %v2666
    %v2669 = vld [vmem:[#allocation4 + $0x22] sm:$0xff]
    %v2670 = vld [vmem:[#allocation4 + $0x2a] sm:$0xf]
    %v2673 = vrot.slane %v2669, 4
    %v2674 = vrot.slane %v2670, 4
    %v2675 = vsel %vm2500, %v2673, %v2674
    %2678 = vst.msk [vmem:[#allocation5 + $0x38] sm:$0xf0] %vm2506, %v2673
    %2679 = vst.msk [vmem:[#allocation5 + $0x60] sm:$0xff] %vm2478, %v2675
    %v2680 = vld [vmem:[#allocation4 + $0x32] sm:$0xff]
    %v2681 = vld [vmem:[#allocation4 + $0x3a] sm:$0xf]
    %2682 = vst.msk [vmem:[#allocation5 + $0x88] sm:$0xff] %vm2478, %v2680
    %2683 = vst.msk [vmem:[#allocation5 + $0xb0] sm:$0xf] %vm2494, %v2681
    %v2684 = vld [vmem:[#allocation4 + $0x42] sm:$0xff]
    %v2685 = vld [vmem:[#allocation4 + $0x4a] sm:$0xf]
    %v2688 = vrot.slane %v2684, 4
    %v2689 = vrot.slane %v2685, 4
    %v2690 = vsel %vm2500, %v2688, %v2689
    %2693 = vst.msk [vmem:[#allocation5 + $0xb0] sm:$0xf0] %vm2506, %v2688
    %2694 = vst.msk [vmem:[#allocation5 + $0xd8] sm:$0xff] %vm2478, %v2690
    %v2695 = vld [vmem:[#allocation4 + $0x14] sm:$0xff]
    %v2696 = vld [vmem:[#allocation4 + $0x1c] sm:$0xf]
    %2699 = vrot.lane.b32.xlu0 %v2695, 64
    %v2700 = vpop.permute.xlu0 %2699
    %2701 = vrot.lane.b32.xlu0 %v2696, 64
    %v2702 = vpop.permute.xlu0 %2701
    %2705 = vst.msk [vmem:[#allocation5 + $0x10] sm:$0xff] %vm2534, %v2700
    %2706 = vst.msk [vmem:[#allocation5 + $0x38] sm:$0xf] %vm2536, %v2702
    %v2707 = vld [vmem:[#allocation4 + $0x24] sm:$0xff]
    %v2708 = vld [vmem:[#allocation4 + $0x2c] sm:$0xf]
    %v2711 = vrot.slane %v2707, 4
    %v2712 = vrot.slane %v2708, 4
    %v2713 = vsel %vm2500, %v2711, %v2712
    %2714 = vrot.lane.b32.xlu0 %v2711, 64
    %v2715 = vpop.permute.xlu0 %2714
    %2716 = vrot.lane.b32.xlu0 %v2713, 64
    %v2717 = vpop.permute.xlu0 %2716
    %2720 = vst.msk [vmem:[#allocation5 + $0x38] sm:$0xf0] %vm2551, %v2715
    %2721 = vst.msk [vmem:[#allocation5 + $0x60] sm:$0xff] %vm2534, %v2717
    %v2722 = vld [vmem:[#allocation4 + $0x34] sm:$0xff]
    %v2723 = vld [vmem:[#allocation4 + $0x3c] sm:$0xf]
    %2726 = vrot.lane.b32.xlu0 %v2722, 64
    %v2727 = vpop.permute.xlu0 %2726
    %2728 = vrot.lane.b32.xlu0 %v2723, 64
    %v2729 = vpop.permute.xlu0 %2728
    %2732 = vst.msk [vmem:[#allocation5 + $0x88] sm:$0xff] %vm2534, %v2727
    %2733 = vst.msk [vmem:[#allocation5 + $0xb0] sm:$0xf] %vm2536, %v2729
    %v2734 = vld [vmem:[#allocation4 + $0x44] sm:$0xff]
    %v2735 = vld [vmem:[#allocation4 + $0x4c] sm:$0xf]
    %v2738 = vrot.slane %v2734, 4
    %v2739 = vrot.slane %v2735, 4
    %v2740 = vsel %vm2500, %v2738, %v2739
    %2741 = vrot.lane.b32.xlu0 %v2738, 64
    %v2742 = vpop.permute.xlu0 %2741
    %2743 = vrot.lane.b32.xlu0 %v2740, 64
    %v2744 = vpop.permute.xlu0 %2743
    %2747 = vst.msk [vmem:[#allocation5 + $0xb0] sm:$0xf0] %vm2551, %v2742
    %2748 = vst.msk [vmem:[#allocation5 + $0xd8] sm:$0xff] %vm2534, %v2744
    %v2749 = vld [vmem:[#allocation4 + $0x20] sm:$0xff]
    %v2750 = vld [vmem:[#allocation4 + $0x28] sm:$0xf]
    %2751 = vst.msk [vmem:[#allocation5 + $0x18] sm:$0xff] %vm2478, %v2749
    %2752 = vst.msk [vmem:[#allocation5 + $0x40] sm:$0xf] %vm2494, %v2750
    %v2753 = vld [vmem:[#allocation4 + $0x30] sm:$0xff]
    %v2754 = vld [vmem:[#allocation4 + $0x38] sm:$0xf]
    %v2757 = vrot.slane %v2753, 4
    %v2758 = vrot.slane %v2754, 4
    %v2759 = vsel %vm2500, %v2757, %v2758
    %2762 = vst.msk [vmem:[#allocation5 + $0x40] sm:$0xf0] %vm2506, %v2757
    %2763 = vst.msk [vmem:[#allocation5 + $0x68] sm:$0xff] %vm2478, %v2759
    %v2764 = vld [vmem:[#allocation4 + $0x40] sm:$0xff]
    %v2765 = vld [vmem:[#allocation4 + $0x48] sm:$0xf]
    %2766 = vst.msk [vmem:[#allocation5 + $0x90] sm:$0xff] %vm2478, %v2764
    %2767 = vst.msk [vmem:[#allocation5 + $0xb8] sm:$0xf] %vm2494, %v2765
    %v2768 = vld [vmem:[#allocation4 + $0x50] sm:$0xff]
    %v2769 = vld [vmem:[#allocation4 + $0x58] sm:$0xf]
    %v2772 = vrot.slane %v2768, 4
    %v2773 = vrot.slane %v2769, 4
    %v2774 = vsel %vm2500, %v2772, %v2773
    %2777 = vst.msk [vmem:[#allocation5 + $0xb8] sm:$0xf0] %vm2506, %v2772
    %2778 = vst.msk [vmem:[#allocation5 + $0xe0] sm:$0xff] %vm2478, %v2774
    %v2779 = vld [vmem:[#allocation4 + $0x22] sm:$0xff]
    %v2780 = vld [vmem:[#allocation4 + $0x2a] sm:$0xf]
    %2783 = vrot.lane.b32.xlu0 %v2779, 64
    %v2784 = vpop.permute.xlu0 %2783
    %2785 = vrot.lane.b32.xlu0 %v2780, 64
    %v2786 = vpop.permute.xlu0 %2785
    %2789 = vst.msk [vmem:[#allocation5 + $0x18] sm:$0xff] %vm2534, %v2784
    %2790 = vst.msk [vmem:[#allocation5 + $0x40] sm:$0xf] %vm2536, %v2786
    %v2791 = vld [vmem:[#allocation4 + $0x32] sm:$0xff]
    %v2792 = vld [vmem:[#allocation4 + $0x3a] sm:$0xf]
    %v2795 = vrot.slane %v2791, 4
    %v2796 = vrot.slane %v2792, 4
    %v2797 = vsel %vm2500, %v2795, %v2796
    %2798 = vrot.lane.b32.xlu0 %v2795, 64
    %v2799 = vpop.permute.xlu0 %2798
    %2800 = vrot.lane.b32.xlu0 %v2797, 64
    %v2801 = vpop.permute.xlu0 %2800
    %2804 = vst.msk [vmem:[#allocation5 + $0x40] sm:$0xf0] %vm2551, %v2799
    %2805 = vst.msk [vmem:[#allocation5 + $0x68] sm:$0xff] %vm2534, %v2801
    %v2806 = vld [vmem:[#allocation4 + $0x42] sm:$0xff]
    %v2807 = vld [vmem:[#allocation4 + $0x4a] sm:$0xf]
    %2810 = vrot.lane.b32.xlu0 %v2806, 64
    %v2811 = vpop.permute.xlu0 %2810
    %2812 = vrot.lane.b32.xlu0 %v2807, 64
    %v2813 = vpop.permute.xlu0 %2812
    %2816 = vst.msk [vmem:[#allocation5 + $0x90] sm:$0xff] %vm2534, %v2811
    %2817 = vst.msk [vmem:[#allocation5 + $0xb8] sm:$0xf] %vm2536, %v2813
    %v2818 = vld [vmem:[#allocation4 + $0x52] sm:$0xff]
    %v2819 = vld [vmem:[#allocation4 + $0x5a] sm:$0xf]
    %v2822 = vrot.slane %v2818, 4
    %v2823 = vrot.slane %v2819, 4
    %v2824 = vsel %vm2500, %v2822, %v2823
    %2825 = vrot.lane.b32.xlu0 %v2822, 64
    %v2826 = vpop.permute.xlu0 %2825
    %2827 = vrot.lane.b32.xlu0 %v2824, 64
    %v2828 = vpop.permute.xlu0 %2827
    %2831 = vst.msk [vmem:[#allocation5 + $0xb8] sm:$0xf0] %vm2551, %v2826
    %2832 = vst.msk [vmem:[#allocation5 + $0xe0] sm:$0xff] %vm2534, %v2828
    %v2833 = vld [vmem:[#allocation4 + $0x24] sm:$0xff]
    %v2834 = vld [vmem:[#allocation4 + $0x2c] sm:$0xf]
    %2835 = vst.msk [vmem:[#allocation5 + $0x20] sm:$0xff] %vm2478, %v2833
    %2836 = vst.msk [vmem:[#allocation5 + $0x48] sm:$0xf] %vm2494, %v2834
    %v2837 = vld [vmem:[#allocation4 + $0x34] sm:$0xff]
    %v2838 = vld [vmem:[#allocation4 + $0x3c] sm:$0xf]
    %v2841 = vrot.slane %v2837, 4
    %v2842 = vrot.slane %v2838, 4
    %v2843 = vsel %vm2500, %v2841, %v2842
    %2846 = vst.msk [vmem:[#allocation5 + $0x48] sm:$0xf0] %vm2506, %v2841
    %2847 = vst.msk [vmem:[#allocation5 + $0x70] sm:$0xff] %vm2478, %v2843
    %v2848 = vld [vmem:[#allocation4 + $0x44] sm:$0xff]
    %v2849 = vld [vmem:[#allocation4 + $0x4c] sm:$0xf]
    %2850 = vst.msk [vmem:[#allocation5 + $0x98] sm:$0xff] %vm2478, %v2848
    %2851 = vst.msk [vmem:[#allocation5 + $0xc0] sm:$0xf] %vm2494, %v2849
    %v2852 = vld [vmem:[#allocation4 + $0x54] sm:$0xff]
    %v2853 = vld [vmem:[#allocation4 + $0x5c] sm:$0xf]
    %v2856 = vrot.slane %v2852, 4
    %v2857 = vrot.slane %v2853, 4
    %v2858 = vsel %vm2500, %v2856, %v2857
    %2861 = vst.msk [vmem:[#allocation5 + $0xc0] sm:$0xf0] %vm2506, %v2856
    %2862 = vst.msk [vmem:[#allocation5 + $0xe8] sm:$0xff] %vm2478, %v2858
    %v2863 = vld [vmem:[#allocation5] sm:$0xff]
    %v2864 = vld [vmem:[#allocation5 + $0x8] sm:$0xff]
    %v2865 = vld [vmem:[#allocation5 + $0x10] sm:$0xff]
    %v2866 = vld [vmem:[#allocation5 + $0x18] sm:$0xff]
    %v2867 = vld [vmem:[#allocation5 + $0x20] sm:$0xff]
    %v2868 = vld [vmem:[#allocation5 + $0x28] sm:$0xff]
    %v2869 = vld [vmem:[#allocation5 + $0x30] sm:$0xff]
    %v2870 = vld [vmem:[#allocation5 + $0x38] sm:$0xff]
    %v2871 = vld [vmem:[#allocation5 + $0x40] sm:$0xff]
    %v2872 = vld [vmem:[#allocation5 + $0x48] sm:$0xff]
    %v2873 = vld [vmem:[#allocation5 + $0x50] sm:$0xff]
    %v2874 = vld [vmem:[#allocation5 + $0x58] sm:$0xff]
    %v2875 = vld [vmem:[#allocation5 + $0x60] sm:$0xff]
    %v2876 = vld [vmem:[#allocation5 + $0x68] sm:$0xff]
    %v2877 = vld [vmem:[#allocation5 + $0x70] sm:$0xff]
    %v2878 = vld [vmem:[#allocation5 + $0x78] sm:$0xff]
    %v2879 = vld [vmem:[#allocation5 + $0x80] sm:$0xff]
    %v2880 = vld [vmem:[#allocation5 + $0x88] sm:$0xff]
    %v2881 = vld [vmem:[#allocation5 + $0x90] sm:$0xff]
    %v2882 = vld [vmem:[#allocation5 + $0x98] sm:$0xff]
    %v2883 = vld [vmem:[#allocation5 + $0xa0] sm:$0xff]
    %v2884 = vld [vmem:[#allocation5 + $0xa8] sm:$0xff]
    %v2885 = vld [vmem:[#allocation5 + $0xb0] sm:$0xff]
    %v2886 = vld [vmem:[#allocation5 + $0xb8] sm:$0xff]
    %v2887 = vld [vmem:[#allocation5 + $0xc0] sm:$0xff]
    %v2888 = vld [vmem:[#allocation5 + $0xc8] sm:$0xff]
    %v2889 = vld [vmem:[#allocation5 + $0xd0] sm:$0xff]
    %v2890 = vld [vmem:[#allocation5 + $0xd8] sm:$0xff]
    %v2891 = vld [vmem:[#allocation5 + $0xe0] sm:$0xff]
    %v2892 = vld [vmem:[#allocation5 + $0xe8] sm:$0xff]
    %v2893 = vpack.c.bf16 %v2868, %v2863
    %v2894 = vpack.c.bf16 %v2869, %v2864
    %v2895 = vpack.c.bf16 %v2870, %v2865
    %v2896 = vpack.c.bf16 %v2871, %v2866
    %v2897 = vpack.c.bf16 %v2872, %v2867
    %v2898 = vpack.c.bf16 %v2878, %v2873
    %v2899 = vpack.c.bf16 %v2879, %v2874
    %v2900 = vpack.c.bf16 %v2880, %v2875
    %v2901 = vpack.c.bf16 %v2881, %v2876
    %v2902 = vpack.c.bf16 %v2882, %v2877
    %v2903 = vpack.c.bf16 %v2888, %v2883
    %v2904 = vpack.c.bf16 %v2889, %v2884
    %v2905 = vpack.c.bf16 %v2890, %v2885
    %v2906 = vpack.c.bf16 %v2891, %v2886
    %v2907 = vpack.c.bf16 %v2892, %v2887
    %v2908 = vld [vmem:[%s5] sm:$0xf]
    %v2909 = vld [vmem:[%s5 + $0x4] sm:$0xf]
    %v2910 = vld [vmem:[%s5 + $0x8] sm:$0xf]
    %v2911 = vld [vmem:[%s5 + $0xc] sm:$0xf]
    %v2912 = vld [vmem:[%s5 + $0x10] sm:$0xf]
    %v2913 = vld [vmem:[%s5 + $0x14] sm:$0xf]
    %v2914 = vld [vmem:[%s5 + $0x18] sm:$0xf]
    %v2915 = vld [vmem:[%s5 + $0x1c] sm:$0xf]
    %v2916 = vld [vmem:[%s5 + $0x20] sm:$0xf]
    %v2917 = vld [vmem:[%s5 + $0x24] sm:$0xf]
    %v2918 = vld [vmem:[%s5 + $0x28] sm:$0xf]
    %v2919 = vld [vmem:[%s5 + $0x2c] sm:$0xf]
    %v2920 = vld [vmem:[%s5 + $0x30] sm:$0xf]
    %v2921 = vld [vmem:[%s5 + $0x34] sm:$0xf]
    %v2922 = vld [vmem:[%s5 + $0x38] sm:$0xf]
    %v2923 = vld [vmem:[%s5 + $0x3c] sm:$0xf]
    %v2924 = vld [vmem:[%s5 + $0x40] sm:$0xf]
    %v2925 = vld [vmem:[%s5 + $0x44] sm:$0xf]
    %v2926 = vld [vmem:[%s5 + $0x48] sm:$0xf]
    %v2927 = vld [vmem:[%s5 + $0x4c] sm:$0xf]
    %v2928 = vld [vmem:[%s5 + $0x50] sm:$0xf]
    %v2929 = vld [vmem:[%s5 + $0x54] sm:$0xf]
    %v2930 = vld [vmem:[%s5 + $0x58] sm:$0xf]
    %v2931 = vld [vmem:[%s5 + $0x5c] sm:$0xf]
    %v2932 = vld [vmem:[%s5 + $0x60] sm:$0xf]
    %v2933 = vld [vmem:[%s5 + $0x64] sm:$0xf]
    %v2934 = vld [vmem:[%s5 + $0x68] sm:$0xf]
    %v2935 = vld [vmem:[%s5 + $0x6c] sm:$0xf]
    %v2936 = vld [vmem:[%s5 + $0x70] sm:$0xf]
    %v2937 = vld [vmem:[%s5 + $0x74] sm:$0xf]
    %v2938 = vld [vmem:[%s5 + $0x78] sm:$0xf]
    %v2939 = vld [vmem:[%s5 + $0x7c] sm:$0xf]
    %v2940 = vld [vmem:[%s5 + $0x80] sm:$0xf]
    %v2941 = vld [vmem:[%s5 + $0x84] sm:$0xf]
    %v2942 = vld [vmem:[%s5 + $0x88] sm:$0xf]
    %v2943 = vld [vmem:[%s5 + $0x8c] sm:$0xf]
    %v2944 = vld [vmem:[%s5 + $0x90] sm:$0xf]
    %v2945 = vld [vmem:[%s5 + $0x94] sm:$0xf]
    %v2946 = vld [vmem:[%s5 + $0x98] sm:$0xf]
    %v2947 = vld [vmem:[%s5 + $0x9c] sm:$0xf]
    %v2948 = vld [vmem:[%s5 + $0xa0] sm:$0xf]
    %v2949 = vld [vmem:[%s5 + $0xa4] sm:$0xf]
    %v2950 = vld [vmem:[%s5 + $0xa8] sm:$0xf]
    %v2951 = vld [vmem:[%s5 + $0xac] sm:$0xf]
    %v2952 = vld [vmem:[%s5 + $0xb0] sm:$0xf]
    %v2953 = vld [vmem:[%s5 + $0xb4] sm:$0xf]
    %v2954 = vld [vmem:[%s5 + $0xb8] sm:$0xf]
    %v2955 = vld [vmem:[%s5 + $0xbc] sm:$0xf]
    %v2956 = vld [vmem:[%s5 + $0xc0] sm:$0xf]
    %v2957 = vld [vmem:[%s5 + $0xc4] sm:$0xf]
    %v2958 = vld [vmem:[%s5 + $0xc8] sm:$0xf]
    %v2959 = vld [vmem:[%s5 + $0xcc] sm:$0xf]
    %v2960 = vld [vmem:[%s5 + $0xd0] sm:$0xf]
    %v2961 = vld [vmem:[%s5 + $0xd4] sm:$0xf]
    %v2962 = vld [vmem:[%s5 + $0xd8] sm:$0xf]
    %v2963 = vld [vmem:[%s5 + $0xdc] sm:$0xf]
    %v2964 = vld [vmem:[%s5 + $0xe0] sm:$0xf]
    %v2965 = vld [vmem:[%s5 + $0xe4] sm:$0xf]
    %v2966 = vld [vmem:[%s5 + $0xe8] sm:$0xf]
    %v2967 = vld [vmem:[%s5 + $0xec] sm:$0xf]
    %v2968 = vld [vmem:[%s5 + $0xf0] sm:$0xf]
    %v2969 = vld [vmem:[%s5 + $0xf4] sm:$0xf]
    %v2970 = vld [vmem:[%s5 + $0xf8] sm:$0xf]
    %v2971 = vld [vmem:[%s5 + $0xfc] sm:$0xf]
    %v2972 = vld [vmem:[%s5 + $0x100] sm:$0xf]
    %v2973 = vld [vmem:[%s5 + $0x104] sm:$0xf]
    %v2974 = vld [vmem:[%s5 + $0x108] sm:$0xf]
    %v2975 = vld [vmem:[%s5 + $0x10c] sm:$0xf]
    %v2976 = vld [vmem:[%s5 + $0x110] sm:$0xf]
    %v2977 = vld [vmem:[%s5 + $0x114] sm:$0xf]
    %v2978 = vld [vmem:[%s5 + $0x118] sm:$0xf]
    %v2979 = vld [vmem:[%s5 + $0x11c] sm:$0xf]
    %v2980 = vld [vmem:[%s6] sm:$0x1]
    %v2982 = vperm.slane %v2980, 0
    %v3056 = vunpack.c.l.b16 %v2908
    %v3057 = vunpack.c.l.b16 %v2909
    %v3058 = vunpack.c.l.b16 %v2910
    %v3059 = vunpack.c.l.b16 %v2911
    %v3060 = vunpack.c.l.b16 %v2912
    %v3061 = vunpack.c.l.b16 %v2913
    %v3062 = vunpack.c.l.b16 %v2914
    %v3063 = vunpack.c.l.b16 %v2915
    %v3064 = vunpack.c.l.b16 %v2916
    %v3065 = vunpack.c.l.b16 %v2917
    %v3066 = vunpack.c.l.b16 %v2918
    %v3067 = vunpack.c.l.b16 %v2919
    %v3068 = vunpack.c.l.b16 %v2920
    %v3069 = vunpack.c.l.b16 %v2921
    %v3070 = vunpack.c.l.b16 %v2922
    %v3071 = vunpack.c.l.b16 %v2923
    %v3072 = vunpack.c.l.b16 %v2924
    %v3073 = vunpack.c.l.b16 %v2925
    %v3074 = vunpack.c.l.b16 %v2926
    %v3075 = vunpack.c.l.b16 %v2927
    %v3076 = vunpack.c.l.b16 %v2928
    %v3077 = vunpack.c.l.b16 %v2929
    %v3078 = vunpack.c.l.b16 %v2930
    %v3079 = vunpack.c.l.b16 %v2931
    %v3080 = vunpack.c.l.b16 %v2932
    %v3081 = vunpack.c.l.b16 %v2933
    %v3082 = vunpack.c.l.b16 %v2934
    %v3083 = vunpack.c.l.b16 %v2935
    %v3084 = vunpack.c.l.b16 %v2936
    %v3085 = vunpack.c.l.b16 %v2937
    %v3086 = vunpack.c.l.b16 %v2938
    %v3087 = vunpack.c.l.b16 %v2939
    %v3088 = vunpack.c.l.b16 %v2940
    %v3089 = vunpack.c.l.b16 %v2941
    %v3090 = vunpack.c.l.b16 %v2942
    %v3091 = vunpack.c.l.b16 %v2943
    %v3092 = vunpack.c.l.b16 %v2944
    %v3093 = vunpack.c.l.b16 %v2945
    %v3094 = vunpack.c.l.b16 %v2946
    %v3095 = vunpack.c.l.b16 %v2947
    %v3096 = vunpack.c.l.b16 %v2948
    %v3097 = vunpack.c.l.b16 %v2949
    %v3098 = vunpack.c.l.b16 %v2950
    %v3099 = vunpack.c.l.b16 %v2951
    %v3100 = vunpack.c.l.b16 %v2952
    %v3101 = vunpack.c.l.b16 %v2953
    %v3102 = vunpack.c.l.b16 %v2954
    %v3103 = vunpack.c.l.b16 %v2955
    %v3104 = vunpack.c.l.b16 %v2956
    %v3105 = vunpack.c.l.b16 %v2957
    %v3106 = vunpack.c.l.b16 %v2958
    %v3107 = vunpack.c.l.b16 %v2959
    %v3108 = vunpack.c.l.b16 %v2960
    %v3109 = vunpack.c.l.b16 %v2961
    %v3110 = vunpack.c.l.b16 %v2962
    %v3111 = vunpack.c.l.b16 %v2963
    %v3112 = vunpack.c.l.b16 %v2964
    %v3113 = vunpack.c.l.b16 %v2965
    %v3114 = vunpack.c.l.b16 %v2966
    %v3115 = vunpack.c.l.b16 %v2967
    %v3116 = vunpack.c.l.b16 %v2968
    %v3117 = vunpack.c.l.b16 %v2969
    %v3118 = vunpack.c.l.b16 %v2970
    %v3119 = vunpack.c.l.b16 %v2971
    %v3120 = vunpack.c.l.b16 %v2972
    %v3121 = vunpack.c.l.b16 %v2973
    %v3122 = vunpack.c.l.b16 %v2974
    %v3123 = vunpack.c.l.b16 %v2975
    %v3124 = vunpack.c.l.b16 %v2976
    %v3125 = vunpack.c.l.b16 %v2977
    %v3126 = vunpack.c.l.b16 %v2978
    %v3127 = vunpack.c.l.b16 %v2979
    %v3128 = vpack.c.b16 %v3057, %v3056
    %v3129 = vpack.c.b16 %v3059, %v3058
    %v3130 = vpack.c.b16 %v3061, %v3060
    %v3131 = vpack.c.b16 %v3063, %v3062
    %v3132 = vpack.c.b16 %v3065, %v3064
    %v3133 = vpack.c.b16 %v3067, %v3066
    %v3134 = vpack.c.b16 %v3069, %v3068
    %v3135 = vpack.c.b16 %v3071, %v3070
    %v3136 = vpack.c.b16 %v3073, %v3072
    %v3137 = vpack.c.b16 %v3075, %v3074
    %v3138 = vpack.c.b16 %v3077, %v3076
    %v3139 = vpack.c.b16 %v3079, %v3078
    %v3140 = vpack.c.b16 %v3081, %v3080
    %v3141 = vpack.c.b16 %v3083, %v3082
    %v3142 = vpack.c.b16 %v3085, %v3084
    %v3143 = vpack.c.b16 %v3087, %v3086
    %v3144 = vpack.c.b16 %v3089, %v3088
    %v3145 = vpack.c.b16 %v3091, %v3090
    %v3146 = vpack.c.b16 %v3093, %v3092
    %v3147 = vpack.c.b16 %v3095, %v3094
    %v3148 = vpack.c.b16 %v3097, %v3096
    %v3149 = vpack.c.b16 %v3099, %v3098
    %v3150 = vpack.c.b16 %v3101, %v3100
    %v3151 = vpack.c.b16 %v3103, %v3102
    %v3152 = vpack.c.b16 %v3105, %v3104
    %v3153 = vpack.c.b16 %v3107, %v3106
    %v3154 = vpack.c.b16 %v3109, %v3108
    %v3155 = vpack.c.b16 %v3111, %v3110
    %v3156 = vpack.c.b16 %v3113, %v3112
    %v3157 = vpack.c.b16 %v3115, %v3114
    %v3158 = vpack.c.b16 %v3117, %v3116
    %v3159 = vpack.c.b16 %v3119, %v3118
    %v3160 = vpack.c.b16 %v3121, %v3120
    %v3161 = vpack.c.b16 %v3123, %v3122
    %v3162 = vpack.c.b16 %v3125, %v3124
    %v3163 = vpack.c.b16 %v3127, %v3126
    %v3201 = vsel %vm2478, %v2897, 0
    %v3204 = vsel %vm2478, %v2902, 0
    %v3207 = vsel %vm2478, %v2907, 0
    %3209 = vmatpush.bf16.msra.mxu0 %v3135
    %3210 = vmatpush.bf16.msra.mxu0 %v3134
    %3211 = vmatpush.bf16.msra.mxu0 %v3133
    %3212 = vmatpush.bf16.msra.mxu0 %v3132
    %3213 = vmatpush.bf16.msra.mxu0 %v3131
    %3214 = vmatpush.bf16.msra.mxu0 %v3130
    %3215 = vmatpush.bf16.msra.mxu0 %v3129
    %3216 = vmatpush.bf16.msra.mxu0 %v3128
    %3217 = vmatmul.bf16.gmra.mxu0 %v2893
    %v3218 = vpop.f32.mrf.mxu0
    %v3219 = vadd.f32 %v2982, %v3218
    %v3220 = vpop.f32.mrf.mxu0
    %v3221 = vadd.f32 %v2982, %v3220
    %3222 = vmatmul.bf16.gmra.mxu0 %v2898
    %v3223 = vpop.f32.mrf.mxu0
    %v3224 = vadd.f32 %v2982, %v3223
    %v3225 = vpop.f32.mrf.mxu0
    %v3226 = vadd.f32 %v2982, %v3225
    %3227 = vmatmul.bf16.gmra.mxu0 %v2903
    %v3228 = vpop.f32.mrf.mxu0
    %v3229 = vadd.f32 %v2982, %v3228
    %v3230 = vpop.f32.mrf.mxu0
    %v3231 = vadd.f32 %v2982, %v3230
    %3232 = vdwg.mxu0
    %3233 = vmatpush.bf16.msra.mxu0 %v3143
    %3234 = vmatpush.bf16.msra.mxu0 %v3142
    %3235 = vmatpush.bf16.msra.mxu0 %v3141
    %3236 = vmatpush.bf16.msra.mxu0 %v3140
    %3237 = vmatpush.bf16.msra.mxu0 %v3139
    %3238 = vmatpush.bf16.msra.mxu0 %v3138
    %3239 = vmatpush.bf16.msra.mxu0 %v3137
    %3240 = vmatpush.bf16.msra.mxu0 %v3136
    %3241 = vmatmul.bf16.gmra.mxu0 %v2894
    %v3242 = vpop.f32.mrf.mxu0
    %v3243 = vadd.f32 %v3219, %v3242
    %v3244 = vpop.f32.mrf.mxu0
    %v3245 = vadd.f32 %v3221, %v3244
    %3246 = vmatmul.bf16.gmra.mxu0 %v2899
    %v3247 = vpop.f32.mrf.mxu0
    %v3248 = vadd.f32 %v3224, %v3247
    %v3249 = vpop.f32.mrf.mxu0
    %v3250 = vadd.f32 %v3226, %v3249
    %3251 = vmatmul.bf16.gmra.mxu0 %v2904
    %v3252 = vpop.f32.mrf.mxu0
    %v3253 = vadd.f32 %v3229, %v3252
    %v3254 = vpop.f32.mrf.mxu0
    %v3255 = vadd.f32 %v3231, %v3254
    %3256 = vdwg.mxu0
    %3257 = vmatpush.bf16.msra.mxu0 %v3151
    %3258 = vmatpush.bf16.msra.mxu0 %v3150
    %3259 = vmatpush.bf16.msra.mxu0 %v3149
    %3260 = vmatpush.bf16.msra.mxu0 %v3148
    %3261 = vmatpush.bf16.msra.mxu0 %v3147
    %3262 = vmatpush.bf16.msra.mxu0 %v3146
    %3263 = vmatpush.bf16.msra.mxu0 %v3145
    %3264 = vmatpush.bf16.msra.mxu0 %v3144
    %3265 = vmatmul.bf16.gmra.mxu0 %v2895
    %v3266 = vpop.f32.mrf.mxu0
    %v3267 = vadd.f32 %v3243, %v3266
    %v3268 = vpop.f32.mrf.mxu0
    %v3269 = vadd.f32 %v3245, %v3268
    %3270 = vmatmul.bf16.gmra.mxu0 %v2900
    %v3271 = vpop.f32.mrf.mxu0
    %v3272 = vadd.f32 %v3248, %v3271
    %v3273 = vpop.f32.mrf.mxu0
    %v3274 = vadd.f32 %v3250, %v3273
    %3275 = vmatmul.bf16.gmra.mxu0 %v2905
    %v3276 = vpop.f32.mrf.mxu0
    %v3277 = vadd.f32 %v3253, %v3276
    %v3278 = vpop.f32.mrf.mxu0
    %v3279 = vadd.f32 %v3255, %v3278
    %3280 = vdwg.mxu0
    %3281 = vmatpush.bf16.msra.mxu0 %v3159
    %3282 = vmatpush.bf16.msra.mxu0 %v3158
    %3283 = vmatpush.bf16.msra.mxu0 %v3157
    %3284 = vmatpush.bf16.msra.mxu0 %v3156
    %3285 = vmatpush.bf16.msra.mxu0 %v3155
    %3286 = vmatpush.bf16.msra.mxu0 %v3154
    %3287 = vmatpush.bf16.msra.mxu0 %v3153
    %3288 = vmatpush.bf16.msra.mxu0 %v3152
    %3289 = vmatmul.bf16.gmra.mxu0 %v2896
    %v3290 = vpop.f32.mrf.mxu0
    %v3291 = vadd.f32 %v3267, %v3290
    %v3292 = vpop.f32.mrf.mxu0
    %v3293 = vadd.f32 %v3269, %v3292
    %3294 = vmatmul.bf16.gmra.mxu0 %v2901
    %v3295 = vpop.f32.mrf.mxu0
    %v3296 = vadd.f32 %v3272, %v3295
    %v3297 = vpop.f32.mrf.mxu0
    %v3298 = vadd.f32 %v3274, %v3297
    %3299 = vmatmul.bf16.gmra.mxu0 %v2906
    %v3300 = vpop.f32.mrf.mxu0
    %v3301 = vadd.f32 %v3277, %v3300
    %v3302 = vpop.f32.mrf.mxu0
    %v3303 = vadd.f32 %v3279, %v3302
    %3304 = vdwg.mxu0
    %3305 = vmatpush.bf16.msra.mxu0 0
    %3306 = vmatpush.bf16.msra.mxu0 0
    %3307 = vmatpush.bf16.msra.mxu0 0
    %3308 = vmatpush.bf16.msra.mxu0 0
    %3309 = vmatpush.bf16.msra.mxu0 %v3163
    %3310 = vmatpush.bf16.msra.mxu0 %v3162
    %3311 = vmatpush.bf16.msra.mxu0 %v3161
    %3312 = vmatpush.bf16.msra.mxu0 %v3160
    %3313 = vmatmul.bf16.gmra.mxu0 %v3201
    %v3314 = vpop.f32.mrf.mxu0
    %v3315 = vadd.f32 %v3291, %v3314
    %v3316 = vpop.f32.mrf.mxu0
    %v3317 = vadd.f32 %v3293, %v3316
    %3318 = vmatmul.bf16.gmra.mxu0 %v3204
    %v3319 = vpop.f32.mrf.mxu0
    %v3320 = vadd.f32 %v3296, %v3319
    %v3321 = vpop.f32.mrf.mxu0
    %v3322 = vadd.f32 %v3298, %v3321
    %3323 = vmatmul.bf16.gmra.mxu0 %v3207
    %v3324 = vpop.f32.mrf.mxu0
    %v3325 = vadd.f32 %v3301, %v3324
    %v3326 = vpop.f32.mrf.mxu0
    %v3327 = vadd.f32 %v3303, %v3326
    %3328 = vdwg.mxu0
    %v3329 = vmax.f32 %v3315, 0.0
    %v3330 = vmax.f32 %v3317, 0.0
    %v3331 = vmax.f32 %v3320, 0.0
    %v3332 = vmax.f32 %v3322, 0.0
    %v3333 = vmax.f32 %v3325, 0.0
    %v3334 = vmax.f32 %v3327, 0.0
    %3335 = vst.msk [vmem:[#allocation6] sm:$0xff] %vm2478, %v3329
    %3336 = vst.msk [vmem:[#allocation6 + $0x8] sm:$0xff] %vm2478, %v3330
    %3337 = vst.msk [vmem:[#allocation6 + $0x10] sm:$0xff] %vm2478, %v3331
    %3338 = vst.msk [vmem:[#allocation6 + $0x18] sm:$0xff] %vm2478, %v3332
    %3339 = vst.msk [vmem:[#allocation6 + $0x20] sm:$0xff] %vm2478, %v3333
    %3340 = vst.msk [vmem:[#allocation6 + $0x28] sm:$0xff] %vm2478, %v3334
    %v3341 = vld [vmem:[#allocation6] sm:$0x3]
    %vm3342 = vcmask 517120
    %3343 = vst.msk [vmem:[#allocation7] sm:$0x3] %vm3342, %v3341
    %v3344 = vld [vmem:[#allocation6 + $0x2] sm:$0x3]
    %3346 = vrot.lane.b32.xlu0 %v3344, 64
    %v3347 = vpop.permute.xlu0 %3346
    %vm3349 = vcmask 1041920
    %3350 = vst.msk [vmem:[#allocation7] sm:$0x3] %vm3349, %v3347
    %v3351 = vld [vmem:[#allocation6 + $0x4] sm:$0x3]
    %3352 = vst.msk [vmem:[#allocation7 + $0x2] sm:$0x3] %vm3342, %v3351
    %v3353 = vld [vmem:[#allocation6 + $0x6] sm:$0x3]
    %3355 = vrot.lane.b32.xlu0 %v3353, 64
    %v3356 = vpop.permute.xlu0 %3355
    %3358 = vst.msk [vmem:[#allocation7 + $0x2] sm:$0x3] %vm3349, %v3356
    %v3359 = vld [vmem:[#allocation6 + $0x8] sm:$0x3]
    %3360 = vst.msk [vmem:[#allocation7 + $0x4] sm:$0x3] %vm3342, %v3359
    %v3361 = vld [vmem:[#allocation6 + $0xa] sm:$0x3]
    %3363 = vrot.lane.b32.xlu0 %v3361, 64
    %v3364 = vpop.permute.xlu0 %3363
    %3366 = vst.msk [vmem:[#allocation7 + $0x4] sm:$0x3] %vm3349, %v3364
    %v3367 = vld [vmem:[#allocation6 + $0xc] sm:$0x3]
    %3368 = vst.msk [vmem:[#allocation7 + $0x6] sm:$0x3] %vm3342, %v3367
    %v3369 = vld [vmem:[#allocation6 + $0xe] sm:$0x3]
    %3371 = vrot.lane.b32.xlu0 %v3369, 64
    %v3372 = vpop.permute.xlu0 %3371
    %3374 = vst.msk [vmem:[#allocation7 + $0x6] sm:$0x3] %vm3349, %v3372
    %v3375 = vld [vmem:[#allocation6 + $0x10] sm:$0x3]
    %3376 = vst.msk [vmem:[#allocation7 + $0x8] sm:$0x3] %vm3342, %v3375
    %v3377 = vld [vmem:[#allocation6 + $0x12] sm:$0x3]
    %3379 = vrot.lane.b32.xlu0 %v3377, 64
    %v3380 = vpop.permute.xlu0 %3379
    %3382 = vst.msk [vmem:[#allocation7 + $0x8] sm:$0x3] %vm3349, %v3380
    %v3383 = vld [vmem:[#allocation6 + $0x14] sm:$0x3]
    %3384 = vst.msk [vmem:[#allocation7 + $0xa] sm:$0x3] %vm3342, %v3383
    %v3385 = vld [vmem:[#allocation6 + $0x16] sm:$0x3]
    %3387 = vrot.lane.b32.xlu0 %v3385, 64
    %v3388 = vpop.permute.xlu0 %3387
    %3390 = vst.msk [vmem:[#allocation7 + $0xa] sm:$0x3] %vm3349, %v3388
    %v3391 = vld [vmem:[#allocation6 + $0x18] sm:$0x3]
    %3392 = vst.msk [vmem:[#allocation7 + $0xc] sm:$0x3] %vm3342, %v3391
    %v3393 = vld [vmem:[#allocation6 + $0x1a] sm:$0x3]
    %3395 = vrot.lane.b32.xlu0 %v3393, 64
    %v3396 = vpop.permute.xlu0 %3395
    %3398 = vst.msk [vmem:[#allocation7 + $0xc] sm:$0x3] %vm3349, %v3396
    %v3399 = vld [vmem:[#allocation6 + $0x1c] sm:$0x3]
    %3400 = vst.msk [vmem:[#allocation7 + $0xe] sm:$0x3] %vm3342, %v3399
    %v3401 = vld [vmem:[#allocation6 + $0x1e] sm:$0x3]
    %3403 = vrot.lane.b32.xlu0 %v3401, 64
    %v3404 = vpop.permute.xlu0 %3403
    %3406 = vst.msk [vmem:[#allocation7 + $0xe] sm:$0x3] %vm3349, %v3404
    %v3407 = vld [vmem:[#allocation6 + $0x20] sm:$0x3]
    %3408 = vst.msk [vmem:[#allocation7 + $0x10] sm:$0x3] %vm3342, %v3407
    %v3409 = vld [vmem:[#allocation6 + $0x22] sm:$0x3]
    %3411 = vrot.lane.b32.xlu0 %v3409, 64
    %v3412 = vpop.permute.xlu0 %3411
    %3414 = vst.msk [vmem:[#allocation7 + $0x10] sm:$0x3] %vm3349, %v3412
    %v3415 = vld [vmem:[#allocation6 + $0x24] sm:$0x3]
    %3416 = vst.msk [vmem:[#allocation7 + $0x12] sm:$0x3] %vm3342, %v3415
    %v3417 = vld [vmem:[#allocation6 + $0x26] sm:$0x3]
    %3419 = vrot.lane.b32.xlu0 %v3417, 64
    %v3420 = vpop.permute.xlu0 %3419
    %3422 = vst.msk [vmem:[#allocation7 + $0x12] sm:$0x3] %vm3349, %v3420
    %v3423 = vld [vmem:[#allocation6 + $0x28] sm:$0x3]
    %3424 = vst.msk [vmem:[#allocation7 + $0x14] sm:$0x3] %vm3342, %v3423
    %v3425 = vld [vmem:[#allocation6 + $0x2a] sm:$0x3]
    %3427 = vrot.lane.b32.xlu0 %v3425, 64
    %v3428 = vpop.permute.xlu0 %3427
    %3430 = vst.msk [vmem:[#allocation7 + $0x14] sm:$0x3] %vm3349, %v3428
    %v3431 = vld [vmem:[#allocation6 + $0x2c] sm:$0x3]
    %3432 = vst.msk [vmem:[#allocation7 + $0x16] sm:$0x3] %vm3342, %v3431
    %v3433 = vld [vmem:[#allocation6 + $0x2e] sm:$0x3]
    %3435 = vrot.lane.b32.xlu0 %v3433, 64
    %v3436 = vpop.permute.xlu0 %3435
    %3438 = vst.msk [vmem:[#allocation7 + $0x16] sm:$0x3] %vm3349, %v3436
    %v3439 = vld [vmem:[#allocation7] sm:$0xff]
    %v3440 = vld [vmem:[#allocation7 + $0x8] sm:$0xff]
    %v3441 = vld [vmem:[#allocation7 + $0x10] sm:$0xff]
    %v3442 = vld [vmem:[%s7] sm:$0xff]
    %v3443 = vld [vmem:[%s7 + $0x8] sm:$0xff]
    %v3444 = vld [vmem:[%s7 + $0x10] sm:$0xff]
    %v3445 = vld [vmem:[%s7 + $0x18] sm:$0xff]
    %v3446 = vld [vmem:[%s7 + $0x20] sm:$0xff]
    %v3447 = vld [vmem:[%s7 + $0x28] sm:$0xff]
    %v3448 = vld [vmem:[%s7 + $0x30] sm:$0xff]
    %v3449 = vld [vmem:[%s7 + $0x38] sm:$0xff]
    %v3450 = vld [vmem:[%s7 + $0x40] sm:$0xff]
    %v3451 = vld [vmem:[%s7 + $0x48] sm:$0xff]
    %v3452 = vld [vmem:[%s7 + $0x50] sm:$0xff]
    %v3453 = vld [vmem:[%s7 + $0x58] sm:$0xff]
    %v3454 = vld [vmem:[%s7 + $0x60] sm:$0xff]
    %v3455 = vld [vmem:[%s7 + $0x68] sm:$0xff]
    %v3456 = vld [vmem:[%s7 + $0x70] sm:$0xff]
    %v3457 = vld [vmem:[%s7 + $0x78] sm:$0xff]
    %v3458 = vld [vmem:[%s7 + $0x80] sm:$0xff]
    %v3459 = vld [vmem:[%s7 + $0x88] sm:$0xff]
    %v3460 = vld [vmem:[%s7 + $0x90] sm:$0xff]
    %v3461 = vld [vmem:[%s7 + $0x98] sm:$0xff]
    %v3462 = vld [vmem:[%s7 + $0xa0] sm:$0xff]
    %v3463 = vld [vmem:[%s7 + $0xa8] sm:$0xff]
    %v3464 = vld [vmem:[%s7 + $0xb0] sm:$0xff]
    %v3465 = vld [vmem:[%s7 + $0xb8] sm:$0xff]
    %v3466 = vld [vmem:[%s7 + $0xc0] sm:$0xff]
    %v3467 = vld [vmem:[%s7 + $0xc8] sm:$0xff]
    %v3468 = vld [vmem:[%s7 + $0xd0] sm:$0xff]
    %v3469 = vld [vmem:[%s7 + $0xd8] sm:$0xff]
    %v3470 = vld [vmem:[%s7 + $0xe0] sm:$0xff]
    %v3471 = vld [vmem:[%s7 + $0xe8] sm:$0xff]
    %v3472 = vld [vmem:[%s7 + $0xf0] sm:$0xff]
    %v3473 = vld [vmem:[%s7 + $0xf8] sm:$0xff]
    %v3474 = vld [vmem:[%s7 + $0x100] sm:$0xff]
    %v3475 = vld [vmem:[%s7 + $0x108] sm:$0xff]
    %v3476 = vld [vmem:[%s7 + $0x110] sm:$0xff]
    %v3477 = vld [vmem:[%s7 + $0x118] sm:$0xff]
    %v3478 = vld [vmem:[%s7 + $0x120] sm:$0xff]
    %v3479 = vld [vmem:[%s7 + $0x128] sm:$0xff]
    %v3480 = vld [vmem:[%s7 + $0x130] sm:$0xff]
    %v3481 = vld [vmem:[%s7 + $0x138] sm:$0xff]
    %v3482 = vld [vmem:[%s7 + $0x140] sm:$0xff]
    %v3483 = vld [vmem:[%s7 + $0x148] sm:$0xff]
    %v3484 = vld [vmem:[%s7 + $0x150] sm:$0xff]
    %v3485 = vld [vmem:[%s7 + $0x158] sm:$0xff]
    %v3486 = vld [vmem:[%s7 + $0x160] sm:$0xff]
    %v3487 = vld [vmem:[%s7 + $0x168] sm:$0xff]
    %v3488 = vld [vmem:[%s7 + $0x170] sm:$0xff]
    %v3489 = vld [vmem:[%s7 + $0x178] sm:$0xff]
    %v3490 = vld [vmem:[%s7 + $0x180] sm:$0xff]
    %v3491 = vld [vmem:[%s7 + $0x188] sm:$0xff]
    %v3492 = vld [vmem:[%s7 + $0x190] sm:$0xff]
    %v3493 = vld [vmem:[%s7 + $0x198] sm:$0xff]
    %v3494 = vld [vmem:[%s7 + $0x1a0] sm:$0xff]
    %v3495 = vld [vmem:[%s7 + $0x1a8] sm:$0xff]
    %v3496 = vld [vmem:[%s7 + $0x1b0] sm:$0xff]
    %v3497 = vld [vmem:[%s7 + $0x1b8] sm:$0xff]
    %v3498 = vld [vmem:[%s7 + $0x1c0] sm:$0xff]
    %v3499 = vld [vmem:[%s7 + $0x1c8] sm:$0xff]
    %v3500 = vld [vmem:[%s7 + $0x1d0] sm:$0xff]
    %v3501 = vld [vmem:[%s7 + $0x1d8] sm:$0xff]
    %v3502 = vld [vmem:[%s7 + $0x1e0] sm:$0xff]
    %v3503 = vld [vmem:[%s7 + $0x1e8] sm:$0xff]
    %v3504 = vld [vmem:[%s7 + $0x1f0] sm:$0xff]
    %v3505 = vld [vmem:[%s7 + $0x1f8] sm:$0xff]
    %v3506 = vld [vmem:[%s7 + $0x200] sm:$0xff]
    %v3507 = vld [vmem:[%s7 + $0x208] sm:$0xff]
    %v3508 = vld [vmem:[%s7 + $0x210] sm:$0xff]
    %v3509 = vld [vmem:[%s7 + $0x218] sm:$0xff]
    %v3510 = vld [vmem:[%s7 + $0x220] sm:$0xff]
    %v3511 = vld [vmem:[%s7 + $0x228] sm:$0xff]
    %v3512 = vld [vmem:[%s7 + $0x230] sm:$0xff]
    %v3513 = vld [vmem:[%s7 + $0x238] sm:$0xff]
    %v3514 = vld [vmem:[%s7 + $0x240] sm:$0xff]
    %v3515 = vld [vmem:[%s7 + $0x248] sm:$0xff]
    %v3516 = vld [vmem:[%s7 + $0x250] sm:$0xff]
    %v3517 = vld [vmem:[%s7 + $0x258] sm:$0xff]
    %v3518 = vld [vmem:[%s7 + $0x260] sm:$0xff]
    %v3519 = vld [vmem:[%s7 + $0x268] sm:$0xff]
    %v3520 = vld [vmem:[%s7 + $0x270] sm:$0xff]
    %v3521 = vld [vmem:[%s7 + $0x278] sm:$0xff]
    %v3522 = vld [vmem:[%s7 + $0x280] sm:$0xff]
    %v3523 = vld [vmem:[%s7 + $0x288] sm:$0xff]
    %v3524 = vld [vmem:[%s7 + $0x290] sm:$0xff]
    %v3525 = vld [vmem:[%s7 + $0x298] sm:$0xff]
    %v3526 = vld [vmem:[%s7 + $0x2a0] sm:$0xff]
    %v3527 = vld [vmem:[%s7 + $0x2a8] sm:$0xff]
    %v3528 = vld [vmem:[%s7 + $0x2b0] sm:$0xff]
    %v3529 = vld [vmem:[%s7 + $0x2b8] sm:$0xff]
    %v3530 = vld [vmem:[%s7 + $0x2c0] sm:$0xff]
    %v3531 = vld [vmem:[%s7 + $0x2c8] sm:$0xff]
    %v3532 = vld [vmem:[%s7 + $0x2d0] sm:$0xff]
    %v3533 = vld [vmem:[%s7 + $0x2d8] sm:$0xff]
    %v3534 = vld [vmem:[%s7 + $0x2e0] sm:$0xff]
    %v3535 = vld [vmem:[%s7 + $0x2e8] sm:$0xff]
    %v3536 = vld [vmem:[%s7 + $0x2f0] sm:$0xff]
    %v3537 = vld [vmem:[%s7 + $0x2f8] sm:$0xff]
    %v3538 = vld [vmem:[%s7 + $0x300] sm:$0xff]
    %v3539 = vld [vmem:[%s7 + $0x308] sm:$0xff]
    %v3540 = vld [vmem:[%s7 + $0x310] sm:$0xff]
    %v3541 = vld [vmem:[%s7 + $0x318] sm:$0xff]
    %v3542 = vld [vmem:[%s7 + $0x320] sm:$0xff]
    %v3543 = vld [vmem:[%s7 + $0x328] sm:$0xff]
    %v3544 = vld [vmem:[%s7 + $0x330] sm:$0xff]
    %v3545 = vld [vmem:[%s7 + $0x338] sm:$0xff]
    %v3546 = vld [vmem:[%s7 + $0x340] sm:$0xff]
    %v3547 = vld [vmem:[%s7 + $0x348] sm:$0xff]
    %v3548 = vld [vmem:[%s7 + $0x350] sm:$0xff]
    %v3549 = vld [vmem:[%s7 + $0x358] sm:$0xff]
    %v3550 = vld [vmem:[%s7 + $0x360] sm:$0xff]
    %v3551 = vld [vmem:[%s7 + $0x368] sm:$0xff]
    %v3552 = vld [vmem:[%s7 + $0x370] sm:$0xff]
    %v3553 = vld [vmem:[%s7 + $0x378] sm:$0xff]
    %v3554 = vld [vmem:[%s7 + $0x380] sm:$0xff]
    %v3555 = vld [vmem:[%s7 + $0x388] sm:$0xff]
    %v3556 = vld [vmem:[%s7 + $0x390] sm:$0xff]
    %v3557 = vld [vmem:[%s7 + $0x398] sm:$0xff]
    %v3558 = vld [vmem:[%s7 + $0x3a0] sm:$0xff]
    %v3559 = vld [vmem:[%s7 + $0x3a8] sm:$0xff]
    %v3560 = vld [vmem:[%s7 + $0x3b0] sm:$0xff]
    %v3561 = vld [vmem:[%s7 + $0x3b8] sm:$0xff]
    %v3562 = vld [vmem:[%s7 + $0x3c0] sm:$0xff]
    %v3563 = vld [vmem:[%s7 + $0x3c8] sm:$0xff]
    %v3564 = vld [vmem:[%s7 + $0x3d0] sm:$0xff]
    %v3565 = vld [vmem:[%s7 + $0x3d8] sm:$0xff]
    %v3566 = vld [vmem:[%s7 + $0x3e0] sm:$0xff]
    %v3567 = vld [vmem:[%s7 + $0x3e8] sm:$0xff]
    %v3568 = vld [vmem:[%s7 + $0x3f0] sm:$0xff]
    %v3569 = vld [vmem:[%s7 + $0x3f8] sm:$0xff]
    %v3570 = vld [vmem:[%s7 + $0x400] sm:$0xff]
    %v3571 = vld [vmem:[%s7 + $0x408] sm:$0xff]
    %v3572 = vld [vmem:[%s7 + $0x410] sm:$0xff]
    %v3573 = vld [vmem:[%s7 + $0x418] sm:$0xff]
    %v3574 = vld [vmem:[%s7 + $0x420] sm:$0xff]
    %v3575 = vld [vmem:[%s7 + $0x428] sm:$0xff]
    %v3576 = vld [vmem:[%s7 + $0x430] sm:$0xff]
    %v3577 = vld [vmem:[%s7 + $0x438] sm:$0xff]
    %v3578 = vld [vmem:[%s7 + $0x440] sm:$0xff]
    %v3579 = vld [vmem:[%s7 + $0x448] sm:$0xff]
    %v3580 = vld [vmem:[%s7 + $0x450] sm:$0xff]
    %v3581 = vld [vmem:[%s7 + $0x458] sm:$0xff]
    %v3582 = vld [vmem:[%s7 + $0x460] sm:$0xff]
    %v3583 = vld [vmem:[%s7 + $0x468] sm:$0xff]
    %v3584 = vld [vmem:[%s7 + $0x470] sm:$0xff]
    %v3585 = vld [vmem:[%s7 + $0x478] sm:$0xff]
    %v3586 = vld [vmem:[%s7 + $0x480] sm:$0xff]
    %v3587 = vld [vmem:[%s7 + $0x488] sm:$0xff]
    %v3588 = vld [vmem:[%s7 + $0x490] sm:$0xff]
    %v3589 = vld [vmem:[%s7 + $0x498] sm:$0xff]
    %v3590 = vld [vmem:[%s7 + $0x4a0] sm:$0xff]
    %v3591 = vld [vmem:[%s7 + $0x4a8] sm:$0xff]
    %v3592 = vld [vmem:[%s7 + $0x4b0] sm:$0xff]
    %v3593 = vld [vmem:[%s7 + $0x4b8] sm:$0xff]
    %v3594 = vld [vmem:[%s7 + $0x4c0] sm:$0xff]
    %v3595 = vld [vmem:[%s7 + $0x4c8] sm:$0xff]
    %v3596 = vld [vmem:[%s7 + $0x4d0] sm:$0xff]
    %v3597 = vld [vmem:[%s7 + $0x4d8] sm:$0xff]
    %v3598 = vld [vmem:[%s7 + $0x4e0] sm:$0xff]
    %v3599 = vld [vmem:[%s7 + $0x4e8] sm:$0xff]
    %v3600 = vld [vmem:[%s7 + $0x4f0] sm:$0xff]
    %v3601 = vld [vmem:[%s7 + $0x4f8] sm:$0xff]
    %v3602 = vld [vmem:[%s7 + $0x500] sm:$0xff]
    %v3603 = vld [vmem:[%s7 + $0x508] sm:$0xff]
    %v3604 = vld [vmem:[%s7 + $0x510] sm:$0xff]
    %v3605 = vld [vmem:[%s7 + $0x518] sm:$0xff]
    %v3606 = vld [vmem:[%s7 + $0x520] sm:$0xff]
    %v3607 = vld [vmem:[%s7 + $0x528] sm:$0xff]
    %v3608 = vld [vmem:[%s7 + $0x530] sm:$0xff]
    %v3609 = vld [vmem:[%s7 + $0x538] sm:$0xff]
    %v3610 = vld [vmem:[%s7 + $0x540] sm:$0xff]
    %v3611 = vld [vmem:[%s7 + $0x548] sm:$0xff]
    %v3612 = vld [vmem:[%s7 + $0x550] sm:$0xff]
    %v3613 = vld [vmem:[%s7 + $0x558] sm:$0xff]
    %v3614 = vld [vmem:[%s7 + $0x560] sm:$0xff]
    %v3615 = vld [vmem:[%s7 + $0x568] sm:$0xff]
    %v3616 = vld [vmem:[%s7 + $0x570] sm:$0xff]
    %v3617 = vld [vmem:[%s7 + $0x578] sm:$0xff]
    %v3618 = vld [vmem:[%s7 + $0x580] sm:$0xff]
    %v3619 = vld [vmem:[%s7 + $0x588] sm:$0xff]
    %v3620 = vld [vmem:[%s7 + $0x590] sm:$0xff]
    %v3621 = vld [vmem:[%s7 + $0x598] sm:$0xff]
    %v3622 = vld [vmem:[%s7 + $0x5a0] sm:$0xff]
    %v3623 = vld [vmem:[%s7 + $0x5a8] sm:$0xff]
    %v3624 = vld [vmem:[%s7 + $0x5b0] sm:$0xff]
    %v3625 = vld [vmem:[%s7 + $0x5b8] sm:$0xff]
    %v3626 = vld [vmem:[%s7 + $0x5c0] sm:$0xff]
    %v3627 = vld [vmem:[%s7 + $0x5c8] sm:$0xff]
    %v3628 = vld [vmem:[%s7 + $0x5d0] sm:$0xff]
    %v3629 = vld [vmem:[%s7 + $0x5d8] sm:$0xff]
    %v3630 = vld [vmem:[%s7 + $0x5e0] sm:$0xff]
    %v3631 = vld [vmem:[%s7 + $0x5e8] sm:$0xff]
    %v3632 = vld [vmem:[%s7 + $0x5f0] sm:$0xff]
    %v3633 = vld [vmem:[%s7 + $0x5f8] sm:$0xff]
    %v3634 = vld [vmem:[%s8] sm:$0x1]
    %v3636 = vperm.slane %v3634, 0
    %3641 = vst [vmem:[#allocation1] ss:$4 sm:$0xff] %v3439
    %s3642 = scalar_lea.vmem [#allocation1], 32
    %3643 = vst [vmem:[%s3642] ss:$4 sm:$0xff] %v3440
    %v3644 = vld.sshfl [vmem:[#allocation1] sm:$0xff pattern:$0x73625140]
    %v3645 = vld.sshfl [vmem:[#allocation1 + $0x8] sm:$0xff pattern:$0x73625140]
    %v3646 = vld.sshfl [vmem:[#allocation1 + $0x10] sm:$0xff pattern:$0x73625140]
    %v3647 = vld.sshfl [vmem:[#allocation1 + $0x18] sm:$0xff pattern:$0x73625140]
    %v3648 = vld.sshfl [vmem:[#allocation1 + $0x20] sm:$0xff pattern:$0x73625140]
    %v3649 = vld.sshfl [vmem:[#allocation1 + $0x28] sm:$0xff pattern:$0x73625140]
    %v3650 = vld.sshfl [vmem:[#allocation1 + $0x30] sm:$0xff pattern:$0x73625140]
    %v3651 = vld.sshfl [vmem:[#allocation1 + $0x38] sm:$0xff pattern:$0x73625140]
    %3652 = vst [vmem:[#allocation1] ss:$4 sm:$0xff] %v3441
    %v3653 = vld.sshfl [vmem:[#allocation1] sm:$0xff pattern:$0x73625140]
    %v3654 = vld.sshfl [vmem:[#allocation1 + $0x8] sm:$0xff pattern:$0x73625140]
    %v3655 = vld.sshfl [vmem:[#allocation1 + $0x10] sm:$0xff pattern:$0x73625140]
    %v3656 = vld.sshfl [vmem:[#allocation1 + $0x18] sm:$0xff pattern:$0x73625140]
    %3669 = vmatpush.msra.mxu0 %v3457
    %3670 = vmatpush.msra.mxu0 %v3456
    %3671 = vmatpush.msra.mxu0 %v3455
    %3672 = vmatpush.msra.mxu0 %v3454
    %3673 = vmatpush.msra.mxu0 %v3453
    %3674 = vmatpush.msra.mxu0 %v3452
    %3675 = vmatpush.msra.mxu0 %v3451
    %3676 = vmatpush.msra.mxu0 %v3450
    %3677 = vmatpush.msra.mxu0 %v3449
    %3678 = vmatpush.msra.mxu0 %v3448
    %3679 = vmatpush.msra.mxu0 %v3447
    %3680 = vmatpush.msra.mxu0 %v3446
    %3681 = vmatpush.msra.mxu0 %v3445
    %3682 = vmatpush.msra.mxu0 %v3444
    %3683 = vmatpush.msra.mxu0 %v3443
    %3684 = vmatpush.msra.mxu0 %v3442
    %3685 = vmatmul.f32.gmra.mxu0 %v3644
    %v3686 = vpop.f32.mrf.mxu0
    %v3687 = vadd.f32 %v3636, %v3686
    %3688 = vdwg.mxu0
    %3689 = vmatpush.msra.mxu0 %v3473
    %3690 = vmatpush.msra.mxu0 %v3472
    %3691 = vmatpush.msra.mxu0 %v3471
    %3692 = vmatpush.msra.mxu0 %v3470
    %3693 = vmatpush.msra.mxu0 %v3469
    %3694 = vmatpush.msra.mxu0 %v3468
    %3695 = vmatpush.msra.mxu0 %v3467
    %3696 = vmatpush.msra.mxu0 %v3466
    %3697 = vmatpush.msra.mxu0 %v3465
    %3698 = vmatpush.msra.mxu0 %v3464
    %3699 = vmatpush.msra.mxu0 %v3463
    %3700 = vmatpush.msra.mxu0 %v3462
    %3701 = vmatpush.msra.mxu0 %v3461
    %3702 = vmatpush.msra.mxu0 %v3460
    %3703 = vmatpush.msra.mxu0 %v3459
    %3704 = vmatpush.msra.mxu0 %v3458
    %3705 = vmatmul.f32.gmra.mxu0 %v3645
    %v3706 = vpop.f32.mrf.mxu0
    %v3707 = vadd.f32 %v3687, %v3706
    %3708 = vdwg.mxu0
    %3709 = vmatpush.msra.mxu0 %v3489
    %3710 = vmatpush.msra.mxu0 %v3488
    %3711 = vmatpush.msra.mxu0 %v3487
    %3712 = vmatpush.msra.mxu0 %v3486
    %3713 = vmatpush.msra.mxu0 %v3485
    %3714 = vmatpush.msra.mxu0 %v3484
    %3715 = vmatpush.msra.mxu0 %v3483
    %3716 = vmatpush.msra.mxu0 %v3482
    %3717 = vmatpush.msra.mxu0 %v3481
    %3718 = vmatpush.msra.mxu0 %v3480
    %3719 = vmatpush.msra.mxu0 %v3479
    %3720 = vmatpush.msra.mxu0 %v3478
    %3721 = vmatpush.msra.mxu0 %v3477
    %3722 = vmatpush.msra.mxu0 %v3476
    %3723 = vmatpush.msra.mxu0 %v3475
    %3724 = vmatpush.msra.mxu0 %v3474
    %3725 = vmatmul.f32.gmra.mxu0 %v3646
    %v3726 = vpop.f32.mrf.mxu0
    %v3727 = vadd.f32 %v3707, %v3726
    %3728 = vdwg.mxu0
    %3729 = vmatpush.msra.mxu0 %v3505
    %3730 = vmatpush.msra.mxu0 %v3504
    %3731 = vmatpush.msra.mxu0 %v3503
    %3732 = vmatpush.msra.mxu0 %v3502
    %3733 = vmatpush.msra.mxu0 %v3501
    %3734 = vmatpush.msra.mxu0 %v3500
    %3735 = vmatpush.msra.mxu0 %v3499
    %3736 = vmatpush.msra.mxu0 %v3498
    %3737 = vmatpush.msra.mxu0 %v3497
    %3738 = vmatpush.msra.mxu0 %v3496
    %3739 = vmatpush.msra.mxu0 %v3495
    %3740 = vmatpush.msra.mxu0 %v3494
    %3741 = vmatpush.msra.mxu0 %v3493
    %3742 = vmatpush.msra.mxu0 %v3492
    %3743 = vmatpush.msra.mxu0 %v3491
    %3744 = vmatpush.msra.mxu0 %v3490
    %3745 = vmatmul.f32.gmra.mxu0 %v3647
    %v3746 = vpop.f32.mrf.mxu0
    %v3747 = vadd.f32 %v3727, %v3746
    %3748 = vdwg.mxu0
    %3749 = vmatpush.msra.mxu0 %v3521
    %3750 = vmatpush.msra.mxu0 %v3520
    %3751 = vmatpush.msra.mxu0 %v3519
    %3752 = vmatpush.msra.mxu0 %v3518
    %3753 = vmatpush.msra.mxu0 %v3517
    %3754 = vmatpush.msra.mxu0 %v3516
    %3755 = vmatpush.msra.mxu0 %v3515
    %3756 = vmatpush.msra.mxu0 %v3514
    %3757 = vmatpush.msra.mxu0 %v3513
    %3758 = vmatpush.msra.mxu0 %v3512
    %3759 = vmatpush.msra.mxu0 %v3511
    %3760 = vmatpush.msra.mxu0 %v3510
    %3761 = vmatpush.msra.mxu0 %v3509
    %3762 = vmatpush.msra.mxu0 %v3508
    %3763 = vmatpush.msra.mxu0 %v3507
    %3764 = vmatpush.msra.mxu0 %v3506
    %3765 = vmatmul.f32.gmra.mxu0 %v3648
    %v3766 = vpop.f32.mrf.mxu0
    %v3767 = vadd.f32 %v3747, %v3766
    %3768 = vdwg.mxu0
    %3769 = vmatpush.msra.mxu0 %v3537
    %3770 = vmatpush.msra.mxu0 %v3536
    %3771 = vmatpush.msra.mxu0 %v3535
    %3772 = vmatpush.msra.mxu0 %v3534
    %3773 = vmatpush.msra.mxu0 %v3533
    %3774 = vmatpush.msra.mxu0 %v3532
    %3775 = vmatpush.msra.mxu0 %v3531
    %3776 = vmatpush.msra.mxu0 %v3530
    %3777 = vmatpush.msra.mxu0 %v3529
    %3778 = vmatpush.msra.mxu0 %v3528
    %3779 = vmatpush.msra.mxu0 %v3527
    %3780 = vmatpush.msra.mxu0 %v3526
    %3781 = vmatpush.msra.mxu0 %v3525
    %3782 = vmatpush.msra.mxu0 %v3524
    %3783 = vmatpush.msra.mxu0 %v3523
    %3784 = vmatpush.msra.mxu0 %v3522
    %3785 = vmatmul.f32.gmra.mxu0 %v3649
    %v3786 = vpop.f32.mrf.mxu0
    %v3787 = vadd.f32 %v3767, %v3786
    %3788 = vdwg.mxu0
    %3789 = vmatpush.msra.mxu0 %v3553
    %3790 = vmatpush.msra.mxu0 %v3552
    %3791 = vmatpush.msra.mxu0 %v3551
    %3792 = vmatpush.msra.mxu0 %v3550
    %3793 = vmatpush.msra.mxu0 %v3549
    %3794 = vmatpush.msra.mxu0 %v3548
    %3795 = vmatpush.msra.mxu0 %v3547
    %3796 = vmatpush.msra.mxu0 %v3546
    %3797 = vmatpush.msra.mxu0 %v3545
    %3798 = vmatpush.msra.mxu0 %v3544
    %3799 = vmatpush.msra.mxu0 %v3543
    %3800 = vmatpush.msra.mxu0 %v3542
    %3801 = vmatpush.msra.mxu0 %v3541
    %3802 = vmatpush.msra.mxu0 %v3540
    %3803 = vmatpush.msra.mxu0 %v3539
    %3804 = vmatpush.msra.mxu0 %v3538
    %3805 = vmatmul.f32.gmra.mxu0 %v3650
    %v3806 = vpop.f32.mrf.mxu0
    %v3807 = vadd.f32 %v3787, %v3806
    %3808 = vdwg.mxu0
    %3809 = vmatpush.msra.mxu0 %v3569
    %3810 = vmatpush.msra.mxu0 %v3568
    %3811 = vmatpush.msra.mxu0 %v3567
    %3812 = vmatpush.msra.mxu0 %v3566
    %3813 = vmatpush.msra.mxu0 %v3565
    %3814 = vmatpush.msra.mxu0 %v3564
    %3815 = vmatpush.msra.mxu0 %v3563
    %3816 = vmatpush.msra.mxu0 %v3562
    %3817 = vmatpush.msra.mxu0 %v3561
    %3818 = vmatpush.msra.mxu0 %v3560
    %3819 = vmatpush.msra.mxu0 %v3559
    %3820 = vmatpush.msra.mxu0 %v3558
    %3821 = vmatpush.msra.mxu0 %v3557
    %3822 = vmatpush.msra.mxu0 %v3556
    %3823 = vmatpush.msra.mxu0 %v3555
    %3824 = vmatpush.msra.mxu0 %v3554
    %3825 = vmatmul.f32.gmra.mxu0 %v3651
    %v3826 = vpop.f32.mrf.mxu0
    %v3827 = vadd.f32 %v3807, %v3826
    %3828 = vdwg.mxu0
    %3829 = vmatpush.msra.mxu0 %v3585
    %3830 = vmatpush.msra.mxu0 %v3584
    %3831 = vmatpush.msra.mxu0 %v3583
    %3832 = vmatpush.msra.mxu0 %v3582
    %3833 = vmatpush.msra.mxu0 %v3581
    %3834 = vmatpush.msra.mxu0 %v3580
    %3835 = vmatpush.msra.mxu0 %v3579
    %3836 = vmatpush.msra.mxu0 %v3578
    %3837 = vmatpush.msra.mxu0 %v3577
    %3838 = vmatpush.msra.mxu0 %v3576
    %3839 = vmatpush.msra.mxu0 %v3575
    %3840 = vmatpush.msra.mxu0 %v3574
    %3841 = vmatpush.msra.mxu0 %v3573
    %3842 = vmatpush.msra.mxu0 %v3572
    %3843 = vmatpush.msra.mxu0 %v3571
    %3844 = vmatpush.msra.mxu0 %v3570
    %3845 = vmatmul.f32.gmra.mxu0 %v3653
    %v3846 = vpop.f32.mrf.mxu0
    %v3847 = vadd.f32 %v3827, %v3846
    %3848 = vdwg.mxu0
    %3849 = vmatpush.msra.mxu0 %v3601
    %3850 = vmatpush.msra.mxu0 %v3600
    %3851 = vmatpush.msra.mxu0 %v3599
    %3852 = vmatpush.msra.mxu0 %v3598
    %3853 = vmatpush.msra.mxu0 %v3597
    %3854 = vmatpush.msra.mxu0 %v3596
    %3855 = vmatpush.msra.mxu0 %v3595
    %3856 = vmatpush.msra.mxu0 %v3594
    %3857 = vmatpush.msra.mxu0 %v3593
    %3858 = vmatpush.msra.mxu0 %v3592
    %3859 = vmatpush.msra.mxu0 %v3591
    %3860 = vmatpush.msra.mxu0 %v3590
    %3861 = vmatpush.msra.mxu0 %v3589
    %3862 = vmatpush.msra.mxu0 %v3588
    %3863 = vmatpush.msra.mxu0 %v3587
    %3864 = vmatpush.msra.mxu0 %v3586
    %3865 = vmatmul.f32.gmra.mxu0 %v3654
    %v3866 = vpop.f32.mrf.mxu0
    %v3867 = vadd.f32 %v3847, %v3866
    %3868 = vdwg.mxu0
    %3869 = vmatpush.msra.mxu0 %v3617
    %3870 = vmatpush.msra.mxu0 %v3616
    %3871 = vmatpush.msra.mxu0 %v3615
    %3872 = vmatpush.msra.mxu0 %v3614
    %3873 = vmatpush.msra.mxu0 %v3613
    %3874 = vmatpush.msra.mxu0 %v3612
    %3875 = vmatpush.msra.mxu0 %v3611
    %3876 = vmatpush.msra.mxu0 %v3610
    %3877 = vmatpush.msra.mxu0 %v3609
    %3878 = vmatpush.msra.mxu0 %v3608
    %3879 = vmatpush.msra.mxu0 %v3607
    %3880 = vmatpush.msra.mxu0 %v3606
    %3881 = vmatpush.msra.mxu0 %v3605
    %3882 = vmatpush.msra.mxu0 %v3604
    %3883 = vmatpush.msra.mxu0 %v3603
    %3884 = vmatpush.msra.mxu0 %v3602
    %3885 = vmatmul.f32.gmra.mxu0 %v3655
    %v3886 = vpop.f32.mrf.mxu0
    %v3887 = vadd.f32 %v3867, %v3886
    %3888 = vdwg.mxu0
    %3889 = vmatpush.msra.mxu0 %v3633
    %3890 = vmatpush.msra.mxu0 %v3632
    %3891 = vmatpush.msra.mxu0 %v3631
    %3892 = vmatpush.msra.mxu0 %v3630
    %3893 = vmatpush.msra.mxu0 %v3629
    %3894 = vmatpush.msra.mxu0 %v3628
    %3895 = vmatpush.msra.mxu0 %v3627
    %3896 = vmatpush.msra.mxu0 %v3626
    %3897 = vmatpush.msra.mxu0 %v3625
    %3898 = vmatpush.msra.mxu0 %v3624
    %3899 = vmatpush.msra.mxu0 %v3623
    %3900 = vmatpush.msra.mxu0 %v3622
    %3901 = vmatpush.msra.mxu0 %v3621
    %3902 = vmatpush.msra.mxu0 %v3620
    %3903 = vmatpush.msra.mxu0 %v3619
    %3904 = vmatpush.msra.mxu0 %v3618
    %3905 = vmatmul.f32.gmra.mxu0 %v3656
    %v3906 = vpop.f32.mrf.mxu0
    %v3907 = vadd.f32 %v3887, %v3906
    %3908 = vdwg.mxu0
    %v3909 = vmax.f32 %v3907, 0.0
    %v3910 = vld [vmem:[%s9] sm:$0xff]
    %v3911 = vld [vmem:[%s9 + $0x8] sm:$0xff]
    %v3912 = vld [vmem:[%s9 + $0x10] sm:$0xff]
    %v3913 = vld [vmem:[%s9 + $0x18] sm:$0xff]
    %v3914 = vld [vmem:[%s10] sm:$0x1]
    %v3916 = vperm.slane %v3914, 0
    %v3919 = vsel %vm951, %v3909, 0
    %3921 = vmatpush.msra.mxu0 0.0
    %3922 = vmatpush.msra.mxu0 0.0
    %3923 = vmatpush.msra.mxu0 0.0
    %3924 = vmatpush.msra.mxu0 0.0
    %3925 = vmatpush.msra.mxu0 0.0
    %3926 = vmatpush.msra.mxu0 0.0
    %3927 = vmatpush.msra.mxu0 0.0
    %3928 = vmatpush.msra.mxu0 0.0
    %3929 = vmatpush.msra.mxu0 0.0
    %3930 = vmatpush.msra.mxu0 0.0
    %3931 = vmatpush.msra.mxu0 0.0
    %3932 = vmatpush.msra.mxu0 0.0
    %3933 = vmatpush.msra.mxu0 %v3913
    %3934 = vmatpush.msra.mxu0 %v3912
    %3935 = vmatpush.msra.mxu0 %v3911
    %3936 = vmatpush.msra.mxu0 %v3910
    %3937 = vmatmul.f32.gmra.mxu0 %v3919
    %v3938 = vpop.f32.mrf.mxu0
    %v3939 = vadd.f32 %v3916, %v3938
    %3940 = vdwg.mxu0
    %3941 = vst [vmem:[#allocation8] sm:$0x3] %v3939
    // Predicated region
    $region46: #{dqn_forward.1} parent=1 // pred_check
      _
    $region47: #{dqn_forward.1} parent=1 // pred_check_branch
      %3943 = sbr.rel (0) target = $region49
    $region48: #{dqn_forward.1} parent=1 // pred_region
      %3945 = vsyncadd [#allocation9], 0
      %s3947 = sshll.u32 [#allocation8], 4
      %s3948 = int_to_ptr.vmem [resolvable:$true] %s3947
      %s3949 = sshll.u32 %s11, 4
      %s3950 = int_to_ptr.hbm [resolvable:$true] %s3949
      %3952 = dma.vmem_to_hbm [thread:$0]  %s3948, 32, %s3950, [#allocation9]
    $region49: #{dqn_forward.1} parent=1 // pred_fallthru
      _
    // Predicated region
    $region50: #{dqn_forward.1} parent=1 // pred_check
      _
    $region51: #{dqn_forward.1} parent=1 // pred_check_branch
      %3954 = sbr.rel (0) target = $region53
    $region52: #{dqn_forward.1} parent=1 // pred_region
      %3956 = dma.done [#allocation9], 32
    $region53: #{dqn_forward.1} parent=1 // pred_fallthru
      _
    %3957 = vsyncpa [#allocation9], 1

</llo_original>
